<compile_context>
chip_gen: v7x
topology: tpu7x:2x2x1
jax: 0.10.0
libtpu: 0.0.40
codegen_flags: <defaults>
</compile_context>

<pallas_src>
import numpy as np

import jax
import jax.numpy as jnp
from jax import lax
from jax.experimental import pallas as pl
from jax.experimental.pallas import tpu as pltpu


# ----------------------------- Pallas kernel --------------------------------

def make_lstm_model_kernel(num_layers, T, Bp, H, In, O, O_pad):
    """Builds a kernel computing the full LSTMModel forward pass in VMEM."""

    def kernel(*refs):
        # refs = [x_flat,
        #         w_ih0_t, w_hh0_t, b0,                      (layer 0)
        #         (w_ih_t, w_hh_t, b) * (num_layers-1),      (upper layers)
        #         gamma, beta, w_out_pad, b_out_pad,
        #         out_ref, xproj_scratch]
        x_ref = refs[0]                                        # (T*Bp, In)
        w_ih0_ref, w_hh0_ref, b0_ref = refs[1], refs[2], refs[3]
        upper_refs = [refs[4 + 3 * l: 4 + 3 * l + 3] for l in range(num_layers - 1)]
        base = 4 + 3 * (num_layers - 1)
        gamma_ref, beta_ref, wout_ref, bout_ref = refs[base:base + 4]
        out_ref = refs[base + 4]                               # (Bp, O_pad)
        xproj_ref = refs[base + 5]                             # (T*Bp, 4H) scratch

        # ---- hoisted layer-0 input projection (bias folded, off the chain) --
        xproj_ref[...] = (
            jnp.dot(x_ref[...], w_ih0_ref[...],
                    preferred_element_type=jnp.float32) + b0_ref[...])

        w_hh0 = w_hh0_ref[...]                                 # (H, 4H)
        upper_w = [(wi[...], wh[...], b[...]) for (wi, wh, b) in upper_refs]

        def cell(gates, c):
            # PyTorch gate order i, f, g, o.  g-columns were pre-scaled by 2,
            # so one full-width sigmoid covers all four gates and
            # tanh(x) is recovered as 2*sigmoid(2x) - 1.
            sig = jax.nn.sigmoid(gates)                        # (Bp, 4H)
            i_g = sig[:, 0 * H:1 * H]
            f_g = sig[:, 1 * H:2 * H]
            g_g = 2.0 * sig[:, 2 * H:3 * H] - 1.0
            o_g = sig[:, 3 * H:4 * H]
            c_new = f_g * c + i_g * g_g
            h_new = o_g * jnp.tanh(c_new)
            return h_new, c_new

        # ---- wavefront recurrence: time outer, layers inner ----------------
        def step(t, carry, w_hh0=w_hh0, upper_w=upper_w):
            off = pl.multiple_of(t * Bp, Bp)                   # aligned full tile
            gx = xproj_ref[pl.ds(off, Bp), :]                  # (Bp, 4H)
            new = []
            inp = None
            for l in range(num_layers):
                h, c = carry[l]
                if l == 0:
                    gates = gx + jnp.dot(h, w_hh0,
                                         preferred_element_type=jnp.float32)
                else:
                    w_ih_t, w_hh_t, b = upper_w[l - 1]
                    gates = (jnp.dot(inp, w_ih_t,
                                     preferred_element_type=jnp.float32)
                             + jnp.dot(h, w_hh_t,
                                       preferred_element_type=jnp.float32)
                             + b)
                h, c = cell(gates, c)
                new.append((h, c))
                inp = h
            return tuple(new)

        init = tuple((jnp.zeros((Bp, H), jnp.float32),
                      jnp.zeros((Bp, H), jnp.float32)) for _ in range(num_layers))
        # T is static and small: fully unroll so MXU/EUP work of adjacent
        # (layer, step) wavefront cells can overlap.
        final = lax.fori_loop(0, T, step, init, unroll=True)
        h_last = final[num_layers - 1][0]                      # (Bp, H)

        # ---- LayerNorm over hidden dim (eps = 1e-5, biased variance) -------
        mean = jnp.mean(h_last, axis=-1, keepdims=True)
        var = jnp.mean((h_last - mean) ** 2, axis=-1, keepdims=True)
        normed = (h_last - mean) * lax.rsqrt(var + 1e-5)
        normed = normed * gamma_ref[...] + beta_ref[...]       # (Bp, H)

        # ---- Linear (output lanes padded to O_pad=128 in the wrapper) ------
        z = jnp.dot(normed, wout_ref[...],
                    preferred_element_type=jnp.float32) + bout_ref[...]  # (Bp, O_pad)
        zr = z[:, :O]                                          # real logits (Bp, O)

        # ---- Sparsemax over dim=1 (sort-free O(n^2) formulation) -----------
        zi = zr[:, :, None]                                    # (Bp, O, 1)
        zj = zr[:, None, :]                                    # (Bp, 1, O)
        cmp = jnp.where(zj >= zi, 1.0, 0.0)                    # (Bp, O, O)
        k_ge = jnp.sum(cmp, axis=-1)                           # |{j : z_j >= z_i}|
        s_ge = jnp.sum(cmp * zj, axis=-1)                      # sum of those z_j
        supp = jnp.where(1.0 + k_ge * zr > s_ge, 1.0, 0.0)     # support indicator
        k_supp = jnp.sum(supp, axis=1, keepdims=True)
        s_supp = jnp.sum(zr * supp, axis=1, keepdims=True)
        tau = (s_supp - 1.0) / k_supp

        # Lane-dense final store: full (Bp, O_pad) unmasked write,
        # padded lanes forced to zero.
        col = lax.broadcasted_iota(jnp.int32, (Bp, O_pad), 1)
        out_ref[...] = jnp.where(col < O, jnp.maximum(z - tau, 0.0), 0.0)

    return kernel


# --------------------------- wrapper / packing --------------------------------

def pack_params(params, *, hidden_size, output_size, num_layers, o_pad=128):
    """Kernel-layout packing of the raw (PyTorch-style) parameters."""
    H, O = hidden_size, output_size

    def scale_g(w_t):
        # last dim is [i | f | g | o]; scale the g block by 2 so the kernel can
        # use tanh(x) = 2*sigmoid(2x) - 1 with a single full-width sigmoid.
        return jnp.concatenate(
            [w_t[:, :2 * H], 2.0 * w_t[:, 2 * H:3 * H], w_t[:, 3 * H:]], axis=1)

    lstm = params["lstm"]

    def pack_layer(layer):
        return (scale_g(jnp.transpose(layer["w_ih"])),                 # (in_l, 4H)
                scale_g(jnp.transpose(layer["w_hh"])),                 # (H,    4H)
                scale_g((layer["b_ih"] + layer["b_hh"]).reshape(1, 4 * H)))

    layer0 = pack_layer(lstm[0])
    upper = [pack_layer(lstm[l]) for l in range(1, num_layers)]

    w_out_pad = jnp.zeros((H, o_pad), jnp.float32).at[:, :O].set(
        jnp.transpose(params["w_out"]))
    b_out_pad = jnp.zeros((1, o_pad), jnp.float32).at[:, :O].set(
        params["b_out"].reshape(1, O))

    return {
        "layer0": layer0,
        "upper": upper,
        "gamma": params["gamma"].reshape(1, H),
        "beta": params["beta"].reshape(1, H),
        "w_out_pad": w_out_pad,
        "b_out_pad": b_out_pad,
    }


def lstm_model_forward(x, packed, *, hidden_size, output_size, num_layers,
                       o_pad=128):
    """x: (B, T, In) batch_first, float32. Returns (B, output_size)."""
    B, T, In = x.shape
    H, O = hidden_size, output_size
    Bp = ((B + 7) // 8) * 8              # pad batch to full sublane tiles

    # Time-major, batch-padded, flattened so every per-step read in the kernel
    # is an aligned contiguous 8-row slice of a lane-dense 2-D buffer.
    x_tm = jnp.transpose(x, (1, 0, 2)).astype(jnp.float32)     # (T, B, In)
    x_tm = jnp.pad(x_tm, ((0, 0), (0, Bp - B), (0, 0)))        # (T, Bp, In)
    x_flat = x_tm.reshape(T * Bp, In)

    inputs = [x_flat, *packed["layer0"]]
    for trip in packed["upper"]:
        inputs += list(trip)
    inputs += [packed["gamma"], packed["beta"],
               packed["w_out_pad"], packed["b_out_pad"]]

    kernel = make_lstm_model_kernel(num_layers, T, Bp, H, In, O, o_pad)

    out = pl.pallas_call(
        kernel,
        out_shape=jax.ShapeDtypeStruct((Bp, o_pad), jnp.float32),
        in_specs=[pl.BlockSpec(memory_space=pltpu.MemorySpace.VMEM)] * len(inputs),
        out_specs=pl.BlockSpec(memory_space=pltpu.MemorySpace.VMEM),
        scratch_shapes=[
            pltpu.VMEM((T * Bp, 4 * H), jnp.float32),   # hoisted layer-0 projection
        ],
    )(*inputs)
    return out[:B, :O]


# --------------------------- parameter init ----------------------------------

def init_params(key, input_size, hidden_size, output_size, num_layers):
    """Raw PyTorch-style parameters (used by the reference; packed for the kernel)."""
    H = hidden_size
    scale = 1.0 / np.sqrt(H)

    def u(k, shape):
        return jax.random.uniform(k, shape, jnp.float32, -scale, scale)

    lstm = []
    for l in range(num_layers):
        in_l = input_size if l == 0 else H
        key, k1, k2, k3, k4 = jax.random.split(key, 5)
        lstm.append({
            "w_ih": u(k1, (4 * H, in_l)),
            "w_hh": u(k2, (4 * H, H)),
            "b_ih": u(k3, (4 * H,)),
            "b_hh": u(k4, (4 * H,)),
        })

    key, k5, k6 = jax.random.split(key, 3)
    return {
        "lstm": lstm,
        "gamma": jnp.ones((H,), jnp.float32),
        "beta": jnp.zeros((H,), jnp.float32),
        "w_out": u(k5, (output_size, H)),
        "b_out": u(k6, (output_size,)),
    }


# --------------------------- pure-JAX reference -------------------------------

def reference_forward(x, params, *, hidden_size, output_size, num_layers):
    B, T, In = x.shape
    H, O = hidden_size, output_size
    seq = jnp.transpose(x, (1, 0, 2)).astype(jnp.float32)       # (T, B, In)
    h_last = jnp.zeros((B, H), jnp.float32)
    for layer in params["lstm"]:
        w_ih_t = jnp.transpose(layer["w_ih"])
        w_hh_t = jnp.transpose(layer["w_hh"])
        b = (layer["b_ih"] + layer["b_hh"])[None, :]
        h = jnp.zeros((B, H), jnp.float32)
        c = jnp.zeros((B, H), jnp.float32)
        outs = []
        for t in range(T):
            gates = seq[t] @ w_ih_t + h @ w_hh_t + b
            i_g = jax.nn.sigmoid(gates[:, 0 * H:1 * H])
            f_g = jax.nn.sigmoid(gates[:, 1 * H:2 * H])
            g_g = jnp.tanh(gates[:, 2 * H:3 * H])
            o_g = jax.nn.sigmoid(gates[:, 3 * H:4 * H])
            c = f_g * c + i_g * g_g
            h = o_g * jnp.tanh(c)
            outs.append(h)
        seq = jnp.stack(outs, axis=0)
        h_last = h
    mean = jnp.mean(h_last, axis=-1, keepdims=True)
    var = jnp.mean((h_last - mean) ** 2, axis=-1, keepdims=True)
    normed = (h_last - mean) / jnp.sqrt(var + 1e-5)
    normed = normed * params["gamma"][None, :] + params["beta"][None, :]
    z = normed @ jnp.transpose(params["w_out"]) + params["b_out"][None, :]
    # sorted-form sparsemax
    z_sorted = jnp.sort(z, axis=1)[:, ::-1]
    cs = jnp.cumsum(z_sorted, axis=1)
    ks = jnp.arange(1, O + 1, dtype=jnp.float32)
    cond = 1.0 + ks * z_sorted > cs
    k_z = jnp.sum(cond.astype(jnp.int32), axis=1)
    cs_k = jnp.take_along_axis(cs, (k_z - 1)[:, None], axis=1)
    tau = (cs_k - 1.0) / k_z[:, None].astype(jnp.float32)
    return jnp.maximum(z - tau, 0.0)


# ------------------------------------ main ------------------------------------

if __name__ == "__main__":
    B, T = 2, 8                 # batch, sequence length
    input_size = 8
    hidden_size = 32
    output_size = 8
    num_layers = 2

    key = jax.random.PRNGKey(0)
    key_x, key_p = jax.random.split(key)
    x = jax.random.normal(key_x, (B, T, input_size), jnp.float32)
    params = init_params(key_p, input_size, hidden_size, output_size, num_layers)
    packed = pack_params(params, hidden_size=hidden_size,
                         output_size=output_size, num_layers=num_layers)

    out = lstm_model_forward(
        x, packed,
        hidden_size=hidden_size, output_size=output_size, num_layers=num_layers)
    out = jax.block_until_ready(out)

    ref = reference_forward(
        x, params,
        hidden_size=hidden_size, output_size=output_size, num_layers=num_layers)

    np.testing.assert_allclose(np.asarray(out), np.asarray(ref), atol=1e-4, rtol=1e-4)
    # sparsemax rows are a probability simplex
    np.testing.assert_allclose(np.asarray(out).sum(axis=1), np.ones(B), atol=1e-4)
    assert (np.asarray(out) >= 0.0).all()

    print("KERNEL_OK")
</pallas_src>

<mosaic_0001>
module attributes {stable_mosaic.version = 11 : i64} {
  func.func @kernel(%arg0: memref<64x8xf32, #tpu.memory_space<vmem>>, %arg1: memref<8x128xf32, #tpu.memory_space<vmem>>, %arg2: memref<32x128xf32, #tpu.memory_space<vmem>>, %arg3: memref<1x128xf32, #tpu.memory_space<vmem>>, %arg4: memref<32x128xf32, #tpu.memory_space<vmem>>, %arg5: memref<32x128xf32, #tpu.memory_space<vmem>>, %arg6: memref<1x128xf32, #tpu.memory_space<vmem>>, %arg7: memref<1x32xf32, #tpu.memory_space<vmem>>, %arg8: memref<1x32xf32, #tpu.memory_space<vmem>>, %arg9: memref<32x128xf32, #tpu.memory_space<vmem>>, %arg10: memref<1x128xf32, #tpu.memory_space<vmem>>, %arg11: memref<8x128xf32, #tpu.memory_space<vmem>>, %arg12: memref<64x128xf32, #tpu.memory_space<vmem>>) attributes {dimension_semantics = [], scalar_prefetch = 0 : i64, scratch_operands = 1 : i64, tpu.core_type = #tpu.core_type<tc>} {
    %c0 = arith.constant 0 : index
    %c0_0 = arith.constant 0 : index
    %0 = vector.load %arg0[%c0, %c0_0] : memref<64x8xf32, #tpu.memory_space<vmem>>, vector<64x8xf32>
    %c0_1 = arith.constant 0 : index
    %c0_2 = arith.constant 0 : index
    %1 = vector.load %arg1[%c0_1, %c0_2] : memref<8x128xf32, #tpu.memory_space<vmem>>, vector<8x128xf32>
    %cst = arith.constant dense<0.000000e+00> : vector<64x128xf32>
    %2 = tpu.matmul %0, %1, %cst {dimension_numbers = #tpu.dot_dimension_numbers<[1], [0], [0], [1], [0, 0, 1, 1], [], []>} : vector<64x8xf32>, vector<8x128xf32>, vector<64x128xf32> -> vector<64x128xf32>
    %c0_3 = arith.constant 0 : index
    %c0_4 = arith.constant 0 : index
    %3 = vector.load %arg3[%c0_3, %c0_4] : memref<1x128xf32, #tpu.memory_space<vmem>>, vector<1x128xf32>
    %4 = vector.broadcast %3 : vector<1x128xf32> to vector<64x128xf32>
    %5 = arith.addf %2, %4 : vector<64x128xf32>
    %c0_5 = arith.constant 0 : index
    %c0_6 = arith.constant 0 : index
    %6 = vector.load %arg12[%c0_5, %c0_6] : memref<64x128xf32, #tpu.memory_space<vmem>>, vector<64x128xf32>
    tpu.vector_store %arg12[%c0_5, %c0_6], %5 {strides = array<i32>} : memref<64x128xf32, #tpu.memory_space<vmem>>, vector<64x128xf32>,
    %c0_7 = arith.constant 0 : index
    %c0_8 = arith.constant 0 : index
    %7 = vector.load %arg2[%c0_7, %c0_8] : memref<32x128xf32, #tpu.memory_space<vmem>>, vector<32x128xf32>
    %c0_9 = arith.constant 0 : index
    %c0_10 = arith.constant 0 : index
    %8 = vector.load %arg4[%c0_9, %c0_10] : memref<32x128xf32, #tpu.memory_space<vmem>>, vector<32x128xf32>
    %c0_11 = arith.constant 0 : index
    %c0_12 = arith.constant 0 : index
    %9 = vector.load %arg5[%c0_11, %c0_12] : memref<32x128xf32, #tpu.memory_space<vmem>>, vector<32x128xf32>
    %c0_13 = arith.constant 0 : index
    %c0_14 = arith.constant 0 : index
    %10 = vector.load %arg6[%c0_13, %c0_14] : memref<1x128xf32, #tpu.memory_space<vmem>>, vector<1x128xf32>
    %cst_15 = arith.constant 0.000000e+00 : f32
    %11 = vector.broadcast %cst_15 : f32 to vector<8x32xf32>
    %cst_16 = arith.constant 0.000000e+00 : f32
    %12 = vector.broadcast %cst_16 : f32 to vector<8x32xf32>
    %cst_17 = arith.constant 0.000000e+00 : f32
    %13 = vector.broadcast %cst_17 : f32 to vector<8x32xf32>
    %cst_18 = arith.constant 0.000000e+00 : f32
    %14 = vector.broadcast %cst_18 : f32 to vector<8x32xf32>
    %c0_i32 = arith.constant 0 : i32
    %c8_i32 = arith.constant 8 : i32
    %15 = arith.muli %c0_i32, %c8_i32 : i32
    %16 = tpu.assume_multiple %15, 8 : i32
    %17 = arith.index_cast %16 : i32 to index
    %c0_19 = arith.constant 0 : index
    %18 = vector.load %arg12[%17, %c0_19] : memref<64x128xf32, #tpu.memory_space<vmem>>, vector<8x128xf32>
    %cst_20 = arith.constant dense<0.000000e+00> : vector<8x128xf32>
    %19 = tpu.matmul %11, %7, %cst_20 {dimension_numbers = #tpu.dot_dimension_numbers<[1], [0], [0], [1], [0, 0, 1, 1], [], []>} : vector<8x32xf32>, vector<32x128xf32>, vector<8x128xf32> -> vector<8x128xf32>
    %20 = arith.addf %18, %19 : vector<8x128xf32>
    %21 = arith.negf %20 : vector<8x128xf32>
    %22 = math.exp %21 : vector<8x128xf32>
    %cst_21 = arith.constant 1.000000e+00 : f32
    %23 = vector.broadcast %cst_21 : f32 to vector<8x128xf32>
    %24 = arith.addf %23, %22 : vector<8x128xf32>
    %25 = arith.divf %23, %24 : vector<8x128xf32>
    %26 = vector.extract_strided_slice %25 {offsets = [0, 0], sizes = [8, 32], strides = [1, 1]} : vector<8x128xf32> to vector<8x32xf32>
    %27 = vector.extract_strided_slice %25 {offsets = [0, 32], sizes = [8, 32], strides = [1, 1]} : vector<8x128xf32> to vector<8x32xf32>
    %28 = vector.extract_strided_slice %25 {offsets = [0, 64], sizes = [8, 32], strides = [1, 1]} : vector<8x128xf32> to vector<8x32xf32>
    %cst_22 = arith.constant 2.000000e+00 : f32
    %29 = vector.broadcast %cst_22 : f32 to vector<8x32xf32>
    %30 = arith.mulf %29, %28 : vector<8x32xf32>
    %cst_23 = arith.constant 1.000000e+00 : f32
    %31 = vector.broadcast %cst_23 : f32 to vector<8x32xf32>
    %32 = arith.subf %30, %31 : vector<8x32xf32>
    %33 = vector.extract_strided_slice %25 {offsets = [0, 96], sizes = [8, 32], strides = [1, 1]} : vector<8x128xf32> to vector<8x32xf32>
    %34 = arith.mulf %27, %12 : vector<8x32xf32>
    %35 = arith.mulf %26, %32 : vector<8x32xf32>
    %36 = arith.addf %34, %35 : vector<8x32xf32>
    %37 = math.tanh %36 : vector<8x32xf32>
    %38 = arith.mulf %33, %37 : vector<8x32xf32>
    %cst_24 = arith.constant dense<0.000000e+00> : vector<8x128xf32>
    %39 = tpu.matmul %38, %8, %cst_24 {dimension_numbers = #tpu.dot_dimension_numbers<[1], [0], [0], [1], [0, 0, 1, 1], [], []>} : vector<8x32xf32>, vector<32x128xf32>, vector<8x128xf32> -> vector<8x128xf32>
    %cst_25 = arith.constant dense<0.000000e+00> : vector<8x128xf32>
    %40 = tpu.matmul %13, %9, %cst_25 {dimension_numbers = #tpu.dot_dimension_numbers<[1], [0], [0], [1], [0, 0, 1, 1], [], []>} : vector<8x32xf32>, vector<32x128xf32>, vector<8x128xf32> -> vector<8x128xf32>
    %41 = arith.addf %39, %40 : vector<8x128xf32>
    %42 = vector.broadcast %10 : vector<1x128xf32> to vector<8x128xf32>
    %43 = arith.addf %41, %42 : vector<8x128xf32>
    %44 = arith.negf %43 : vector<8x128xf32>
    %45 = math.exp %44 : vector<8x128xf32>
    %cst_26 = arith.constant 1.000000e+00 : f32
    %46 = vector.broadcast %cst_26 : f32 to vector<8x128xf32>
    %47 = arith.addf %46, %45 : vector<8x128xf32>
    %48 = arith.divf %46, %47 : vector<8x128xf32>
    %49 = vector.extract_strided_slice %48 {offsets = [0, 0], sizes = [8, 32], strides = [1, 1]} : vector<8x128xf32> to vector<8x32xf32>
    %50 = vector.extract_strided_slice %48 {offsets = [0, 32], sizes = [8, 32], strides = [1, 1]} : vector<8x128xf32> to vector<8x32xf32>
    %51 = vector.extract_strided_slice %48 {offsets = [0, 64], sizes = [8, 32], strides = [1, 1]} : vector<8x128xf32> to vector<8x32xf32>
    %cst_27 = arith.constant 2.000000e+00 : f32
    %52 = vector.broadcast %cst_27 : f32 to vector<8x32xf32>
    %53 = arith.mulf %52, %51 : vector<8x32xf32>
    %cst_28 = arith.constant 1.000000e+00 : f32
    %54 = vector.broadcast %cst_28 : f32 to vector<8x32xf32>
    %55 = arith.subf %53, %54 : vector<8x32xf32>
    %56 = vector.extract_strided_slice %48 {offsets = [0, 96], sizes = [8, 32], strides = [1, 1]} : vector<8x128xf32> to vector<8x32xf32>
    %57 = arith.mulf %50, %14 : vector<8x32xf32>
    %58 = arith.mulf %49, %55 : vector<8x32xf32>
    %59 = arith.addf %57, %58 : vector<8x32xf32>
    %60 = math.tanh %59 : vector<8x32xf32>
    %61 = arith.mulf %56, %60 : vector<8x32xf32>
    %c1_i32 = arith.constant 1 : i32
    %c8_i32_29 = arith.constant 8 : i32
    %62 = arith.muli %c1_i32, %c8_i32_29 : i32
    %63 = tpu.assume_multiple %62, 8 : i32
    %64 = arith.index_cast %63 : i32 to index
    %c0_30 = arith.constant 0 : index
    %65 = vector.load %arg12[%64, %c0_30] : memref<64x128xf32, #tpu.memory_space<vmem>>, vector<8x128xf32>
    %cst_31 = arith.constant dense<0.000000e+00> : vector<8x128xf32>
    %66 = tpu.matmul %38, %7, %cst_31 {dimension_numbers = #tpu.dot_dimension_numbers<[1], [0], [0], [1], [0, 0, 1, 1], [], []>} : vector<8x32xf32>, vector<32x128xf32>, vector<8x128xf32> -> vector<8x128xf32>
    %67 = arith.addf %65, %66 : vector<8x128xf32>
    %68 = arith.negf %67 : vector<8x128xf32>
    %69 = math.exp %68 : vector<8x128xf32>
    %cst_32 = arith.constant 1.000000e+00 : f32
    %70 = vector.broadcast %cst_32 : f32 to vector<8x128xf32>
    %71 = arith.addf %70, %69 : vector<8x128xf32>
    %72 = arith.divf %70, %71 : vector<8x128xf32>
    %73 = vector.extract_strided_slice %72 {offsets = [0, 0], sizes = [8, 32], strides = [1, 1]} : vector<8x128xf32> to vector<8x32xf32>
    %74 = vector.extract_strided_slice %72 {offsets = [0, 32], sizes = [8, 32], strides = [1, 1]} : vector<8x128xf32> to vector<8x32xf32>
    %75 = vector.extract_strided_slice %72 {offsets = [0, 64], sizes = [8, 32], strides = [1, 1]} : vector<8x128xf32> to vector<8x32xf32>
    %cst_33 = arith.constant 2.000000e+00 : f32
    %76 = vector.broadcast %cst_33 : f32 to vector<8x32xf32>
    %77 = arith.mulf %76, %75 : vector<8x32xf32>
    %cst_34 = arith.constant 1.000000e+00 : f32
    %78 = vector.broadcast %cst_34 : f32 to vector<8x32xf32>
    %79 = arith.subf %77, %78 : vector<8x32xf32>
    %80 = vector.extract_strided_slice %72 {offsets = [0, 96], sizes = [8, 32], strides = [1, 1]} : vector<8x128xf32> to vector<8x32xf32>
    %81 = arith.mulf %74, %36 : vector<8x32xf32>
    %82 = arith.mulf %73, %79 : vector<8x32xf32>
    %83 = arith.addf %81, %82 : vector<8x32xf32>
    %84 = math.tanh %83 : vector<8x32xf32>
    %85 = arith.mulf %80, %84 : vector<8x32xf32>
    %cst_35 = arith.constant dense<0.000000e+00> : vector<8x128xf32>
    %86 = tpu.matmul %85, %8, %cst_35 {dimension_numbers = #tpu.dot_dimension_numbers<[1], [0], [0], [1], [0, 0, 1, 1], [], []>} : vector<8x32xf32>, vector<32x128xf32>, vector<8x128xf32> -> vector<8x128xf32>
    %cst_36 = arith.constant dense<0.000000e+00> : vector<8x128xf32>
    %87 = tpu.matmul %61, %9, %cst_36 {dimension_numbers = #tpu.dot_dimension_numbers<[1], [0], [0], [1], [0, 0, 1, 1], [], []>} : vector<8x32xf32>, vector<32x128xf32>, vector<8x128xf32> -> vector<8x128xf32>
    %88 = arith.addf %86, %87 : vector<8x128xf32>
    %89 = vector.broadcast %10 : vector<1x128xf32> to vector<8x128xf32>
    %90 = arith.addf %88, %89 : vector<8x128xf32>
    %91 = arith.negf %90 : vector<8x128xf32>
    %92 = math.exp %91 : vector<8x128xf32>
    %cst_37 = arith.constant 1.000000e+00 : f32
    %93 = vector.broadcast %cst_37 : f32 to vector<8x128xf32>
    %94 = arith.addf %93, %92 : vector<8x128xf32>
    %95 = arith.divf %93, %94 : vector<8x128xf32>
    %96 = vector.extract_strided_slice %95 {offsets = [0, 0], sizes = [8, 32], strides = [1, 1]} : vector<8x128xf32> to vector<8x32xf32>
    %97 = vector.extract_strided_slice %95 {offsets = [0, 32], sizes = [8, 32], strides = [1, 1]} : vector<8x128xf32> to vector<8x32xf32>
    %98 = vector.extract_strided_slice %95 {offsets = [0, 64], sizes = [8, 32], strides = [1, 1]} : vector<8x128xf32> to vector<8x32xf32>
    %cst_38 = arith.constant 2.000000e+00 : f32
    %99 = vector.broadcast %cst_38 : f32 to vector<8x32xf32>
    %100 = arith.mulf %99, %98 : vector<8x32xf32>
    %cst_39 = arith.constant 1.000000e+00 : f32
    %101 = vector.broadcast %cst_39 : f32 to vector<8x32xf32>
    %102 = arith.subf %100, %101 : vector<8x32xf32>
    %103 = vector.extract_strided_slice %95 {offsets = [0, 96], sizes = [8, 32], strides = [1, 1]} : vector<8x128xf32> to vector<8x32xf32>
    %104 = arith.mulf %97, %59 : vector<8x32xf32>
    %105 = arith.mulf %96, %102 : vector<8x32xf32>
    %106 = arith.addf %104, %105 : vector<8x32xf32>
    %107 = math.tanh %106 : vector<8x32xf32>
    %108 = arith.mulf %103, %107 : vector<8x32xf32>
    %c2_i32 = arith.constant 2 : i32
    %c8_i32_40 = arith.constant 8 : i32
    %109 = arith.muli %c2_i32, %c8_i32_40 : i32
    %110 = tpu.assume_multiple %109, 8 : i32
    %111 = arith.index_cast %110 : i32 to index
    %c0_41 = arith.constant 0 : index
    %112 = vector.load %arg12[%111, %c0_41] : memref<64x128xf32, #tpu.memory_space<vmem>>, vector<8x128xf32>
    %cst_42 = arith.constant dense<0.000000e+00> : vector<8x128xf32>
    %113 = tpu.matmul %85, %7, %cst_42 {dimension_numbers = #tpu.dot_dimension_numbers<[1], [0], [0], [1], [0, 0, 1, 1], [], []>} : vector<8x32xf32>, vector<32x128xf32>, vector<8x128xf32> -> vector<8x128xf32>
    %114 = arith.addf %112, %113 : vector<8x128xf32>
    %115 = arith.negf %114 : vector<8x128xf32>
    %116 = math.exp %115 : vector<8x128xf32>
    %cst_43 = arith.constant 1.000000e+00 : f32
    %117 = vector.broadcast %cst_43 : f32 to vector<8x128xf32>
    %118 = arith.addf %117, %116 : vector<8x128xf32>
    %119 = arith.divf %117, %118 : vector<8x128xf32>
    %120 = vector.extract_strided_slice %119 {offsets = [0, 0], sizes = [8, 32], strides = [1, 1]} : vector<8x128xf32> to vector<8x32xf32>
    %121 = vector.extract_strided_slice %119 {offsets = [0, 32], sizes = [8, 32], strides = [1, 1]} : vector<8x128xf32> to vector<8x32xf32>
    %122 = vector.extract_strided_slice %119 {offsets = [0, 64], sizes = [8, 32], strides = [1, 1]} : vector<8x128xf32> to vector<8x32xf32>
    %cst_44 = arith.constant 2.000000e+00 : f32
    %123 = vector.broadcast %cst_44 : f32 to vector<8x32xf32>
    %124 = arith.mulf %123, %122 : vector<8x32xf32>
    %cst_45 = arith.constant 1.000000e+00 : f32
    %125 = vector.broadcast %cst_45 : f32 to vector<8x32xf32>
    %126 = arith.subf %124, %125 : vector<8x32xf32>
    %127 = vector.extract_strided_slice %119 {offsets = [0, 96], sizes = [8, 32], strides = [1, 1]} : vector<8x128xf32> to vector<8x32xf32>
    %128 = arith.mulf %121, %83 : vector<8x32xf32>
    %129 = arith.mulf %120, %126 : vector<8x32xf32>
    %130 = arith.addf %128, %129 : vector<8x32xf32>
    %131 = math.tanh %130 : vector<8x32xf32>
    %132 = arith.mulf %127, %131 : vector<8x32xf32>
    %cst_46 = arith.constant dense<0.000000e+00> : vector<8x128xf32>
    %133 = tpu.matmul %132, %8, %cst_46 {dimension_numbers = #tpu.dot_dimension_numbers<[1], [0], [0], [1], [0, 0, 1, 1], [], []>} : vector<8x32xf32>, vector<32x128xf32>, vector<8x128xf32> -> vector<8x128xf32>
    %cst_47 = arith.constant dense<0.000000e+00> : vector<8x128xf32>
    %134 = tpu.matmul %108, %9, %cst_47 {dimension_numbers = #tpu.dot_dimension_numbers<[1], [0], [0], [1], [0, 0, 1, 1], [], []>} : vector<8x32xf32>, vector<32x128xf32>, vector<8x128xf32> -> vector<8x128xf32>
    %135 = arith.addf %133, %134 : vector<8x128xf32>
    %136 = vector.broadcast %10 : vector<1x128xf32> to vector<8x128xf32>
    %137 = arith.addf %135, %136 : vector<8x128xf32>
    %138 = arith.negf %137 : vector<8x128xf32>
    %139 = math.exp %138 : vector<8x128xf32>
    %cst_48 = arith.constant 1.000000e+00 : f32
    %140 = vector.broadcast %cst_48 : f32 to vector<8x128xf32>
    %141 = arith.addf %140, %139 : vector<8x128xf32>
    %142 = arith.divf %140, %141 : vector<8x128xf32>
    %143 = vector.extract_strided_slice %142 {offsets = [0, 0], sizes = [8, 32], strides = [1, 1]} : vector<8x128xf32> to vector<8x32xf32>
    %144 = vector.extract_strided_slice %142 {offsets = [0, 32], sizes = [8, 32], strides = [1, 1]} : vector<8x128xf32> to vector<8x32xf32>
    %145 = vector.extract_strided_slice %142 {offsets = [0, 64], sizes = [8, 32], strides = [1, 1]} : vector<8x128xf32> to vector<8x32xf32>
    %cst_49 = arith.constant 2.000000e+00 : f32
    %146 = vector.broadcast %cst_49 : f32 to vector<8x32xf32>
    %147 = arith.mulf %146, %145 : vector<8x32xf32>
    %cst_50 = arith.constant 1.000000e+00 : f32
    %148 = vector.broadcast %cst_50 : f32 to vector<8x32xf32>
    %149 = arith.subf %147, %148 : vector<8x32xf32>
    %150 = vector.extract_strided_slice %142 {offsets = [0, 96], sizes = [8, 32], strides = [1, 1]} : vector<8x128xf32> to vector<8x32xf32>
    %151 = arith.mulf %144, %106 : vector<8x32xf32>
    %152 = arith.mulf %143, %149 : vector<8x32xf32>
    %153 = arith.addf %151, %152 : vector<8x32xf32>
    %154 = math.tanh %153 : vector<8x32xf32>
    %155 = arith.mulf %150, %154 : vector<8x32xf32>
    %c3_i32 = arith.constant 3 : i32
    %c8_i32_51 = arith.constant 8 : i32
    %156 = arith.muli %c3_i32, %c8_i32_51 : i32
    %157 = tpu.assume_multiple %156, 8 : i32
    %158 = arith.index_cast %157 : i32 to index
    %c0_52 = arith.constant 0 : index
    %159 = vector.load %arg12[%158, %c0_52] : memref<64x128xf32, #tpu.memory_space<vmem>>, vector<8x128xf32>
    %cst_53 = arith.constant dense<0.000000e+00> : vector<8x128xf32>
    %160 = tpu.matmul %132, %7, %cst_53 {dimension_numbers = #tpu.dot_dimension_numbers<[1], [0], [0], [1], [0, 0, 1, 1], [], []>} : vector<8x32xf32>, vector<32x128xf32>, vector<8x128xf32> -> vector<8x128xf32>
    %161 = arith.addf %159, %160 : vector<8x128xf32>
    %162 = arith.negf %161 : vector<8x128xf32>
    %163 = math.exp %162 : vector<8x128xf32>
    %cst_54 = arith.constant 1.000000e+00 : f32
    %164 = vector.broadcast %cst_54 : f32 to vector<8x128xf32>
    %165 = arith.addf %164, %163 : vector<8x128xf32>
    %166 = arith.divf %164, %165 : vector<8x128xf32>
    %167 = vector.extract_strided_slice %166 {offsets = [0, 0], sizes = [8, 32], strides = [1, 1]} : vector<8x128xf32> to vector<8x32xf32>
    %168 = vector.extract_strided_slice %166 {offsets = [0, 32], sizes = [8, 32], strides = [1, 1]} : vector<8x128xf32> to vector<8x32xf32>
    %169 = vector.extract_strided_slice %166 {offsets = [0, 64], sizes = [8, 32], strides = [1, 1]} : vector<8x128xf32> to vector<8x32xf32>
    %cst_55 = arith.constant 2.000000e+00 : f32
    %170 = vector.broadcast %cst_55 : f32 to vector<8x32xf32>
    %171 = arith.mulf %170, %169 : vector<8x32xf32>
    %cst_56 = arith.constant 1.000000e+00 : f32
    %172 = vector.broadcast %cst_56 : f32 to vector<8x32xf32>
    %173 = arith.subf %171, %172 : vector<8x32xf32>
    %174 = vector.extract_strided_slice %166 {offsets = [0, 96], sizes = [8, 32], strides = [1, 1]} : vector<8x128xf32> to vector<8x32xf32>
    %175 = arith.mulf %168, %130 : vector<8x32xf32>
    %176 = arith.mulf %167, %173 : vector<8x32xf32>
    %177 = arith.addf %175, %176 : vector<8x32xf32>
    %178 = math.tanh %177 : vector<8x32xf32>
    %179 = arith.mulf %174, %178 : vector<8x32xf32>
    %cst_57 = arith.constant dense<0.000000e+00> : vector<8x128xf32>
    %180 = tpu.matmul %179, %8, %cst_57 {dimension_numbers = #tpu.dot_dimension_numbers<[1], [0], [0], [1], [0, 0, 1, 1], [], []>} : vector<8x32xf32>, vector<32x128xf32>, vector<8x128xf32> -> vector<8x128xf32>
    %cst_58 = arith.constant dense<0.000000e+00> : vector<8x128xf32>
    %181 = tpu.matmul %155, %9, %cst_58 {dimension_numbers = #tpu.dot_dimension_numbers<[1], [0], [0], [1], [0, 0, 1, 1], [], []>} : vector<8x32xf32>, vector<32x128xf32>, vector<8x128xf32> -> vector<8x128xf32>
    %182 = arith.addf %180, %181 : vector<8x128xf32>
    %183 = vector.broadcast %10 : vector<1x128xf32> to vector<8x128xf32>
    %184 = arith.addf %182, %183 : vector<8x128xf32>
    %185 = arith.negf %184 : vector<8x128xf32>
    %186 = math.exp %185 : vector<8x128xf32>
    %cst_59 = arith.constant 1.000000e+00 : f32
    %187 = vector.broadcast %cst_59 : f32 to vector<8x128xf32>
    %188 = arith.addf %187, %186 : vector<8x128xf32>
    %189 = arith.divf %187, %188 : vector<8x128xf32>
    %190 = vector.extract_strided_slice %189 {offsets = [0, 0], sizes = [8, 32], strides = [1, 1]} : vector<8x128xf32> to vector<8x32xf32>
    %191 = vector.extract_strided_slice %189 {offsets = [0, 32], sizes = [8, 32], strides = [1, 1]} : vector<8x128xf32> to vector<8x32xf32>
    %192 = vector.extract_strided_slice %189 {offsets = [0, 64], sizes = [8, 32], strides = [1, 1]} : vector<8x128xf32> to vector<8x32xf32>
    %cst_60 = arith.constant 2.000000e+00 : f32
    %193 = vector.broadcast %cst_60 : f32 to vector<8x32xf32>
    %194 = arith.mulf %193, %192 : vector<8x32xf32>
    %cst_61 = arith.constant 1.000000e+00 : f32
    %195 = vector.broadcast %cst_61 : f32 to vector<8x32xf32>
    %196 = arith.subf %194, %195 : vector<8x32xf32>
    %197 = vector.extract_strided_slice %189 {offsets = [0, 96], sizes = [8, 32], strides = [1, 1]} : vector<8x128xf32> to vector<8x32xf32>
    %198 = arith.mulf %191, %153 : vector<8x32xf32>
    %199 = arith.mulf %190, %196 : vector<8x32xf32>
    %200 = arith.addf %198, %199 : vector<8x32xf32>
    %201 = math.tanh %200 : vector<8x32xf32>
    %202 = arith.mulf %197, %201 : vector<8x32xf32>
    %c4_i32 = arith.constant 4 : i32
    %c8_i32_62 = arith.constant 8 : i32
    %203 = arith.muli %c4_i32, %c8_i32_62 : i32
    %204 = tpu.assume_multiple %203, 8 : i32
    %205 = arith.index_cast %204 : i32 to index
    %c0_63 = arith.constant 0 : index
    %206 = vector.load %arg12[%205, %c0_63] : memref<64x128xf32, #tpu.memory_space<vmem>>, vector<8x128xf32>
    %cst_64 = arith.constant dense<0.000000e+00> : vector<8x128xf32>
    %207 = tpu.matmul %179, %7, %cst_64 {dimension_numbers = #tpu.dot_dimension_numbers<[1], [0], [0], [1], [0, 0, 1, 1], [], []>} : vector<8x32xf32>, vector<32x128xf32>, vector<8x128xf32> -> vector<8x128xf32>
    %208 = arith.addf %206, %207 : vector<8x128xf32>
    %209 = arith.negf %208 : vector<8x128xf32>
    %210 = math.exp %209 : vector<8x128xf32>
    %cst_65 = arith.constant 1.000000e+00 : f32
    %211 = vector.broadcast %cst_65 : f32 to vector<8x128xf32>
    %212 = arith.addf %211, %210 : vector<8x128xf32>
    %213 = arith.divf %211, %212 : vector<8x128xf32>
    %214 = vector.extract_strided_slice %213 {offsets = [0, 0], sizes = [8, 32], strides = [1, 1]} : vector<8x128xf32> to vector<8x32xf32>
    %215 = vector.extract_strided_slice %213 {offsets = [0, 32], sizes = [8, 32], strides = [1, 1]} : vector<8x128xf32> to vector<8x32xf32>
    %216 = vector.extract_strided_slice %213 {offsets = [0, 64], sizes = [8, 32], strides = [1, 1]} : vector<8x128xf32> to vector<8x32xf32>
    %cst_66 = arith.constant 2.000000e+00 : f32
    %217 = vector.broadcast %cst_66 : f32 to vector<8x32xf32>
    %218 = arith.mulf %217, %216 : vector<8x32xf32>
    %cst_67 = arith.constant 1.000000e+00 : f32
    %219 = vector.broadcast %cst_67 : f32 to vector<8x32xf32>
    %220 = arith.subf %218, %219 : vector<8x32xf32>
    %221 = vector.extract_strided_slice %213 {offsets = [0, 96], sizes = [8, 32], strides = [1, 1]} : vector<8x128xf32> to vector<8x32xf32>
    %222 = arith.mulf %215, %177 : vector<8x32xf32>
    %223 = arith.mulf %214, %220 : vector<8x32xf32>
    %224 = arith.addf %222, %223 : vector<8x32xf32>
    %225 = math.tanh %224 : vector<8x32xf32>
    %226 = arith.mulf %221, %225 : vector<8x32xf32>
    %cst_68 = arith.constant dense<0.000000e+00> : vector<8x128xf32>
    %227 = tpu.matmul %226, %8, %cst_68 {dimension_numbers = #tpu.dot_dimension_numbers<[1], [0], [0], [1], [0, 0, 1, 1], [], []>} : vector<8x32xf32>, vector<32x128xf32>, vector<8x128xf32> -> vector<8x128xf32>
    %cst_69 = arith.constant dense<0.000000e+00> : vector<8x128xf32>
    %228 = tpu.matmul %202, %9, %cst_69 {dimension_numbers = #tpu.dot_dimension_numbers<[1], [0], [0], [1], [0, 0, 1, 1], [], []>} : vector<8x32xf32>, vector<32x128xf32>, vector<8x128xf32> -> vector<8x128xf32>
    %229 = arith.addf %227, %228 : vector<8x128xf32>
    %230 = vector.broadcast %10 : vector<1x128xf32> to vector<8x128xf32>
    %231 = arith.addf %229, %230 : vector<8x128xf32>
    %232 = arith.negf %231 : vector<8x128xf32>
    %233 = math.exp %232 : vector<8x128xf32>
    %cst_70 = arith.constant 1.000000e+00 : f32
    %234 = vector.broadcast %cst_70 : f32 to vector<8x128xf32>
    %235 = arith.addf %234, %233 : vector<8x128xf32>
    %236 = arith.divf %234, %235 : vector<8x128xf32>
    %237 = vector.extract_strided_slice %236 {offsets = [0, 0], sizes = [8, 32], strides = [1, 1]} : vector<8x128xf32> to vector<8x32xf32>
    %238 = vector.extract_strided_slice %236 {offsets = [0, 32], sizes = [8, 32], strides = [1, 1]} : vector<8x128xf32> to vector<8x32xf32>
    %239 = vector.extract_strided_slice %236 {offsets = [0, 64], sizes = [8, 32], strides = [1, 1]} : vector<8x128xf32> to vector<8x32xf32>
    %cst_71 = arith.constant 2.000000e+00 : f32
    %240 = vector.broadcast %cst_71 : f32 to vector<8x32xf32>
    %241 = arith.mulf %240, %239 : vector<8x32xf32>
    %cst_72 = arith.constant 1.000000e+00 : f32
    %242 = vector.broadcast %cst_72 : f32 to vector<8x32xf32>
    %243 = arith.subf %241, %242 : vector<8x32xf32>
    %244 = vector.extract_strided_slice %236 {offsets = [0, 96], sizes = [8, 32], strides = [1, 1]} : vector<8x128xf32> to vector<8x32xf32>
    %245 = arith.mulf %238, %200 : vector<8x32xf32>
    %246 = arith.mulf %237, %243 : vector<8x32xf32>
    %247 = arith.addf %245, %246 : vector<8x32xf32>
    %248 = math.tanh %247 : vector<8x32xf32>
    %249 = arith.mulf %244, %248 : vector<8x32xf32>
    %c5_i32 = arith.constant 5 : i32
    %c8_i32_73 = arith.constant 8 : i32
    %250 = arith.muli %c5_i32, %c8_i32_73 : i32
    %251 = tpu.assume_multiple %250, 8 : i32
    %252 = arith.index_cast %251 : i32 to index
    %c0_74 = arith.constant 0 : index
    %253 = vector.load %arg12[%252, %c0_74] : memref<64x128xf32, #tpu.memory_space<vmem>>, vector<8x128xf32>
    %cst_75 = arith.constant dense<0.000000e+00> : vector<8x128xf32>
    %254 = tpu.matmul %226, %7, %cst_75 {dimension_numbers = #tpu.dot_dimension_numbers<[1], [0], [0], [1], [0, 0, 1, 1], [], []>} : vector<8x32xf32>, vector<32x128xf32>, vector<8x128xf32> -> vector<8x128xf32>
    %255 = arith.addf %253, %254 : vector<8x128xf32>
    %256 = arith.negf %255 : vector<8x128xf32>
    %257 = math.exp %256 : vector<8x128xf32>
    %cst_76 = arith.constant 1.000000e+00 : f32
    %258 = vector.broadcast %cst_76 : f32 to vector<8x128xf32>
    %259 = arith.addf %258, %257 : vector<8x128xf32>
    %260 = arith.divf %258, %259 : vector<8x128xf32>
    %261 = vector.extract_strided_slice %260 {offsets = [0, 0], sizes = [8, 32], strides = [1, 1]} : vector<8x128xf32> to vector<8x32xf32>
    %262 = vector.extract_strided_slice %260 {offsets = [0, 32], sizes = [8, 32], strides = [1, 1]} : vector<8x128xf32> to vector<8x32xf32>
    %263 = vector.extract_strided_slice %260 {offsets = [0, 64], sizes = [8, 32], strides = [1, 1]} : vector<8x128xf32> to vector<8x32xf32>
    %cst_77 = arith.constant 2.000000e+00 : f32
    %264 = vector.broadcast %cst_77 : f32 to vector<8x32xf32>
    %265 = arith.mulf %264, %263 : vector<8x32xf32>
    %cst_78 = arith.constant 1.000000e+00 : f32
    %266 = vector.broadcast %cst_78 : f32 to vector<8x32xf32>
    %267 = arith.subf %265, %266 : vector<8x32xf32>
    %268 = vector.extract_strided_slice %260 {offsets = [0, 96], sizes = [8, 32], strides = [1, 1]} : vector<8x128xf32> to vector<8x32xf32>
    %269 = arith.mulf %262, %224 : vector<8x32xf32>
    %270 = arith.mulf %261, %267 : vector<8x32xf32>
    %271 = arith.addf %269, %270 : vector<8x32xf32>
    %272 = math.tanh %271 : vector<8x32xf32>
    %273 = arith.mulf %268, %272 : vector<8x32xf32>
    %cst_79 = arith.constant dense<0.000000e+00> : vector<8x128xf32>
    %274 = tpu.matmul %273, %8, %cst_79 {dimension_numbers = #tpu.dot_dimension_numbers<[1], [0], [0], [1], [0, 0, 1, 1], [], []>} : vector<8x32xf32>, vector<32x128xf32>, vector<8x128xf32> -> vector<8x128xf32>
    %cst_80 = arith.constant dense<0.000000e+00> : vector<8x128xf32>
    %275 = tpu.matmul %249, %9, %cst_80 {dimension_numbers = #tpu.dot_dimension_numbers<[1], [0], [0], [1], [0, 0, 1, 1], [], []>} : vector<8x32xf32>, vector<32x128xf32>, vector<8x128xf32> -> vector<8x128xf32>
    %276 = arith.addf %274, %275 : vector<8x128xf32>
    %277 = vector.broadcast %10 : vector<1x128xf32> to vector<8x128xf32>
    %278 = arith.addf %276, %277 : vector<8x128xf32>
    %279 = arith.negf %278 : vector<8x128xf32>
    %280 = math.exp %279 : vector<8x128xf32>
    %cst_81 = arith.constant 1.000000e+00 : f32
    %281 = vector.broadcast %cst_81 : f32 to vector<8x128xf32>
    %282 = arith.addf %281, %280 : vector<8x128xf32>
    %283 = arith.divf %281, %282 : vector<8x128xf32>
    %284 = vector.extract_strided_slice %283 {offsets = [0, 0], sizes = [8, 32], strides = [1, 1]} : vector<8x128xf32> to vector<8x32xf32>
    %285 = vector.extract_strided_slice %283 {offsets = [0, 32], sizes = [8, 32], strides = [1, 1]} : vector<8x128xf32> to vector<8x32xf32>
    %286 = vector.extract_strided_slice %283 {offsets = [0, 64], sizes = [8, 32], strides = [1, 1]} : vector<8x128xf32> to vector<8x32xf32>
    %cst_82 = arith.constant 2.000000e+00 : f32
    %287 = vector.broadcast %cst_82 : f32 to vector<8x32xf32>
    %288 = arith.mulf %287, %286 : vector<8x32xf32>
    %cst_83 = arith.constant 1.000000e+00 : f32
    %289 = vector.broadcast %cst_83 : f32 to vector<8x32xf32>
    %290 = arith.subf %288, %289 : vector<8x32xf32>
    %291 = vector.extract_strided_slice %283 {offsets = [0, 96], sizes = [8, 32], strides = [1, 1]} : vector<8x128xf32> to vector<8x32xf32>
    %292 = arith.mulf %285, %247 : vector<8x32xf32>
    %293 = arith.mulf %284, %290 : vector<8x32xf32>
    %294 = arith.addf %292, %293 : vector<8x32xf32>
    %295 = math.tanh %294 : vector<8x32xf32>
    %296 = arith.mulf %291, %295 : vector<8x32xf32>
    %c6_i32 = arith.constant 6 : i32
    %c8_i32_84 = arith.constant 8 : i32
    %297 = arith.muli %c6_i32, %c8_i32_84 : i32
    %298 = tpu.assume_multiple %297, 8 : i32
    %299 = arith.index_cast %298 : i32 to index
    %c0_85 = arith.constant 0 : index
    %300 = vector.load %arg12[%299, %c0_85] : memref<64x128xf32, #tpu.memory_space<vmem>>, vector<8x128xf32>
    %cst_86 = arith.constant dense<0.000000e+00> : vector<8x128xf32>
    %301 = tpu.matmul %273, %7, %cst_86 {dimension_numbers = #tpu.dot_dimension_numbers<[1], [0], [0], [1], [0, 0, 1, 1], [], []>} : vector<8x32xf32>, vector<32x128xf32>, vector<8x128xf32> -> vector<8x128xf32>
    %302 = arith.addf %300, %301 : vector<8x128xf32>
    %303 = arith.negf %302 : vector<8x128xf32>
    %304 = math.exp %303 : vector<8x128xf32>
    %cst_87 = arith.constant 1.000000e+00 : f32
    %305 = vector.broadcast %cst_87 : f32 to vector<8x128xf32>
    %306 = arith.addf %305, %304 : vector<8x128xf32>
    %307 = arith.divf %305, %306 : vector<8x128xf32>
    %308 = vector.extract_strided_slice %307 {offsets = [0, 0], sizes = [8, 32], strides = [1, 1]} : vector<8x128xf32> to vector<8x32xf32>
    %309 = vector.extract_strided_slice %307 {offsets = [0, 32], sizes = [8, 32], strides = [1, 1]} : vector<8x128xf32> to vector<8x32xf32>
    %310 = vector.extract_strided_slice %307 {offsets = [0, 64], sizes = [8, 32], strides = [1, 1]} : vector<8x128xf32> to vector<8x32xf32>
    %cst_88 = arith.constant 2.000000e+00 : f32
    %311 = vector.broadcast %cst_88 : f32 to vector<8x32xf32>
    %312 = arith.mulf %311, %310 : vector<8x32xf32>
    %cst_89 = arith.constant 1.000000e+00 : f32
    %313 = vector.broadcast %cst_89 : f32 to vector<8x32xf32>
    %314 = arith.subf %312, %313 : vector<8x32xf32>
    %315 = vector.extract_strided_slice %307 {offsets = [0, 96], sizes = [8, 32], strides = [1, 1]} : vector<8x128xf32> to vector<8x32xf32>
    %316 = arith.mulf %309, %271 : vector<8x32xf32>
    %317 = arith.mulf %308, %314 : vector<8x32xf32>
    %318 = arith.addf %316, %317 : vector<8x32xf32>
    %319 = math.tanh %318 : vector<8x32xf32>
    %320 = arith.mulf %315, %319 : vector<8x32xf32>
    %cst_90 = arith.constant dense<0.000000e+00> : vector<8x128xf32>
    %321 = tpu.matmul %320, %8, %cst_90 {dimension_numbers = #tpu.dot_dimension_numbers<[1], [0], [0], [1], [0, 0, 1, 1], [], []>} : vector<8x32xf32>, vector<32x128xf32>, vector<8x128xf32> -> vector<8x128xf32>
    %cst_91 = arith.constant dense<0.000000e+00> : vector<8x128xf32>
    %322 = tpu.matmul %296, %9, %cst_91 {dimension_numbers = #tpu.dot_dimension_numbers<[1], [0], [0], [1], [0, 0, 1, 1], [], []>} : vector<8x32xf32>, vector<32x128xf32>, vector<8x128xf32> -> vector<8x128xf32>
    %323 = arith.addf %321, %322 : vector<8x128xf32>
    %324 = vector.broadcast %10 : vector<1x128xf32> to vector<8x128xf32>
    %325 = arith.addf %323, %324 : vector<8x128xf32>
    %326 = arith.negf %325 : vector<8x128xf32>
    %327 = math.exp %326 : vector<8x128xf32>
    %cst_92 = arith.constant 1.000000e+00 : f32
    %328 = vector.broadcast %cst_92 : f32 to vector<8x128xf32>
    %329 = arith.addf %328, %327 : vector<8x128xf32>
    %330 = arith.divf %328, %329 : vector<8x128xf32>
    %331 = vector.extract_strided_slice %330 {offsets = [0, 0], sizes = [8, 32], strides = [1, 1]} : vector<8x128xf32> to vector<8x32xf32>
    %332 = vector.extract_strided_slice %330 {offsets = [0, 32], sizes = [8, 32], strides = [1, 1]} : vector<8x128xf32> to vector<8x32xf32>
    %333 = vector.extract_strided_slice %330 {offsets = [0, 64], sizes = [8, 32], strides = [1, 1]} : vector<8x128xf32> to vector<8x32xf32>
    %cst_93 = arith.constant 2.000000e+00 : f32
    %334 = vector.broadcast %cst_93 : f32 to vector<8x32xf32>
    %335 = arith.mulf %334, %333 : vector<8x32xf32>
    %cst_94 = arith.constant 1.000000e+00 : f32
    %336 = vector.broadcast %cst_94 : f32 to vector<8x32xf32>
    %337 = arith.subf %335, %336 : vector<8x32xf32>
    %338 = vector.extract_strided_slice %330 {offsets = [0, 96], sizes = [8, 32], strides = [1, 1]} : vector<8x128xf32> to vector<8x32xf32>
    %339 = arith.mulf %332, %294 : vector<8x32xf32>
    %340 = arith.mulf %331, %337 : vector<8x32xf32>
    %341 = arith.addf %339, %340 : vector<8x32xf32>
    %342 = math.tanh %341 : vector<8x32xf32>
    %343 = arith.mulf %338, %342 : vector<8x32xf32>
    %c7_i32 = arith.constant 7 : i32
    %c8_i32_95 = arith.constant 8 : i32
    %344 = arith.muli %c7_i32, %c8_i32_95 : i32
    %345 = tpu.assume_multiple %344, 8 : i32
    %346 = arith.index_cast %345 : i32 to index
    %c0_96 = arith.constant 0 : index
    %347 = vector.load %arg12[%346, %c0_96] : memref<64x128xf32, #tpu.memory_space<vmem>>, vector<8x128xf32>
    %cst_97 = arith.constant dense<0.000000e+00> : vector<8x128xf32>
    %348 = tpu.matmul %320, %7, %cst_97 {dimension_numbers = #tpu.dot_dimension_numbers<[1], [0], [0], [1], [0, 0, 1, 1], [], []>} : vector<8x32xf32>, vector<32x128xf32>, vector<8x128xf32> -> vector<8x128xf32>
    %349 = arith.addf %347, %348 : vector<8x128xf32>
    %350 = arith.negf %349 : vector<8x128xf32>
    %351 = math.exp %350 : vector<8x128xf32>
    %cst_98 = arith.constant 1.000000e+00 : f32
    %352 = vector.broadcast %cst_98 : f32 to vector<8x128xf32>
    %353 = arith.addf %352, %351 : vector<8x128xf32>
    %354 = arith.divf %352, %353 : vector<8x128xf32>
    %355 = vector.extract_strided_slice %354 {offsets = [0, 0], sizes = [8, 32], strides = [1, 1]} : vector<8x128xf32> to vector<8x32xf32>
    %356 = vector.extract_strided_slice %354 {offsets = [0, 32], sizes = [8, 32], strides = [1, 1]} : vector<8x128xf32> to vector<8x32xf32>
    %357 = vector.extract_strided_slice %354 {offsets = [0, 64], sizes = [8, 32], strides = [1, 1]} : vector<8x128xf32> to vector<8x32xf32>
    %cst_99 = arith.constant 2.000000e+00 : f32
    %358 = vector.broadcast %cst_99 : f32 to vector<8x32xf32>
    %359 = arith.mulf %358, %357 : vector<8x32xf32>
    %cst_100 = arith.constant 1.000000e+00 : f32
    %360 = vector.broadcast %cst_100 : f32 to vector<8x32xf32>
    %361 = arith.subf %359, %360 : vector<8x32xf32>
    %362 = vector.extract_strided_slice %354 {offsets = [0, 96], sizes = [8, 32], strides = [1, 1]} : vector<8x128xf32> to vector<8x32xf32>
    %363 = arith.mulf %356, %318 : vector<8x32xf32>
    %364 = arith.mulf %355, %361 : vector<8x32xf32>
    %365 = arith.addf %363, %364 : vector<8x32xf32>
    %366 = math.tanh %365 : vector<8x32xf32>
    %367 = arith.mulf %362, %366 : vector<8x32xf32>
    %cst_101 = arith.constant dense<0.000000e+00> : vector<8x128xf32>
    %368 = tpu.matmul %367, %8, %cst_101 {dimension_numbers = #tpu.dot_dimension_numbers<[1], [0], [0], [1], [0, 0, 1, 1], [], []>} : vector<8x32xf32>, vector<32x128xf32>, vector<8x128xf32> -> vector<8x128xf32>
    %cst_102 = arith.constant dense<0.000000e+00> : vector<8x128xf32>
    %369 = tpu.matmul %343, %9, %cst_102 {dimension_numbers = #tpu.dot_dimension_numbers<[1], [0], [0], [1], [0, 0, 1, 1], [], []>} : vector<8x32xf32>, vector<32x128xf32>, vector<8x128xf32> -> vector<8x128xf32>
    %370 = arith.addf %368, %369 : vector<8x128xf32>
    %371 = vector.broadcast %10 : vector<1x128xf32> to vector<8x128xf32>
    %372 = arith.addf %370, %371 : vector<8x128xf32>
    %373 = arith.negf %372 : vector<8x128xf32>
    %374 = math.exp %373 : vector<8x128xf32>
    %cst_103 = arith.constant 1.000000e+00 : f32
    %375 = vector.broadcast %cst_103 : f32 to vector<8x128xf32>
    %376 = arith.addf %375, %374 : vector<8x128xf32>
    %377 = arith.divf %375, %376 : vector<8x128xf32>
    %378 = vector.extract_strided_slice %377 {offsets = [0, 0], sizes = [8, 32], strides = [1, 1]} : vector<8x128xf32> to vector<8x32xf32>
    %379 = vector.extract_strided_slice %377 {offsets = [0, 32], sizes = [8, 32], strides = [1, 1]} : vector<8x128xf32> to vector<8x32xf32>
    %380 = vector.extract_strided_slice %377 {offsets = [0, 64], sizes = [8, 32], strides = [1, 1]} : vector<8x128xf32> to vector<8x32xf32>
    %cst_104 = arith.constant 2.000000e+00 : f32
    %381 = vector.broadcast %cst_104 : f32 to vector<8x32xf32>
    %382 = arith.mulf %381, %380 : vector<8x32xf32>
    %cst_105 = arith.constant 1.000000e+00 : f32
    %383 = vector.broadcast %cst_105 : f32 to vector<8x32xf32>
    %384 = arith.subf %382, %383 : vector<8x32xf32>
    %385 = vector.extract_strided_slice %377 {offsets = [0, 96], sizes = [8, 32], strides = [1, 1]} : vector<8x128xf32> to vector<8x32xf32>
    %386 = arith.mulf %379, %341 : vector<8x32xf32>
    %387 = arith.mulf %378, %384 : vector<8x32xf32>
    %388 = arith.addf %386, %387 : vector<8x32xf32>
    %389 = math.tanh %388 : vector<8x32xf32>
    %390 = arith.mulf %385, %389 : vector<8x32xf32>
    %c8_i32_106 = arith.constant 8 : i32
    %cst_107 = arith.constant dense<0.000000e+00> : vector<8xf32>
    %391 = vector.multi_reduction <add>, %390, %cst_107 [1] : vector<8x32xf32> to vector<8xf32>
    %392 = vector.shape_cast %391 : vector<8xf32> to vector<8x1xf32>
    %cst_108 = arith.constant 3.200000e+01 : f32
    %393 = vector.broadcast %cst_108 : f32 to vector<8x1xf32>
    %394 = arith.divf %392, %393 : vector<8x1xf32>
    %395 = vector.broadcast %394 : vector<8x1xf32> to vector<8x32xf32>
    %396 = arith.subf %390, %395 : vector<8x32xf32>
    %397 = arith.mulf %396, %396 : vector<8x32xf32>
    %cst_109 = arith.constant dense<0.000000e+00> : vector<8xf32>
    %398 = vector.multi_reduction <add>, %397, %cst_109 [1] : vector<8x32xf32> to vector<8xf32>
    %399 = vector.shape_cast %398 : vector<8xf32> to vector<8x1xf32>
    %cst_110 = arith.constant 3.200000e+01 : f32
    %400 = vector.broadcast %cst_110 : f32 to vector<8x1xf32>
    %401 = arith.divf %399, %400 : vector<8x1xf32>
    %402 = vector.broadcast %394 : vector<8x1xf32> to vector<8x32xf32>
    %403 = arith.subf %390, %402 : vector<8x32xf32>
    %cst_111 = arith.constant 9.99999974E-6 : f32
    %404 = vector.broadcast %cst_111 : f32 to vector<8x1xf32>
    %405 = arith.addf %401, %404 : vector<8x1xf32>
    %406 = math.rsqrt %405 : vector<8x1xf32>
    %407 = vector.broadcast %406 : vector<8x1xf32> to vector<8x32xf32>
    %408 = arith.mulf %403, %407 : vector<8x32xf32>
    %c0_112 = arith.constant 0 : index
    %c0_113 = arith.constant 0 : index
    %409 = vector.load %arg7[%c0_112, %c0_113] : memref<1x32xf32, #tpu.memory_space<vmem>>, vector<1x32xf32>
    %410 = vector.broadcast %409 : vector<1x32xf32> to vector<8x32xf32>
    %411 = arith.mulf %408, %410 : vector<8x32xf32>
    %c0_114 = arith.constant 0 : index
    %c0_115 = arith.constant 0 : index
    %412 = vector.load %arg8[%c0_114, %c0_115] : memref<1x32xf32, #tpu.memory_space<vmem>>, vector<1x32xf32>
    %413 = vector.broadcast %412 : vector<1x32xf32> to vector<8x32xf32>
    %414 = arith.addf %411, %413 : vector<8x32xf32>
    %c0_116 = arith.constant 0 : index
    %c0_117 = arith.constant 0 : index
    %415 = vector.load %arg9[%c0_116, %c0_117] : memref<32x128xf32, #tpu.memory_space<vmem>>, vector<32x128xf32>
    %cst_118 = arith.constant dense<0.000000e+00> : vector<8x128xf32>
    %416 = tpu.matmul %414, %415, %cst_118 {dimension_numbers = #tpu.dot_dimension_numbers<[1], [0], [0], [1], [0, 0, 1, 1], [], []>} : vector<8x32xf32>, vector<32x128xf32>, vector<8x128xf32> -> vector<8x128xf32>
    %c0_119 = arith.constant 0 : index
    %c0_120 = arith.constant 0 : index
    %417 = vector.load %arg10[%c0_119, %c0_120] : memref<1x128xf32, #tpu.memory_space<vmem>>, vector<1x128xf32>
    %418 = vector.broadcast %417 : vector<1x128xf32> to vector<8x128xf32>
    %419 = arith.addf %416, %418 : vector<8x128xf32>
    %420 = vector.extract_strided_slice %419 {offsets = [0, 0], sizes = [8, 8], strides = [1, 1]} : vector<8x128xf32> to vector<8x8xf32>
    %421 = vector.shape_cast %420 : vector<8x8xf32> to vector<8x8x1xf32>
    %422 = vector.shape_cast %420 : vector<8x8xf32> to vector<8x1x8xf32>
    %423 = vector.broadcast %422 : vector<8x1x8xf32> to vector<8x8x8xf32>
    %424 = vector.broadcast %421 : vector<8x8x1xf32> to vector<8x8x8xf32>
    %425 = arith.cmpf oge, %423, %424 : vector<8x8x8xf32>
    %cst_121 = arith.constant 1.000000e+00 : f32
    %cst_122 = arith.constant 0.000000e+00 : f32
    %426 = vector.broadcast %cst_121 : f32 to vector<8x8x8xf32>
    %427 = vector.broadcast %cst_122 : f32 to vector<8x8x8xf32>
    %428 = arith.select %425, %426, %427 : vector<8x8x8xi1>, vector<8x8x8xf32>
    %cst_123 = arith.constant dense<0.000000e+00> : vector<8x8xf32>
    %429 = vector.multi_reduction <add>, %428, %cst_123 [2] : vector<8x8x8xf32> to vector<8x8xf32>
    %430 = vector.broadcast %422 : vector<8x1x8xf32> to vector<8x8x8xf32>
    %431 = arith.mulf %428, %430 : vector<8x8x8xf32>
    %cst_124 = arith.constant dense<0.000000e+00> : vector<8x8xf32>
    %432 = vector.multi_reduction <add>, %431, %cst_124 [2] : vector<8x8x8xf32> to vector<8x8xf32>
    %433 = arith.mulf %429, %420 : vector<8x8xf32>
    %cst_125 = arith.constant 1.000000e+00 : f32
    %434 = vector.broadcast %cst_125 : f32 to vector<8x8xf32>
    %435 = arith.addf %434, %433 : vector<8x8xf32>
    %436 = arith.cmpf ogt, %435, %432 : vector<8x8xf32>
    %cst_126 = arith.constant 1.000000e+00 : f32
    %cst_127 = arith.constant 0.000000e+00 : f32
    %437 = vector.broadcast %cst_126 : f32 to vector<8x8xf32>
    %438 = vector.broadcast %cst_127 : f32 to vector<8x8xf32>
    %439 = arith.select %436, %437, %438 : vector<8x8xi1>, vector<8x8xf32>
    %cst_128 = arith.constant dense<0.000000e+00> : vector<8xf32>
    %440 = vector.multi_reduction <add>, %439, %cst_128 [1] : vector<8x8xf32> to vector<8xf32>
    %441 = vector.shape_cast %440 : vector<8xf32> to vector<8x1xf32>
    %442 = arith.mulf %420, %439 : vector<8x8xf32>
    %cst_129 = arith.constant dense<0.000000e+00> : vector<8xf32>
    %443 = vector.multi_reduction <add>, %442, %cst_129 [1] : vector<8x8xf32> to vector<8xf32>
    %444 = vector.shape_cast %443 : vector<8xf32> to vector<8x1xf32>
    %cst_130 = arith.constant 1.000000e+00 : f32
    %445 = vector.broadcast %cst_130 : f32 to vector<8x1xf32>
    %446 = arith.subf %444, %445 : vector<8x1xf32>
    %447 = arith.divf %446, %441 : vector<8x1xf32>
    %448 = tpu.iota {dimensions = array<i32: 1>} : vector<8x128xi32>
    %c8_i32_131 = arith.constant 8 : i32
    %449 = vector.broadcast %c8_i32_131 : i32 to vector<8x128xi32>
    %450 = arith.cmpi slt, %448, %449 : vector<8x128xi32>
    %451 = vector.broadcast %447 : vector<8x1xf32> to vector<8x128xf32>
    %452 = arith.subf %419, %451 : vector<8x128xf32>
    %cst_132 = arith.constant 0.000000e+00 : f32
    %453 = vector.broadcast %cst_132 : f32 to vector<8x128xf32>
    %454 = arith.maximumf %452, %453 : vector<8x128xf32>
    %cst_133 = arith.constant 0.000000e+00 : f32
    %455 = vector.broadcast %cst_133 : f32 to vector<8x128xf32>
    %456 = arith.select %450, %454, %455 : vector<8x128xi1>, vector<8x128xf32>
    %c0_134 = arith.constant 0 : index
    %c0_135 = arith.constant 0 : index
    %457 = vector.load %arg11[%c0_134, %c0_135] : memref<8x128xf32, #tpu.memory_space<vmem>>, vector<8x128xf32>
    tpu.vector_store %arg11[%c0_134, %c0_135], %456 {strides = array<i32>} : memref<8x128xf32, #tpu.memory_space<vmem>>, vector<8x128xf32>,
    return
  }
}

</mosaic_0001>

<llo_original>
// kernel: tpu_custom_call.1
$region0: #{tpu_custom_call.1}
  #allocation0 [shape = 'u32[]', space=smem, size = 0x4, offset = 0x4, fixed_abs, tag = 'smem constant byte address 0x4 - core index']
  #allocation1 [shape = 'u32[144,128]{1,0:T(1,128)}', space=vmem, size = 0x12000, scoped, tag = 'internal scratch']
  #allocation2 [shape = 'f32[64,128]{1,0:T(8,128)}', space=vmem, size = 0x8000, scoped, tag = 'scratch operand']
  %s0 = inlined_call_operand.vmem [shape: f32[64,8], index: 0, kind: input, shape index: {}]
  %s1 = inlined_call_operand.hbm [shape: f32[8,128], index: 1, kind: input, shape index: {}]
  %s2 = inlined_call_operand.vmem [shape: f32[32,128], index: 2, kind: input, shape index: {}]
  %s3 = inlined_call_operand.vmem [shape: f32[1,128], index: 3, kind: input, shape index: {}]
  %s4 = inlined_call_operand.vmem [shape: f32[32,128], index: 4, kind: input, shape index: {}]
  %s5 = inlined_call_operand.hbm [shape: f32[32,128], index: 5, kind: input, shape index: {}]
  %s6 = inlined_call_operand.vmem [shape: f32[1,128], index: 6, kind: input, shape index: {}]
  %s7 = inlined_call_operand.hbm [shape: f32[1,32], index: 7, kind: input, shape index: {}]
  %s8 = inlined_call_operand.vmem [shape: f32[1,32], index: 8, kind: input, shape index: {}]
  %s9 = inlined_call_operand.vmem [shape: f32[32,128], index: 9, kind: input, shape index: {}]
  %s10 = inlined_call_operand.vmem [shape: f32[1,128], index: 10, kind: input, shape index: {}]
  %s11 = inlined_call_operand.hbm [shape: f32[8,128], index: 11, kind: output, shape index: {}]
  %s12 = sld [smem:[#allocation0]]
  $region66: #{tpu_custom_call.1} parent=0
    _
  %s14 = ssub.s32 1, %s12
  %s15 = scalar_select 0, %s14, %s12
  $region1: #{tpu_custom_call.1} parent=0
    #allocation3 [shape = 'u8[4096]{0}', space=vmem, size = 0x1000, scoped, tag = 'input window, operand 1, single buffered']
    #allocation4 [shape = 's32[1]{0}', space=sflag, size = 0x4, scoped, tag = 'scoped memory for tpu_custom_call.1']
    #allocation5 [shape = 's32[1]{0}', space=sflag, size = 0x4, scoped, tag = 'scoped memory for tpu_custom_call.1']
    #allocation6 [shape = 'u8[16384]{0}', space=vmem, size = 0x4000, scoped, tag = 'input window, operand 5, single buffered']
    #allocation7 [shape = 's32[1]{0}', space=sflag, size = 0x4, scoped, tag = 'scoped memory for tpu_custom_call.1']
    #allocation8 [shape = 'u8[512]{0}', space=vmem, size = 0x400, scoped, tag = 'input window, operand 7, single buffered']
    #allocation9 [shape = 'u8[4096]{0}', space=vmem, size = 0x1000, scoped, tag = 'output window, operand 0, single buffered']
    %16 = vsyncpa [#allocation4], 0
    %17 = vsyncpa [#allocation7], 0
    %18 = vsyncpa [#allocation5], 0
    // Predicated region
    $region2: #{tpu_custom_call.1} parent=1 // pred_check
      _
    $region3: #{tpu_custom_call.1} parent=1 // pred_check_branch
      %20 = sbr.rel (0) target = $region5
    $region4: #{tpu_custom_call.1} parent=1 // pred_region
      _
    $region5: #{tpu_custom_call.1} parent=1 // pred_fallthru
      _
    // Predicated region
    $region6: #{tpu_custom_call.1} parent=1 // pred_check
      _
    $region7: #{tpu_custom_call.1} parent=1 // pred_check_branch
      %22 = sbr.rel (0) target = $region9
    $region8: #{tpu_custom_call.1} parent=1 // pred_region
      %s24 = ssub.s32 128, 128
      %25 = vsyncadd [#allocation4], %s24
      %s27 = sshll.u32 [#allocation3], 4
      %s28 = int_to_ptr.vmem [resolvable:$true] %s27
      %30 = dma.hbm_to_vmem [thread:$0]  %s1, 128, %s28, [#allocation4]
    $region9: #{tpu_custom_call.1} parent=1 // pred_fallthru
      _
    // Predicated region
    $region10: #{tpu_custom_call.1} parent=1 // pred_check
      _
    $region11: #{tpu_custom_call.1} parent=1 // pred_check_branch
      %32 = sbr.rel (0) target = $region13
    $region12: #{tpu_custom_call.1} parent=1 // pred_region
      _
    $region13: #{tpu_custom_call.1} parent=1 // pred_fallthru
      _
    // Predicated region
    $region14: #{tpu_custom_call.1} parent=1 // pred_check
      _
    $region15: #{tpu_custom_call.1} parent=1 // pred_check_branch
      %34 = sbr.rel (0) target = $region17
    $region16: #{tpu_custom_call.1} parent=1 // pred_region
      _
    $region17: #{tpu_custom_call.1} parent=1 // pred_fallthru
      _
    // Predicated region
    $region18: #{tpu_custom_call.1} parent=1 // pred_check
      _
    $region19: #{tpu_custom_call.1} parent=1 // pred_check_branch
      %36 = sbr.rel (0) target = $region21
    $region20: #{tpu_custom_call.1} parent=1 // pred_region
      _
    $region21: #{tpu_custom_call.1} parent=1 // pred_fallthru
      _
    // Predicated region
    $region22: #{tpu_custom_call.1} parent=1 // pred_check
      _
    $region23: #{tpu_custom_call.1} parent=1 // pred_check_branch
      %38 = sbr.rel (0) target = $region25
    $region24: #{tpu_custom_call.1} parent=1 // pred_region
      %s40 = ssub.s32 512, 512
      %41 = vsyncadd [#allocation7], %s40
      %s42 = sshll.u32 [#allocation6], 4
      %s43 = int_to_ptr.vmem [resolvable:$true] %s42
      %48 = dma.hbm_to_vmem [thread:$0]  %s5, 512, %s43, [#allocation7], 128, 128, 8
    $region25: #{tpu_custom_call.1} parent=1 // pred_fallthru
      _
    // Predicated region
    $region26: #{tpu_custom_call.1} parent=1 // pred_check
      _
    $region27: #{tpu_custom_call.1} parent=1 // pred_check_branch
      %50 = sbr.rel (0) target = $region29
    $region28: #{tpu_custom_call.1} parent=1 // pred_region
      _
    $region29: #{tpu_custom_call.1} parent=1 // pred_fallthru
      _
    // Predicated region
    $region30: #{tpu_custom_call.1} parent=1 // pred_check
      _
    $region31: #{tpu_custom_call.1} parent=1 // pred_check_branch
      %52 = sbr.rel (0) target = $region33
    $region32: #{tpu_custom_call.1} parent=1 // pred_region
      %s54 = ssub.s32 16, 16
      %55 = vsyncadd [#allocation7], %s54
      %s57 = sshll.u32 [#allocation8], 4
      %s58 = int_to_ptr.vmem [resolvable:$true] %s57
      %60 = dma.hbm_to_vmem [thread:$0]  %s7, 16, %s58, [#allocation7]
    $region33: #{tpu_custom_call.1} parent=1 // pred_fallthru
      _
    // Predicated region
    $region34: #{tpu_custom_call.1} parent=1 // pred_check
      _
    $region35: #{tpu_custom_call.1} parent=1 // pred_check_branch
      %62 = sbr.rel (0) target = $region37
    $region36: #{tpu_custom_call.1} parent=1 // pred_region
      _
    $region37: #{tpu_custom_call.1} parent=1 // pred_fallthru
      _
    // Predicated region
    $region38: #{tpu_custom_call.1} parent=1 // pred_check
      _
    $region39: #{tpu_custom_call.1} parent=1 // pred_check_branch
      %64 = sbr.rel (0) target = $region41
    $region40: #{tpu_custom_call.1} parent=1 // pred_region
      _
    $region41: #{tpu_custom_call.1} parent=1 // pred_fallthru
      _
    // Predicated region
    $region42: #{tpu_custom_call.1} parent=1 // pred_check
      _
    $region43: #{tpu_custom_call.1} parent=1 // pred_check_branch
      %66 = sbr.rel (0) target = $region45
    $region44: #{tpu_custom_call.1} parent=1 // pred_region
      _
    $region45: #{tpu_custom_call.1} parent=1 // pred_fallthru
      _
    // Predicated region
    $region46: #{tpu_custom_call.1} parent=1 // pred_check
      _
    $region47: #{tpu_custom_call.1} parent=1 // pred_check_branch
      %68 = sbr.rel (0) target = $region49
    $region48: #{tpu_custom_call.1} parent=1 // pred_region
      %69 = dma.done [#allocation4], 128
    $region49: #{tpu_custom_call.1} parent=1 // pred_fallthru
      _
    // Predicated region
    $region50: #{tpu_custom_call.1} parent=1 // pred_check
      _
    $region51: #{tpu_custom_call.1} parent=1 // pred_check_branch
      %71 = sbr.rel (0) target = $region53
    $region52: #{tpu_custom_call.1} parent=1 // pred_region
      %72 = dma.done [#allocation7], 512
    $region53: #{tpu_custom_call.1} parent=1 // pred_fallthru
      _
    // Predicated region
    $region54: #{tpu_custom_call.1} parent=1 // pred_check
      _
    $region55: #{tpu_custom_call.1} parent=1 // pred_check_branch
      %74 = sbr.rel (0) target = $region57
    $region56: #{tpu_custom_call.1} parent=1 // pred_region
      %75 = dma.done [#allocation7], 16
    $region57: #{tpu_custom_call.1} parent=1 // pred_fallthru
      _
    %v76 = vld [vmem:[%s0] sm:$0xff]
    %v77 = vld [vmem:[%s0 + $0x8] sm:$0xff]
    %v78 = vld [vmem:[%s0 + $0x10] sm:$0xff]
    %v79 = vld [vmem:[%s0 + $0x18] sm:$0xff]
    %v80 = vld [vmem:[%s0 + $0x20] sm:$0xff]
    %v81 = vld [vmem:[%s0 + $0x28] sm:$0xff]
    %v82 = vld [vmem:[%s0 + $0x30] sm:$0xff]
    %v83 = vld [vmem:[%s0 + $0x38] sm:$0xff]
    %v84 = vld [vmem:[#allocation3] sm:$0xff]
    %v85 = vld [vmem:[%s3] sm:$0x1]
    %v87 = vlaneseq
    %v88 = vshrl.u32 %v87, 7
    %v89 = vsub.s32 0, %v88
    %v90 = vrot.slane %v85, %v89
    %vm92 = vcmask 64512
    %v94 = vsel %vm92, %v76, 0
    %v97 = vsel %vm92, %v77, 0
    %v100 = vsel %vm92, %v78, 0
    %v103 = vsel %vm92, %v79, 0
    %v106 = vsel %vm92, %v80, 0
    %v109 = vsel %vm92, %v81, 0
    %v112 = vsel %vm92, %v82, 0
    %v115 = vsel %vm92, %v83, 0
    %117 = vmatprep.subr.mxu0 0.0
    %118 = vmatpush1.msra.mxu0 %v84
    %119 = vmatprep.subr.mxu0 0.0
    %120 = vmatpush1.msra.mxu0 0.0
    %121 = vmatprep.subr.mxu0 0.0
    %122 = vmatpush1.msra.mxu0 0.0
    %123 = vmatprep.subr.mxu0 0.0
    %124 = vmatpush1.msra.mxu0 0.0
    %125 = vmatprep.subr.mxu0 0.0
    %126 = vmatpush1.msra.mxu0 0.0
    %127 = vmatprep.subr.mxu0 0.0
    %128 = vmatpush1.msra.mxu0 0.0
    %129 = vmatprep.subr.mxu0 0.0
    %130 = vmatpush1.msra.mxu0 0.0
    %131 = vmatprep.subr.mxu0 0.0
    %132 = vmatpush1.msra.mxu0 0.0
    %133 = vmatprep.subr.mxu0 0.0
    %134 = vmatpush1.msra.mxu0 0.0
    %135 = vmatprep.subr.mxu0 0.0
    %136 = vmatpush1.msra.mxu0 0.0
    %137 = vmatprep.subr.mxu0 0.0
    %138 = vmatpush1.msra.mxu0 0.0
    %139 = vmatprep.subr.mxu0 0.0
    %140 = vmatpush1.msra.mxu0 0.0
    %141 = vmatprep.subr.mxu0 0.0
    %142 = vmatpush1.msra.mxu0 0.0
    %143 = vmatprep.subr.mxu0 0.0
    %144 = vmatpush1.msra.mxu0 0.0
    %145 = vmatprep.subr.mxu0 0.0
    %146 = vmatpush1.msra.mxu0 0.0
    %147 = vmatprep.subr.mxu0 0.0
    %148 = vmatpush1.msra.mxu0 0.0
    %149 = vmatprep.subr.mxu0 0.0
    %150 = vmatpush1.msra.mxu0 0.0
    %151 = vmatprep.subr.mxu0 0.0
    %152 = vmatpush1.msra.mxu0 0.0
    %153 = vmatprep.subr.mxu0 0.0
    %154 = vmatpush1.msra.mxu0 0.0
    %155 = vmatprep.subr.mxu0 0.0
    %156 = vmatpush1.msra.mxu0 0.0
    %157 = vmatprep.subr.mxu0 0.0
    %158 = vmatpush1.msra.mxu0 0.0
    %159 = vmatprep.subr.mxu0 0.0
    %160 = vmatpush1.msra.mxu0 0.0
    %161 = vmatprep.subr.mxu0 0.0
    %162 = vmatpush1.msra.mxu0 0.0
    %163 = vmatprep.subr.mxu0 0.0
    %164 = vmatpush1.msra.mxu0 0.0
    %165 = vmatprep.subr.mxu0 0.0
    %166 = vmatpush1.msra.mxu0 0.0
    %167 = vmatprep.subr.mxu0 0.0
    %168 = vmatpush1.msra.mxu0 0.0
    %169 = vmatprep.subr.mxu0 0.0
    %170 = vmatpush1.msra.mxu0 0.0
    %171 = vmatprep.subr.mxu0 0.0
    %172 = vmatpush1.msra.mxu0 0.0
    %173 = vmatprep.subr.mxu0 0.0
    %174 = vmatpush1.msra.mxu0 0.0
    %175 = vmatprep.subr.mxu0 0.0
    %176 = vmatpush1.msra.mxu0 0.0
    %177 = vmatprep.subr.mxu0 0.0
    %178 = vmatpush1.msra.mxu0 0.0
    %179 = vmatprep.subr.mxu0 0.0
    %180 = vmatpush1.msra.mxu0 0.0
    %181 = vmatprep.mubr.f32.mxu0 0.0
    %182 = vmatmul.mubr.f32.gmra.mrb[0].mxu0 %v94
    %v183 = vpop.f32.mrb[0].mxu0
    %v184 = vadd.f32 %v90, %v183
    %v185 = vpop.f32.mrb[0].mxu0
    %186 = vmatprep.mubr.f32.mxu0 0.0
    %187 = vmatmul.mubr.f32.gmra.mrb[0].mxu0 %v97
    %v188 = vpop.f32.mrb[0].mxu0
    %v189 = vadd.f32 %v90, %v188
    %v190 = vpop.f32.mrb[0].mxu0
    %191 = vmatprep.mubr.f32.mxu0 0.0
    %192 = vmatmul.mubr.f32.gmra.mrb[0].mxu0 %v100
    %v193 = vpop.f32.mrb[0].mxu0
    %v194 = vadd.f32 %v90, %v193
    %v195 = vpop.f32.mrb[0].mxu0
    %196 = vmatprep.mubr.f32.mxu0 0.0
    %197 = vmatmul.mubr.f32.gmra.mrb[0].mxu0 %v103
    %v198 = vpop.f32.mrb[0].mxu0
    %v199 = vadd.f32 %v90, %v198
    %v200 = vpop.f32.mrb[0].mxu0
    %201 = vmatprep.mubr.f32.mxu0 0.0
    %202 = vmatmul.mubr.f32.gmra.mrb[0].mxu0 %v106
    %v203 = vpop.f32.mrb[0].mxu0
    %v204 = vadd.f32 %v90, %v203
    %v205 = vpop.f32.mrb[0].mxu0
    %206 = vmatprep.mubr.f32.mxu0 0.0
    %207 = vmatmul.mubr.f32.gmra.mrb[0].mxu0 %v109
    %v208 = vpop.f32.mrb[0].mxu0
    %v209 = vadd.f32 %v90, %v208
    %v210 = vpop.f32.mrb[0].mxu0
    %211 = vmatprep.mubr.f32.mxu0 0.0
    %212 = vmatmul.mubr.f32.gmra.mrb[0].mxu0 %v112
    %v213 = vpop.f32.mrb[0].mxu0
    %v214 = vadd.f32 %v90, %v213
    %v215 = vpop.f32.mrb[0].mxu0
    %216 = vmatprep.mubr.f32.mxu0 0.0
    %217 = vmatmul.mubr.f32.gmra.mrb[0].mxu0 %v115
    %v218 = vpop.f32.mrb[0].mxu0
    %v219 = vadd.f32 %v90, %v218
    %v220 = vpop.f32.mrb[0].mxu0
    %221 = vdwg.mxu0
    %222 = vst [vmem:[#allocation2] sm:$0xff] %v184
    %223 = vst [vmem:[#allocation2 + $0x8] sm:$0xff] %v189
    %224 = vst [vmem:[#allocation2 + $0x10] sm:$0xff] %v194
    %225 = vst [vmem:[#allocation2 + $0x18] sm:$0xff] %v199
    %226 = vst [vmem:[#allocation2 + $0x20] sm:$0xff] %v204
    %227 = vst [vmem:[#allocation2 + $0x28] sm:$0xff] %v209
    %228 = vst [vmem:[#allocation2 + $0x30] sm:$0xff] %v214
    %229 = vst [vmem:[#allocation2 + $0x38] sm:$0xff] %v219
    %v230 = vld [vmem:[%s2] sm:$0xff]
    %v231 = vld [vmem:[%s2 + $0x8] sm:$0xff]
    %v232 = vld [vmem:[%s2 + $0x10] sm:$0xff]
    %v233 = vld [vmem:[%s2 + $0x18] sm:$0xff]
    %v234 = vld [vmem:[%s4] sm:$0xff]
    %v235 = vld [vmem:[%s4 + $0x8] sm:$0xff]
    %v236 = vld [vmem:[%s4 + $0x10] sm:$0xff]
    %v237 = vld [vmem:[%s4 + $0x18] sm:$0xff]
    %v238 = vld [vmem:[#allocation6] sm:$0xff]
    %v239 = vld [vmem:[#allocation6 + $0x8] sm:$0xff]
    %v240 = vld [vmem:[#allocation6 + $0x10] sm:$0xff]
    %v241 = vld [vmem:[#allocation6 + $0x18] sm:$0xff]
    %v242 = vld [vmem:[%s6] sm:$0x1]
    %v243 = vld [vmem:[#allocation2] sm:$0xff]
    %vm244 = vcmask 261120
    %v246 = vsel %vm244, 0.0, 0
    %248 = vmatprep.subr.mxu0 0.0
    %249 = vmatpush1.msra.mxu0 %v230
    %250 = vmatprep.subr.mxu0 0.0
    %251 = vmatpush1.msra.mxu0 %v231
    %252 = vmatprep.subr.mxu0 0.0
    %253 = vmatpush1.msra.mxu0 %v232
    %254 = vmatprep.subr.mxu0 0.0
    %255 = vmatpush1.msra.mxu0 %v233
    %256 = vmatprep.subr.mxu0 0.0
    %257 = vmatpush1.msra.mxu0 0.0
    %258 = vmatprep.subr.mxu0 0.0
    %259 = vmatpush1.msra.mxu0 0.0
    %260 = vmatprep.subr.mxu0 0.0
    %261 = vmatpush1.msra.mxu0 0.0
    %262 = vmatprep.subr.mxu0 0.0
    %263 = vmatpush1.msra.mxu0 0.0
    %264 = vmatprep.subr.mxu0 0.0
    %265 = vmatpush1.msra.mxu0 0.0
    %266 = vmatprep.subr.mxu0 0.0
    %267 = vmatpush1.msra.mxu0 0.0
    %268 = vmatprep.subr.mxu0 0.0
    %269 = vmatpush1.msra.mxu0 0.0
    %270 = vmatprep.subr.mxu0 0.0
    %271 = vmatpush1.msra.mxu0 0.0
    %272 = vmatprep.subr.mxu0 0.0
    %273 = vmatpush1.msra.mxu0 0.0
    %274 = vmatprep.subr.mxu0 0.0
    %275 = vmatpush1.msra.mxu0 0.0
    %276 = vmatprep.subr.mxu0 0.0
    %277 = vmatpush1.msra.mxu0 0.0
    %278 = vmatprep.subr.mxu0 0.0
    %279 = vmatpush1.msra.mxu0 0.0
    %280 = vmatprep.subr.mxu0 0.0
    %281 = vmatpush1.msra.mxu0 0.0
    %282 = vmatprep.subr.mxu0 0.0
    %283 = vmatpush1.msra.mxu0 0.0
    %284 = vmatprep.subr.mxu0 0.0
    %285 = vmatpush1.msra.mxu0 0.0
    %286 = vmatprep.subr.mxu0 0.0
    %287 = vmatpush1.msra.mxu0 0.0
    %288 = vmatprep.subr.mxu0 0.0
    %289 = vmatpush1.msra.mxu0 0.0
    %290 = vmatprep.subr.mxu0 0.0
    %291 = vmatpush1.msra.mxu0 0.0
    %292 = vmatprep.subr.mxu0 0.0
    %293 = vmatpush1.msra.mxu0 0.0
    %294 = vmatprep.subr.mxu0 0.0
    %295 = vmatpush1.msra.mxu0 0.0
    %296 = vmatprep.subr.mxu0 0.0
    %297 = vmatpush1.msra.mxu0 0.0
    %298 = vmatprep.subr.mxu0 0.0
    %299 = vmatpush1.msra.mxu0 0.0
    %300 = vmatprep.subr.mxu0 0.0
    %301 = vmatpush1.msra.mxu0 0.0
    %302 = vmatprep.subr.mxu0 0.0
    %303 = vmatpush1.msra.mxu0 0.0
    %304 = vmatprep.subr.mxu0 0.0
    %305 = vmatpush1.msra.mxu0 0.0
    %306 = vmatprep.subr.mxu0 0.0
    %307 = vmatpush1.msra.mxu0 0.0
    %308 = vmatprep.subr.mxu0 0.0
    %309 = vmatpush1.msra.mxu0 0.0
    %310 = vmatprep.subr.mxu0 0.0
    %311 = vmatpush1.msra.mxu0 0.0
    %312 = vmatprep.mubr.f32.mxu0 0.0
    %313 = vmatmul.mubr.f32.gmra.mrb[0].mxu0 %v246
    %v314 = vpop.f32.mrb[0].mxu0
    %v315 = vadd.f32 0.0, %v314
    %v316 = vpop.f32.mrb[0].mxu0
    %317 = vdwg.mxu0
    %v318 = vadd.f32 %v243, %v315
    %v319 = vxor.u32 %v318, 2147483648
    %v320 = vmul.f32 %v319, 1.442695
    %v321 = vpow.pop %v320
    %v322 = vadd.f32 %v321, 1.0
    %v323 = vrcp.pop %v322
    %v324 = vmul.f32 1.0, %v323
    %v325 = vmul.f32 %v324, 2.0
    %v326 = vsub.f32 %v325, 1.0
    %v327 = vmul.f32 %v324, 0.0
    %329 = vrot.lane.b32.xlu0 %v326, 64
    %v330 = vpop.permute.xlu0 %329
    %v332 = vmul.f32 %v324, %v330
    %334 = vrot.lane.b32.xlu0 %v332, 32
    %v335 = vpop.permute.xlu0 %334
    %v337 = vadd.f32 %v327, %v335
    %v338 = vtanh.pop %v337
    %340 = vrot.lane.b32.xlu0 %v338, 64
    %v341 = vpop.permute.xlu0 %340
    %v343 = vmul.f32 %v324, %v341
    %344 = vmatprep.subr.mxu0 0.0
    %345 = vmatpush1.msra.mxu0 %v238
    %346 = vmatprep.subr.mxu0 0.0
    %347 = vmatpush1.msra.mxu0 %v239
    %348 = vmatprep.subr.mxu0 0.0
    %349 = vmatpush1.msra.mxu0 %v240
    %350 = vmatprep.subr.mxu0 0.0
    %351 = vmatpush1.msra.mxu0 %v241
    %352 = vmatprep.subr.mxu0 0.0
    %353 = vmatpush1.msra.mxu0 0.0
    %354 = vmatprep.subr.mxu0 0.0
    %355 = vmatpush1.msra.mxu0 0.0
    %356 = vmatprep.subr.mxu0 0.0
    %357 = vmatpush1.msra.mxu0 0.0
    %358 = vmatprep.subr.mxu0 0.0
    %359 = vmatpush1.msra.mxu0 0.0
    %360 = vmatprep.subr.mxu0 0.0
    %361 = vmatpush1.msra.mxu0 0.0
    %362 = vmatprep.subr.mxu0 0.0
    %363 = vmatpush1.msra.mxu0 0.0
    %364 = vmatprep.subr.mxu0 0.0
    %365 = vmatpush1.msra.mxu0 0.0
    %366 = vmatprep.subr.mxu0 0.0
    %367 = vmatpush1.msra.mxu0 0.0
    %368 = vmatprep.subr.mxu0 0.0
    %369 = vmatpush1.msra.mxu0 0.0
    %370 = vmatprep.subr.mxu0 0.0
    %371 = vmatpush1.msra.mxu0 0.0
    %372 = vmatprep.subr.mxu0 0.0
    %373 = vmatpush1.msra.mxu0 0.0
    %374 = vmatprep.subr.mxu0 0.0
    %375 = vmatpush1.msra.mxu0 0.0
    %376 = vmatprep.subr.mxu0 0.0
    %377 = vmatpush1.msra.mxu0 0.0
    %378 = vmatprep.subr.mxu0 0.0
    %379 = vmatpush1.msra.mxu0 0.0
    %380 = vmatprep.subr.mxu0 0.0
    %381 = vmatpush1.msra.mxu0 0.0
    %382 = vmatprep.subr.mxu0 0.0
    %383 = vmatpush1.msra.mxu0 0.0
    %384 = vmatprep.subr.mxu0 0.0
    %385 = vmatpush1.msra.mxu0 0.0
    %386 = vmatprep.subr.mxu0 0.0
    %387 = vmatpush1.msra.mxu0 0.0
    %388 = vmatprep.subr.mxu0 0.0
    %389 = vmatpush1.msra.mxu0 0.0
    %390 = vmatprep.subr.mxu0 0.0
    %391 = vmatpush1.msra.mxu0 0.0
    %392 = vmatprep.subr.mxu0 0.0
    %393 = vmatpush1.msra.mxu0 0.0
    %394 = vmatprep.subr.mxu0 0.0
    %395 = vmatpush1.msra.mxu0 0.0
    %396 = vmatprep.subr.mxu0 0.0
    %397 = vmatpush1.msra.mxu0 0.0
    %398 = vmatprep.subr.mxu0 0.0
    %399 = vmatpush1.msra.mxu0 0.0
    %400 = vmatprep.subr.mxu0 0.0
    %401 = vmatpush1.msra.mxu0 0.0
    %402 = vmatprep.subr.mxu0 0.0
    %403 = vmatpush1.msra.mxu0 0.0
    %404 = vmatprep.subr.mxu0 0.0
    %405 = vmatpush1.msra.mxu0 0.0
    %406 = vmatprep.subr.mxu0 0.0
    %407 = vmatpush1.msra.mxu0 0.0
    %408 = vmatprep.mubr.f32.mxu0 0.0
    %409 = vmatmul.mubr.f32.gmra.mrb[0].mxu0 %v246
    %v410 = vpop.f32.mrb[0].mxu0
    %v411 = vadd.f32 0.0, %v410
    %v412 = vpop.f32.mrb[0].mxu0
    %413 = vdwg.mxu0
    %415 = vrot.lane.b32.xlu0 %v343, 32
    %v416 = vpop.permute.xlu0 %415
    %v417 = vsel %vm244, %v416, 0
    %419 = vmatprep.subr.mxu0 0.0
    %420 = vmatpush1.msra.mxu0 %v234
    %421 = vmatprep.subr.mxu0 0.0
    %422 = vmatpush1.msra.mxu0 %v235
    %423 = vmatprep.subr.mxu0 0.0
    %424 = vmatpush1.msra.mxu0 %v236
    %425 = vmatprep.subr.mxu0 0.0
    %426 = vmatpush1.msra.mxu0 %v237
    %427 = vmatprep.subr.mxu0 0.0
    %428 = vmatpush1.msra.mxu0 0.0
    %429 = vmatprep.subr.mxu0 0.0
    %430 = vmatpush1.msra.mxu0 0.0
    %431 = vmatprep.subr.mxu0 0.0
    %432 = vmatpush1.msra.mxu0 0.0
    %433 = vmatprep.subr.mxu0 0.0
    %434 = vmatpush1.msra.mxu0 0.0
    %435 = vmatprep.subr.mxu0 0.0
    %436 = vmatpush1.msra.mxu0 0.0
    %437 = vmatprep.subr.mxu0 0.0
    %438 = vmatpush1.msra.mxu0 0.0
    %439 = vmatprep.subr.mxu0 0.0
    %440 = vmatpush1.msra.mxu0 0.0
    %441 = vmatprep.subr.mxu0 0.0
    %442 = vmatpush1.msra.mxu0 0.0
    %443 = vmatprep.subr.mxu0 0.0
    %444 = vmatpush1.msra.mxu0 0.0
    %445 = vmatprep.subr.mxu0 0.0
    %446 = vmatpush1.msra.mxu0 0.0
    %447 = vmatprep.subr.mxu0 0.0
    %448 = vmatpush1.msra.mxu0 0.0
    %449 = vmatprep.subr.mxu0 0.0
    %450 = vmatpush1.msra.mxu0 0.0
    %451 = vmatprep.subr.mxu0 0.0
    %452 = vmatpush1.msra.mxu0 0.0
    %453 = vmatprep.subr.mxu0 0.0
    %454 = vmatpush1.msra.mxu0 0.0
    %455 = vmatprep.subr.mxu0 0.0
    %456 = vmatpush1.msra.mxu0 0.0
    %457 = vmatprep.subr.mxu0 0.0
    %458 = vmatpush1.msra.mxu0 0.0
    %459 = vmatprep.subr.mxu0 0.0
    %460 = vmatpush1.msra.mxu0 0.0
    %461 = vmatprep.subr.mxu0 0.0
    %462 = vmatpush1.msra.mxu0 0.0
    %463 = vmatprep.subr.mxu0 0.0
    %464 = vmatpush1.msra.mxu0 0.0
    %465 = vmatprep.subr.mxu0 0.0
    %466 = vmatpush1.msra.mxu0 0.0
    %467 = vmatprep.subr.mxu0 0.0
    %468 = vmatpush1.msra.mxu0 0.0
    %469 = vmatprep.subr.mxu0 0.0
    %470 = vmatpush1.msra.mxu0 0.0
    %471 = vmatprep.subr.mxu0 0.0
    %472 = vmatpush1.msra.mxu0 0.0
    %473 = vmatprep.subr.mxu0 0.0
    %474 = vmatpush1.msra.mxu0 0.0
    %475 = vmatprep.subr.mxu0 0.0
    %476 = vmatpush1.msra.mxu0 0.0
    %477 = vmatprep.subr.mxu0 0.0
    %478 = vmatpush1.msra.mxu0 0.0
    %479 = vmatprep.subr.mxu0 0.0
    %480 = vmatpush1.msra.mxu0 0.0
    %481 = vmatprep.subr.mxu0 0.0
    %482 = vmatpush1.msra.mxu0 0.0
    %483 = vmatprep.mubr.f32.mxu0 0.0
    %484 = vmatmul.mubr.f32.gmra.mrb[0].mxu0 %v417
    %v485 = vpop.f32.mrb[0].mxu0
    %v486 = vadd.f32 %v411, %v485
    %v487 = vpop.f32.mrb[0].mxu0
    %488 = vdwg.mxu0
    %v490 = vlaneseq
    %v491 = vshrl.u32 %v490, 7
    %v492 = vsub.s32 0, %v491
    %v493 = vrot.slane %v242, %v492
    %v495 = vadd.f32 %v486, %v493
    %v496 = vxor.u32 %v495, 2147483648
    %v497 = vmul.f32 %v496, 1.442695
    %v498 = vpow.pop %v497
    %v499 = vadd.f32 %v498, 1.0
    %v500 = vrcp.pop %v499
    %v501 = vmul.f32 1.0, %v500
    %v502 = vmul.f32 %v501, 2.0
    %v503 = vsub.f32 %v502, 1.0
    %v504 = vmul.f32 %v501, 0.0
    %506 = vrot.lane.b32.xlu0 %v503, 64
    %v507 = vpop.permute.xlu0 %506
    %v509 = vmul.f32 %v501, %v507
    %511 = vrot.lane.b32.xlu0 %v509, 32
    %v512 = vpop.permute.xlu0 %511
    %v514 = vadd.f32 %v504, %v512
    %v515 = vtanh.pop %v514
    %517 = vrot.lane.b32.xlu0 %v515, 64
    %v518 = vpop.permute.xlu0 %517
    %v520 = vmul.f32 %v501, %v518
    %s521 = scalar_lea.vmem [#allocation2], 8
    %v522 = vld [vmem:[%s521] sm:$0xff]
    %523 = vmatprep.subr.mxu0 0.0
    %524 = vmatpush1.msra.mxu0 %v230
    %525 = vmatprep.subr.mxu0 0.0
    %526 = vmatpush1.msra.mxu0 %v231
    %527 = vmatprep.subr.mxu0 0.0
    %528 = vmatpush1.msra.mxu0 %v232
    %529 = vmatprep.subr.mxu0 0.0
    %530 = vmatpush1.msra.mxu0 %v233
    %531 = vmatprep.subr.mxu0 0.0
    %532 = vmatpush1.msra.mxu0 0.0
    %533 = vmatprep.subr.mxu0 0.0
    %534 = vmatpush1.msra.mxu0 0.0
    %535 = vmatprep.subr.mxu0 0.0
    %536 = vmatpush1.msra.mxu0 0.0
    %537 = vmatprep.subr.mxu0 0.0
    %538 = vmatpush1.msra.mxu0 0.0
    %539 = vmatprep.subr.mxu0 0.0
    %540 = vmatpush1.msra.mxu0 0.0
    %541 = vmatprep.subr.mxu0 0.0
    %542 = vmatpush1.msra.mxu0 0.0
    %543 = vmatprep.subr.mxu0 0.0
    %544 = vmatpush1.msra.mxu0 0.0
    %545 = vmatprep.subr.mxu0 0.0
    %546 = vmatpush1.msra.mxu0 0.0
    %547 = vmatprep.subr.mxu0 0.0
    %548 = vmatpush1.msra.mxu0 0.0
    %549 = vmatprep.subr.mxu0 0.0
    %550 = vmatpush1.msra.mxu0 0.0
    %551 = vmatprep.subr.mxu0 0.0
    %552 = vmatpush1.msra.mxu0 0.0
    %553 = vmatprep.subr.mxu0 0.0
    %554 = vmatpush1.msra.mxu0 0.0
    %555 = vmatprep.subr.mxu0 0.0
    %556 = vmatpush1.msra.mxu0 0.0
    %557 = vmatprep.subr.mxu0 0.0
    %558 = vmatpush1.msra.mxu0 0.0
    %559 = vmatprep.subr.mxu0 0.0
    %560 = vmatpush1.msra.mxu0 0.0
    %561 = vmatprep.subr.mxu0 0.0
    %562 = vmatpush1.msra.mxu0 0.0
    %563 = vmatprep.subr.mxu0 0.0
    %564 = vmatpush1.msra.mxu0 0.0
    %565 = vmatprep.subr.mxu0 0.0
    %566 = vmatpush1.msra.mxu0 0.0
    %567 = vmatprep.subr.mxu0 0.0
    %568 = vmatpush1.msra.mxu0 0.0
    %569 = vmatprep.subr.mxu0 0.0
    %570 = vmatpush1.msra.mxu0 0.0
    %571 = vmatprep.subr.mxu0 0.0
    %572 = vmatpush1.msra.mxu0 0.0
    %573 = vmatprep.subr.mxu0 0.0
    %574 = vmatpush1.msra.mxu0 0.0
    %575 = vmatprep.subr.mxu0 0.0
    %576 = vmatpush1.msra.mxu0 0.0
    %577 = vmatprep.subr.mxu0 0.0
    %578 = vmatpush1.msra.mxu0 0.0
    %579 = vmatprep.subr.mxu0 0.0
    %580 = vmatpush1.msra.mxu0 0.0
    %581 = vmatprep.subr.mxu0 0.0
    %582 = vmatpush1.msra.mxu0 0.0
    %583 = vmatprep.subr.mxu0 0.0
    %584 = vmatpush1.msra.mxu0 0.0
    %585 = vmatprep.subr.mxu0 0.0
    %586 = vmatpush1.msra.mxu0 0.0
    %587 = vmatprep.mubr.f32.mxu0 0.0
    %588 = vmatmul.mubr.f32.gmra.mrb[0].mxu0 %v417
    %v589 = vpop.f32.mrb[0].mxu0
    %v590 = vadd.f32 0.0, %v589
    %v591 = vpop.f32.mrb[0].mxu0
    %592 = vdwg.mxu0
    %v593 = vadd.f32 %v522, %v590
    %v594 = vxor.u32 %v593, 2147483648
    %v595 = vmul.f32 %v594, 1.442695
    %v596 = vpow.pop %v595
    %v597 = vadd.f32 %v596, 1.0
    %v598 = vrcp.pop %v597
    %v599 = vmul.f32 1.0, %v598
    %v600 = vmul.f32 %v599, 2.0
    %v601 = vsub.f32 %v600, 1.0
    %v602 = vmul.f32 %v599, %v337
    %604 = vrot.lane.b32.xlu0 %v601, 64
    %v605 = vpop.permute.xlu0 %604
    %v607 = vmul.f32 %v599, %v605
    %609 = vrot.lane.b32.xlu0 %v607, 32
    %v610 = vpop.permute.xlu0 %609
    %v612 = vadd.f32 %v602, %v610
    %v613 = vtanh.pop %v612
    %615 = vrot.lane.b32.xlu0 %v613, 64
    %v616 = vpop.permute.xlu0 %615
    %v618 = vmul.f32 %v599, %v616
    %620 = vrot.lane.b32.xlu0 %v520, 32
    %v621 = vpop.permute.xlu0 %620
    %v622 = vsel %vm244, %v621, 0
    %624 = vmatprep.subr.mxu0 0.0
    %625 = vmatpush1.msra.mxu0 %v238
    %626 = vmatprep.subr.mxu0 0.0
    %627 = vmatpush1.msra.mxu0 %v239
    %628 = vmatprep.subr.mxu0 0.0
    %629 = vmatpush1.msra.mxu0 %v240
    %630 = vmatprep.subr.mxu0 0.0
    %631 = vmatpush1.msra.mxu0 %v241
    %632 = vmatprep.subr.mxu0 0.0
    %633 = vmatpush1.msra.mxu0 0.0
    %634 = vmatprep.subr.mxu0 0.0
    %635 = vmatpush1.msra.mxu0 0.0
    %636 = vmatprep.subr.mxu0 0.0
    %637 = vmatpush1.msra.mxu0 0.0
    %638 = vmatprep.subr.mxu0 0.0
    %639 = vmatpush1.msra.mxu0 0.0
    %640 = vmatprep.subr.mxu0 0.0
    %641 = vmatpush1.msra.mxu0 0.0
    %642 = vmatprep.subr.mxu0 0.0
    %643 = vmatpush1.msra.mxu0 0.0
    %644 = vmatprep.subr.mxu0 0.0
    %645 = vmatpush1.msra.mxu0 0.0
    %646 = vmatprep.subr.mxu0 0.0
    %647 = vmatpush1.msra.mxu0 0.0
    %648 = vmatprep.subr.mxu0 0.0
    %649 = vmatpush1.msra.mxu0 0.0
    %650 = vmatprep.subr.mxu0 0.0
    %651 = vmatpush1.msra.mxu0 0.0
    %652 = vmatprep.subr.mxu0 0.0
    %653 = vmatpush1.msra.mxu0 0.0
    %654 = vmatprep.subr.mxu0 0.0
    %655 = vmatpush1.msra.mxu0 0.0
    %656 = vmatprep.subr.mxu0 0.0
    %657 = vmatpush1.msra.mxu0 0.0
    %658 = vmatprep.subr.mxu0 0.0
    %659 = vmatpush1.msra.mxu0 0.0
    %660 = vmatprep.subr.mxu0 0.0
    %661 = vmatpush1.msra.mxu0 0.0
    %662 = vmatprep.subr.mxu0 0.0
    %663 = vmatpush1.msra.mxu0 0.0
    %664 = vmatprep.subr.mxu0 0.0
    %665 = vmatpush1.msra.mxu0 0.0
    %666 = vmatprep.subr.mxu0 0.0
    %667 = vmatpush1.msra.mxu0 0.0
    %668 = vmatprep.subr.mxu0 0.0
    %669 = vmatpush1.msra.mxu0 0.0
    %670 = vmatprep.subr.mxu0 0.0
    %671 = vmatpush1.msra.mxu0 0.0
    %672 = vmatprep.subr.mxu0 0.0
    %673 = vmatpush1.msra.mxu0 0.0
    %674 = vmatprep.subr.mxu0 0.0
    %675 = vmatpush1.msra.mxu0 0.0
    %676 = vmatprep.subr.mxu0 0.0
    %677 = vmatpush1.msra.mxu0 0.0
    %678 = vmatprep.subr.mxu0 0.0
    %679 = vmatpush1.msra.mxu0 0.0
    %680 = vmatprep.subr.mxu0 0.0
    %681 = vmatpush1.msra.mxu0 0.0
    %682 = vmatprep.subr.mxu0 0.0
    %683 = vmatpush1.msra.mxu0 0.0
    %684 = vmatprep.subr.mxu0 0.0
    %685 = vmatpush1.msra.mxu0 0.0
    %686 = vmatprep.subr.mxu0 0.0
    %687 = vmatpush1.msra.mxu0 0.0
    %688 = vmatprep.mubr.f32.mxu0 0.0
    %689 = vmatmul.mubr.f32.gmra.mrb[0].mxu0 %v622
    %v690 = vpop.f32.mrb[0].mxu0
    %v691 = vadd.f32 0.0, %v690
    %v692 = vpop.f32.mrb[0].mxu0
    %693 = vdwg.mxu0
    %695 = vrot.lane.b32.xlu0 %v618, 32
    %v696 = vpop.permute.xlu0 %695
    %v697 = vsel %vm244, %v696, 0
    %699 = vmatprep.subr.mxu0 0.0
    %700 = vmatpush1.msra.mxu0 %v234
    %701 = vmatprep.subr.mxu0 0.0
    %702 = vmatpush1.msra.mxu0 %v235
    %703 = vmatprep.subr.mxu0 0.0
    %704 = vmatpush1.msra.mxu0 %v236
    %705 = vmatprep.subr.mxu0 0.0
    %706 = vmatpush1.msra.mxu0 %v237
    %707 = vmatprep.subr.mxu0 0.0
    %708 = vmatpush1.msra.mxu0 0.0
    %709 = vmatprep.subr.mxu0 0.0
    %710 = vmatpush1.msra.mxu0 0.0
    %711 = vmatprep.subr.mxu0 0.0
    %712 = vmatpush1.msra.mxu0 0.0
    %713 = vmatprep.subr.mxu0 0.0
    %714 = vmatpush1.msra.mxu0 0.0
    %715 = vmatprep.subr.mxu0 0.0
    %716 = vmatpush1.msra.mxu0 0.0
    %717 = vmatprep.subr.mxu0 0.0
    %718 = vmatpush1.msra.mxu0 0.0
    %719 = vmatprep.subr.mxu0 0.0
    %720 = vmatpush1.msra.mxu0 0.0
    %721 = vmatprep.subr.mxu0 0.0
    %722 = vmatpush1.msra.mxu0 0.0
    %723 = vmatprep.subr.mxu0 0.0
    %724 = vmatpush1.msra.mxu0 0.0
    %725 = vmatprep.subr.mxu0 0.0
    %726 = vmatpush1.msra.mxu0 0.0
    %727 = vmatprep.subr.mxu0 0.0
    %728 = vmatpush1.msra.mxu0 0.0
    %729 = vmatprep.subr.mxu0 0.0
    %730 = vmatpush1.msra.mxu0 0.0
    %731 = vmatprep.subr.mxu0 0.0
    %732 = vmatpush1.msra.mxu0 0.0
    %733 = vmatprep.subr.mxu0 0.0
    %734 = vmatpush1.msra.mxu0 0.0
    %735 = vmatprep.subr.mxu0 0.0
    %736 = vmatpush1.msra.mxu0 0.0
    %737 = vmatprep.subr.mxu0 0.0
    %738 = vmatpush1.msra.mxu0 0.0
    %739 = vmatprep.subr.mxu0 0.0
    %740 = vmatpush1.msra.mxu0 0.0
    %741 = vmatprep.subr.mxu0 0.0
    %742 = vmatpush1.msra.mxu0 0.0
    %743 = vmatprep.subr.mxu0 0.0
    %744 = vmatpush1.msra.mxu0 0.0
    %745 = vmatprep.subr.mxu0 0.0
    %746 = vmatpush1.msra.mxu0 0.0
    %747 = vmatprep.subr.mxu0 0.0
    %748 = vmatpush1.msra.mxu0 0.0
    %749 = vmatprep.subr.mxu0 0.0
    %750 = vmatpush1.msra.mxu0 0.0
    %751 = vmatprep.subr.mxu0 0.0
    %752 = vmatpush1.msra.mxu0 0.0
    %753 = vmatprep.subr.mxu0 0.0
    %754 = vmatpush1.msra.mxu0 0.0
    %755 = vmatprep.subr.mxu0 0.0
    %756 = vmatpush1.msra.mxu0 0.0
    %757 = vmatprep.subr.mxu0 0.0
    %758 = vmatpush1.msra.mxu0 0.0
    %759 = vmatprep.subr.mxu0 0.0
    %760 = vmatpush1.msra.mxu0 0.0
    %761 = vmatprep.subr.mxu0 0.0
    %762 = vmatpush1.msra.mxu0 0.0
    %763 = vmatprep.mubr.f32.mxu0 0.0
    %764 = vmatmul.mubr.f32.gmra.mrb[0].mxu0 %v697
    %v765 = vpop.f32.mrb[0].mxu0
    %v766 = vadd.f32 %v691, %v765
    %v767 = vpop.f32.mrb[0].mxu0
    %768 = vdwg.mxu0
    %v769 = vadd.f32 %v766, %v493
    %v770 = vxor.u32 %v769, 2147483648
    %v771 = vmul.f32 %v770, 1.442695
    %v772 = vpow.pop %v771
    %v773 = vadd.f32 %v772, 1.0
    %v774 = vrcp.pop %v773
    %v775 = vmul.f32 1.0, %v774
    %v776 = vmul.f32 %v775, 2.0
    %v777 = vsub.f32 %v776, 1.0
    %v778 = vmul.f32 %v775, %v514
    %780 = vrot.lane.b32.xlu0 %v777, 64
    %v781 = vpop.permute.xlu0 %780
    %v783 = vmul.f32 %v775, %v781
    %785 = vrot.lane.b32.xlu0 %v783, 32
    %v786 = vpop.permute.xlu0 %785
    %v788 = vadd.f32 %v778, %v786
    %v789 = vtanh.pop %v788
    %791 = vrot.lane.b32.xlu0 %v789, 64
    %v792 = vpop.permute.xlu0 %791
    %v794 = vmul.f32 %v775, %v792
    %s795 = scalar_lea.vmem [#allocation2], 16
    %v796 = vld [vmem:[%s795] sm:$0xff]
    %797 = vmatprep.subr.mxu0 0.0
    %798 = vmatpush1.msra.mxu0 %v230
    %799 = vmatprep.subr.mxu0 0.0
    %800 = vmatpush1.msra.mxu0 %v231
    %801 = vmatprep.subr.mxu0 0.0
    %802 = vmatpush1.msra.mxu0 %v232
    %803 = vmatprep.subr.mxu0 0.0
    %804 = vmatpush1.msra.mxu0 %v233
    %805 = vmatprep.subr.mxu0 0.0
    %806 = vmatpush1.msra.mxu0 0.0
    %807 = vmatprep.subr.mxu0 0.0
    %808 = vmatpush1.msra.mxu0 0.0
    %809 = vmatprep.subr.mxu0 0.0
    %810 = vmatpush1.msra.mxu0 0.0
    %811 = vmatprep.subr.mxu0 0.0
    %812 = vmatpush1.msra.mxu0 0.0
    %813 = vmatprep.subr.mxu0 0.0
    %814 = vmatpush1.msra.mxu0 0.0
    %815 = vmatprep.subr.mxu0 0.0
    %816 = vmatpush1.msra.mxu0 0.0
    %817 = vmatprep.subr.mxu0 0.0
    %818 = vmatpush1.msra.mxu0 0.0
    %819 = vmatprep.subr.mxu0 0.0
    %820 = vmatpush1.msra.mxu0 0.0
    %821 = vmatprep.subr.mxu0 0.0
    %822 = vmatpush1.msra.mxu0 0.0
    %823 = vmatprep.subr.mxu0 0.0
    %824 = vmatpush1.msra.mxu0 0.0
    %825 = vmatprep.subr.mxu0 0.0
    %826 = vmatpush1.msra.mxu0 0.0
    %827 = vmatprep.subr.mxu0 0.0
    %828 = vmatpush1.msra.mxu0 0.0
    %829 = vmatprep.subr.mxu0 0.0
    %830 = vmatpush1.msra.mxu0 0.0
    %831 = vmatprep.subr.mxu0 0.0
    %832 = vmatpush1.msra.mxu0 0.0
    %833 = vmatprep.subr.mxu0 0.0
    %834 = vmatpush1.msra.mxu0 0.0
    %835 = vmatprep.subr.mxu0 0.0
    %836 = vmatpush1.msra.mxu0 0.0
    %837 = vmatprep.subr.mxu0 0.0
    %838 = vmatpush1.msra.mxu0 0.0
    %839 = vmatprep.subr.mxu0 0.0
    %840 = vmatpush1.msra.mxu0 0.0
    %841 = vmatprep.subr.mxu0 0.0
    %842 = vmatpush1.msra.mxu0 0.0
    %843 = vmatprep.subr.mxu0 0.0
    %844 = vmatpush1.msra.mxu0 0.0
    %845 = vmatprep.subr.mxu0 0.0
    %846 = vmatpush1.msra.mxu0 0.0
    %847 = vmatprep.subr.mxu0 0.0
    %848 = vmatpush1.msra.mxu0 0.0
    %849 = vmatprep.subr.mxu0 0.0
    %850 = vmatpush1.msra.mxu0 0.0
    %851 = vmatprep.subr.mxu0 0.0
    %852 = vmatpush1.msra.mxu0 0.0
    %853 = vmatprep.subr.mxu0 0.0
    %854 = vmatpush1.msra.mxu0 0.0
    %855 = vmatprep.subr.mxu0 0.0
    %856 = vmatpush1.msra.mxu0 0.0
    %857 = vmatprep.subr.mxu0 0.0
    %858 = vmatpush1.msra.mxu0 0.0
    %859 = vmatprep.subr.mxu0 0.0
    %860 = vmatpush1.msra.mxu0 0.0
    %861 = vmatprep.mubr.f32.mxu0 0.0
    %862 = vmatmul.mubr.f32.gmra.mrb[0].mxu0 %v697
    %v863 = vpop.f32.mrb[0].mxu0
    %v864 = vadd.f32 0.0, %v863
    %v865 = vpop.f32.mrb[0].mxu0
    %866 = vdwg.mxu0
    %v867 = vadd.f32 %v796, %v864
    %v868 = vxor.u32 %v867, 2147483648
    %v869 = vmul.f32 %v868, 1.442695
    %v870 = vpow.pop %v869
    %v871 = vadd.f32 %v870, 1.0
    %v872 = vrcp.pop %v871
    %v873 = vmul.f32 1.0, %v872
    %v874 = vmul.f32 %v873, 2.0
    %v875 = vsub.f32 %v874, 1.0
    %v876 = vmul.f32 %v873, %v612
    %878 = vrot.lane.b32.xlu0 %v875, 64
    %v879 = vpop.permute.xlu0 %878
    %v881 = vmul.f32 %v873, %v879
    %883 = vrot.lane.b32.xlu0 %v881, 32
    %v884 = vpop.permute.xlu0 %883
    %v886 = vadd.f32 %v876, %v884
    %v887 = vtanh.pop %v886
    %889 = vrot.lane.b32.xlu0 %v887, 64
    %v890 = vpop.permute.xlu0 %889
    %v892 = vmul.f32 %v873, %v890
    %894 = vrot.lane.b32.xlu0 %v794, 32
    %v895 = vpop.permute.xlu0 %894
    %v896 = vsel %vm244, %v895, 0
    %898 = vmatprep.subr.mxu0 0.0
    %899 = vmatpush1.msra.mxu0 %v238
    %900 = vmatprep.subr.mxu0 0.0
    %901 = vmatpush1.msra.mxu0 %v239
    %902 = vmatprep.subr.mxu0 0.0
    %903 = vmatpush1.msra.mxu0 %v240
    %904 = vmatprep.subr.mxu0 0.0
    %905 = vmatpush1.msra.mxu0 %v241
    %906 = vmatprep.subr.mxu0 0.0
    %907 = vmatpush1.msra.mxu0 0.0
    %908 = vmatprep.subr.mxu0 0.0
    %909 = vmatpush1.msra.mxu0 0.0
    %910 = vmatprep.subr.mxu0 0.0
    %911 = vmatpush1.msra.mxu0 0.0
    %912 = vmatprep.subr.mxu0 0.0
    %913 = vmatpush1.msra.mxu0 0.0
    %914 = vmatprep.subr.mxu0 0.0
    %915 = vmatpush1.msra.mxu0 0.0
    %916 = vmatprep.subr.mxu0 0.0
    %917 = vmatpush1.msra.mxu0 0.0
    %918 = vmatprep.subr.mxu0 0.0
    %919 = vmatpush1.msra.mxu0 0.0
    %920 = vmatprep.subr.mxu0 0.0
    %921 = vmatpush1.msra.mxu0 0.0
    %922 = vmatprep.subr.mxu0 0.0
    %923 = vmatpush1.msra.mxu0 0.0
    %924 = vmatprep.subr.mxu0 0.0
    %925 = vmatpush1.msra.mxu0 0.0
    %926 = vmatprep.subr.mxu0 0.0
    %927 = vmatpush1.msra.mxu0 0.0
    %928 = vmatprep.subr.mxu0 0.0
    %929 = vmatpush1.msra.mxu0 0.0
    %930 = vmatprep.subr.mxu0 0.0
    %931 = vmatpush1.msra.mxu0 0.0
    %932 = vmatprep.subr.mxu0 0.0
    %933 = vmatpush1.msra.mxu0 0.0
    %934 = vmatprep.subr.mxu0 0.0
    %935 = vmatpush1.msra.mxu0 0.0
    %936 = vmatprep.subr.mxu0 0.0
    %937 = vmatpush1.msra.mxu0 0.0
    %938 = vmatprep.subr.mxu0 0.0
    %939 = vmatpush1.msra.mxu0 0.0
    %940 = vmatprep.subr.mxu0 0.0
    %941 = vmatpush1.msra.mxu0 0.0
    %942 = vmatprep.subr.mxu0 0.0
    %943 = vmatpush1.msra.mxu0 0.0
    %944 = vmatprep.subr.mxu0 0.0
    %945 = vmatpush1.msra.mxu0 0.0
    %946 = vmatprep.subr.mxu0 0.0
    %947 = vmatpush1.msra.mxu0 0.0
    %948 = vmatprep.subr.mxu0 0.0
    %949 = vmatpush1.msra.mxu0 0.0
    %950 = vmatprep.subr.mxu0 0.0
    %951 = vmatpush1.msra.mxu0 0.0
    %952 = vmatprep.subr.mxu0 0.0
    %953 = vmatpush1.msra.mxu0 0.0
    %954 = vmatprep.subr.mxu0 0.0
    %955 = vmatpush1.msra.mxu0 0.0
    %956 = vmatprep.subr.mxu0 0.0
    %957 = vmatpush1.msra.mxu0 0.0
    %958 = vmatprep.subr.mxu0 0.0
    %959 = vmatpush1.msra.mxu0 0.0
    %960 = vmatprep.subr.mxu0 0.0
    %961 = vmatpush1.msra.mxu0 0.0
    %962 = vmatprep.mubr.f32.mxu0 0.0
    %963 = vmatmul.mubr.f32.gmra.mrb[0].mxu0 %v896
    %v964 = vpop.f32.mrb[0].mxu0
    %v965 = vadd.f32 0.0, %v964
    %v966 = vpop.f32.mrb[0].mxu0
    %967 = vdwg.mxu0
    %969 = vrot.lane.b32.xlu0 %v892, 32
    %v970 = vpop.permute.xlu0 %969
    %v971 = vsel %vm244, %v970, 0
    %973 = vmatprep.subr.mxu0 0.0
    %974 = vmatpush1.msra.mxu0 %v234
    %975 = vmatprep.subr.mxu0 0.0
    %976 = vmatpush1.msra.mxu0 %v235
    %977 = vmatprep.subr.mxu0 0.0
    %978 = vmatpush1.msra.mxu0 %v236
    %979 = vmatprep.subr.mxu0 0.0
    %980 = vmatpush1.msra.mxu0 %v237
    %981 = vmatprep.subr.mxu0 0.0
    %982 = vmatpush1.msra.mxu0 0.0
    %983 = vmatprep.subr.mxu0 0.0
    %984 = vmatpush1.msra.mxu0 0.0
    %985 = vmatprep.subr.mxu0 0.0
    %986 = vmatpush1.msra.mxu0 0.0
    %987 = vmatprep.subr.mxu0 0.0
    %988 = vmatpush1.msra.mxu0 0.0
    %989 = vmatprep.subr.mxu0 0.0
    %990 = vmatpush1.msra.mxu0 0.0
    %991 = vmatprep.subr.mxu0 0.0
    %992 = vmatpush1.msra.mxu0 0.0
    %993 = vmatprep.subr.mxu0 0.0
    %994 = vmatpush1.msra.mxu0 0.0
    %995 = vmatprep.subr.mxu0 0.0
    %996 = vmatpush1.msra.mxu0 0.0
    %997 = vmatprep.subr.mxu0 0.0
    %998 = vmatpush1.msra.mxu0 0.0
    %999 = vmatprep.subr.mxu0 0.0
    %1000 = vmatpush1.msra.mxu0 0.0
    %1001 = vmatprep.subr.mxu0 0.0
    %1002 = vmatpush1.msra.mxu0 0.0
    %1003 = vmatprep.subr.mxu0 0.0
    %1004 = vmatpush1.msra.mxu0 0.0
    %1005 = vmatprep.subr.mxu0 0.0
    %1006 = vmatpush1.msra.mxu0 0.0
    %1007 = vmatprep.subr.mxu0 0.0
    %1008 = vmatpush1.msra.mxu0 0.0
    %1009 = vmatprep.subr.mxu0 0.0
    %1010 = vmatpush1.msra.mxu0 0.0
    %1011 = vmatprep.subr.mxu0 0.0
    %1012 = vmatpush1.msra.mxu0 0.0
    %1013 = vmatprep.subr.mxu0 0.0
    %1014 = vmatpush1.msra.mxu0 0.0
    %1015 = vmatprep.subr.mxu0 0.0
    %1016 = vmatpush1.msra.mxu0 0.0
    %1017 = vmatprep.subr.mxu0 0.0
    %1018 = vmatpush1.msra.mxu0 0.0
    %1019 = vmatprep.subr.mxu0 0.0
    %1020 = vmatpush1.msra.mxu0 0.0
    %1021 = vmatprep.subr.mxu0 0.0
    %1022 = vmatpush1.msra.mxu0 0.0
    %1023 = vmatprep.subr.mxu0 0.0
    %1024 = vmatpush1.msra.mxu0 0.0
    %1025 = vmatprep.subr.mxu0 0.0
    %1026 = vmatpush1.msra.mxu0 0.0
    %1027 = vmatprep.subr.mxu0 0.0
    %1028 = vmatpush1.msra.mxu0 0.0
    %1029 = vmatprep.subr.mxu0 0.0
    %1030 = vmatpush1.msra.mxu0 0.0
    %1031 = vmatprep.subr.mxu0 0.0
    %1032 = vmatpush1.msra.mxu0 0.0
    %1033 = vmatprep.subr.mxu0 0.0
    %1034 = vmatpush1.msra.mxu0 0.0
    %1035 = vmatprep.subr.mxu0 0.0
    %1036 = vmatpush1.msra.mxu0 0.0
    %1037 = vmatprep.mubr.f32.mxu0 0.0
    %1038 = vmatmul.mubr.f32.gmra.mrb[0].mxu0 %v971
    %v1039 = vpop.f32.mrb[0].mxu0
    %v1040 = vadd.f32 %v965, %v1039
    %v1041 = vpop.f32.mrb[0].mxu0
    %1042 = vdwg.mxu0
    %v1043 = vadd.f32 %v1040, %v493
    %v1044 = vxor.u32 %v1043, 2147483648
    %v1045 = vmul.f32 %v1044, 1.442695
    %v1046 = vpow.pop %v1045
    %v1047 = vadd.f32 %v1046, 1.0
    %v1048 = vrcp.pop %v1047
    %v1049 = vmul.f32 1.0, %v1048
    %v1050 = vmul.f32 %v1049, 2.0
    %v1051 = vsub.f32 %v1050, 1.0
    %v1052 = vmul.f32 %v1049, %v788
    %1054 = vrot.lane.b32.xlu0 %v1051, 64
    %v1055 = vpop.permute.xlu0 %1054
    %v1057 = vmul.f32 %v1049, %v1055
    %1059 = vrot.lane.b32.xlu0 %v1057, 32
    %v1060 = vpop.permute.xlu0 %1059
    %v1062 = vadd.f32 %v1052, %v1060
    %v1063 = vtanh.pop %v1062
    %1065 = vrot.lane.b32.xlu0 %v1063, 64
    %v1066 = vpop.permute.xlu0 %1065
    %v1068 = vmul.f32 %v1049, %v1066
    %s1069 = scalar_lea.vmem [#allocation2], 24
    %v1070 = vld [vmem:[%s1069] sm:$0xff]
    %1071 = vmatprep.subr.mxu0 0.0
    %1072 = vmatpush1.msra.mxu0 %v230
    %1073 = vmatprep.subr.mxu0 0.0
    %1074 = vmatpush1.msra.mxu0 %v231
    %1075 = vmatprep.subr.mxu0 0.0
    %1076 = vmatpush1.msra.mxu0 %v232
    %1077 = vmatprep.subr.mxu0 0.0
    %1078 = vmatpush1.msra.mxu0 %v233
    %1079 = vmatprep.subr.mxu0 0.0
    %1080 = vmatpush1.msra.mxu0 0.0
    %1081 = vmatprep.subr.mxu0 0.0
    %1082 = vmatpush1.msra.mxu0 0.0
    %1083 = vmatprep.subr.mxu0 0.0
    %1084 = vmatpush1.msra.mxu0 0.0
    %1085 = vmatprep.subr.mxu0 0.0
    %1086 = vmatpush1.msra.mxu0 0.0
    %1087 = vmatprep.subr.mxu0 0.0
    %1088 = vmatpush1.msra.mxu0 0.0
    %1089 = vmatprep.subr.mxu0 0.0
    %1090 = vmatpush1.msra.mxu0 0.0
    %1091 = vmatprep.subr.mxu0 0.0
    %1092 = vmatpush1.msra.mxu0 0.0
    %1093 = vmatprep.subr.mxu0 0.0
    %1094 = vmatpush1.msra.mxu0 0.0
    %1095 = vmatprep.subr.mxu0 0.0
    %1096 = vmatpush1.msra.mxu0 0.0
    %1097 = vmatprep.subr.mxu0 0.0
    %1098 = vmatpush1.msra.mxu0 0.0
    %1099 = vmatprep.subr.mxu0 0.0
    %1100 = vmatpush1.msra.mxu0 0.0
    %1101 = vmatprep.subr.mxu0 0.0
    %1102 = vmatpush1.msra.mxu0 0.0
    %1103 = vmatprep.subr.mxu0 0.0
    %1104 = vmatpush1.msra.mxu0 0.0
    %1105 = vmatprep.subr.mxu0 0.0
    %1106 = vmatpush1.msra.mxu0 0.0
    %1107 = vmatprep.subr.mxu0 0.0
    %1108 = vmatpush1.msra.mxu0 0.0
    %1109 = vmatprep.subr.mxu0 0.0
    %1110 = vmatpush1.msra.mxu0 0.0
    %1111 = vmatprep.subr.mxu0 0.0
    %1112 = vmatpush1.msra.mxu0 0.0
    %1113 = vmatprep.subr.mxu0 0.0
    %1114 = vmatpush1.msra.mxu0 0.0
    %1115 = vmatprep.subr.mxu0 0.0
    %1116 = vmatpush1.msra.mxu0 0.0
    %1117 = vmatprep.subr.mxu0 0.0
    %1118 = vmatpush1.msra.mxu0 0.0
    %1119 = vmatprep.subr.mxu0 0.0
    %1120 = vmatpush1.msra.mxu0 0.0
    %1121 = vmatprep.subr.mxu0 0.0
    %1122 = vmatpush1.msra.mxu0 0.0
    %1123 = vmatprep.subr.mxu0 0.0
    %1124 = vmatpush1.msra.mxu0 0.0
    %1125 = vmatprep.subr.mxu0 0.0
    %1126 = vmatpush1.msra.mxu0 0.0
    %1127 = vmatprep.subr.mxu0 0.0
    %1128 = vmatpush1.msra.mxu0 0.0
    %1129 = vmatprep.subr.mxu0 0.0
    %1130 = vmatpush1.msra.mxu0 0.0
    %1131 = vmatprep.subr.mxu0 0.0
    %1132 = vmatpush1.msra.mxu0 0.0
    %1133 = vmatprep.subr.mxu0 0.0
    %1134 = vmatpush1.msra.mxu0 0.0
    %1135 = vmatprep.mubr.f32.mxu0 0.0
    %1136 = vmatmul.mubr.f32.gmra.mrb[0].mxu0 %v971
    %v1137 = vpop.f32.mrb[0].mxu0
    %v1138 = vadd.f32 0.0, %v1137
    %v1139 = vpop.f32.mrb[0].mxu0
    %1140 = vdwg.mxu0
    %v1141 = vadd.f32 %v1070, %v1138
    %v1142 = vxor.u32 %v1141, 2147483648
    %v1143 = vmul.f32 %v1142, 1.442695
    %v1144 = vpow.pop %v1143
    %v1145 = vadd.f32 %v1144, 1.0
    %v1146 = vrcp.pop %v1145
    %v1147 = vmul.f32 1.0, %v1146
    %v1148 = vmul.f32 %v1147, 2.0
    %v1149 = vsub.f32 %v1148, 1.0
    %v1150 = vmul.f32 %v1147, %v886
    %1152 = vrot.lane.b32.xlu0 %v1149, 64
    %v1153 = vpop.permute.xlu0 %1152
    %v1155 = vmul.f32 %v1147, %v1153
    %1157 = vrot.lane.b32.xlu0 %v1155, 32
    %v1158 = vpop.permute.xlu0 %1157
    %v1160 = vadd.f32 %v1150, %v1158
    %v1161 = vtanh.pop %v1160
    %1163 = vrot.lane.b32.xlu0 %v1161, 64
    %v1164 = vpop.permute.xlu0 %1163
    %v1166 = vmul.f32 %v1147, %v1164
    %1168 = vrot.lane.b32.xlu0 %v1068, 32
    %v1169 = vpop.permute.xlu0 %1168
    %v1170 = vsel %vm244, %v1169, 0
    %1172 = vmatprep.subr.mxu0 0.0
    %1173 = vmatpush1.msra.mxu0 %v238
    %1174 = vmatprep.subr.mxu0 0.0
    %1175 = vmatpush1.msra.mxu0 %v239
    %1176 = vmatprep.subr.mxu0 0.0
    %1177 = vmatpush1.msra.mxu0 %v240
    %1178 = vmatprep.subr.mxu0 0.0
    %1179 = vmatpush1.msra.mxu0 %v241
    %1180 = vmatprep.subr.mxu0 0.0
    %1181 = vmatpush1.msra.mxu0 0.0
    %1182 = vmatprep.subr.mxu0 0.0
    %1183 = vmatpush1.msra.mxu0 0.0
    %1184 = vmatprep.subr.mxu0 0.0
    %1185 = vmatpush1.msra.mxu0 0.0
    %1186 = vmatprep.subr.mxu0 0.0
    %1187 = vmatpush1.msra.mxu0 0.0
    %1188 = vmatprep.subr.mxu0 0.0
    %1189 = vmatpush1.msra.mxu0 0.0
    %1190 = vmatprep.subr.mxu0 0.0
    %1191 = vmatpush1.msra.mxu0 0.0
    %1192 = vmatprep.subr.mxu0 0.0
    %1193 = vmatpush1.msra.mxu0 0.0
    %1194 = vmatprep.subr.mxu0 0.0
    %1195 = vmatpush1.msra.mxu0 0.0
    %1196 = vmatprep.subr.mxu0 0.0
    %1197 = vmatpush1.msra.mxu0 0.0
    %1198 = vmatprep.subr.mxu0 0.0
    %1199 = vmatpush1.msra.mxu0 0.0
    %1200 = vmatprep.subr.mxu0 0.0
    %1201 = vmatpush1.msra.mxu0 0.0
    %1202 = vmatprep.subr.mxu0 0.0
    %1203 = vmatpush1.msra.mxu0 0.0
    %1204 = vmatprep.subr.mxu0 0.0
    %1205 = vmatpush1.msra.mxu0 0.0
    %1206 = vmatprep.subr.mxu0 0.0
    %1207 = vmatpush1.msra.mxu0 0.0
    %1208 = vmatprep.subr.mxu0 0.0
    %1209 = vmatpush1.msra.mxu0 0.0
    %1210 = vmatprep.subr.mxu0 0.0
    %1211 = vmatpush1.msra.mxu0 0.0
    %1212 = vmatprep.subr.mxu0 0.0
    %1213 = vmatpush1.msra.mxu0 0.0
    %1214 = vmatprep.subr.mxu0 0.0
    %1215 = vmatpush1.msra.mxu0 0.0
    %1216 = vmatprep.subr.mxu0 0.0
    %1217 = vmatpush1.msra.mxu0 0.0
    %1218 = vmatprep.subr.mxu0 0.0
    %1219 = vmatpush1.msra.mxu0 0.0
    %1220 = vmatprep.subr.mxu0 0.0
    %1221 = vmatpush1.msra.mxu0 0.0
    %1222 = vmatprep.subr.mxu0 0.0
    %1223 = vmatpush1.msra.mxu0 0.0
    %1224 = vmatprep.subr.mxu0 0.0
    %1225 = vmatpush1.msra.mxu0 0.0
    %1226 = vmatprep.subr.mxu0 0.0
    %1227 = vmatpush1.msra.mxu0 0.0
    %1228 = vmatprep.subr.mxu0 0.0
    %1229 = vmatpush1.msra.mxu0 0.0
    %1230 = vmatprep.subr.mxu0 0.0
    %1231 = vmatpush1.msra.mxu0 0.0
    %1232 = vmatprep.subr.mxu0 0.0
    %1233 = vmatpush1.msra.mxu0 0.0
    %1234 = vmatprep.subr.mxu0 0.0
    %1235 = vmatpush1.msra.mxu0 0.0
    %1236 = vmatprep.mubr.f32.mxu0 0.0
    %1237 = vmatmul.mubr.f32.gmra.mrb[0].mxu0 %v1170
    %v1238 = vpop.f32.mrb[0].mxu0
    %v1239 = vadd.f32 0.0, %v1238
    %v1240 = vpop.f32.mrb[0].mxu0
    %1241 = vdwg.mxu0
    %1243 = vrot.lane.b32.xlu0 %v1166, 32
    %v1244 = vpop.permute.xlu0 %1243
    %v1245 = vsel %vm244, %v1244, 0
    %1247 = vmatprep.subr.mxu0 0.0
    %1248 = vmatpush1.msra.mxu0 %v234
    %1249 = vmatprep.subr.mxu0 0.0
    %1250 = vmatpush1.msra.mxu0 %v235
    %1251 = vmatprep.subr.mxu0 0.0
    %1252 = vmatpush1.msra.mxu0 %v236
    %1253 = vmatprep.subr.mxu0 0.0
    %1254 = vmatpush1.msra.mxu0 %v237
    %1255 = vmatprep.subr.mxu0 0.0
    %1256 = vmatpush1.msra.mxu0 0.0
    %1257 = vmatprep.subr.mxu0 0.0
    %1258 = vmatpush1.msra.mxu0 0.0
    %1259 = vmatprep.subr.mxu0 0.0
    %1260 = vmatpush1.msra.mxu0 0.0
    %1261 = vmatprep.subr.mxu0 0.0
    %1262 = vmatpush1.msra.mxu0 0.0
    %1263 = vmatprep.subr.mxu0 0.0
    %1264 = vmatpush1.msra.mxu0 0.0
    %1265 = vmatprep.subr.mxu0 0.0
    %1266 = vmatpush1.msra.mxu0 0.0
    %1267 = vmatprep.subr.mxu0 0.0
    %1268 = vmatpush1.msra.mxu0 0.0
    %1269 = vmatprep.subr.mxu0 0.0
    %1270 = vmatpush1.msra.mxu0 0.0
    %1271 = vmatprep.subr.mxu0 0.0
    %1272 = vmatpush1.msra.mxu0 0.0
    %1273 = vmatprep.subr.mxu0 0.0
    %1274 = vmatpush1.msra.mxu0 0.0
    %1275 = vmatprep.subr.mxu0 0.0
    %1276 = vmatpush1.msra.mxu0 0.0
    %1277 = vmatprep.subr.mxu0 0.0
    %1278 = vmatpush1.msra.mxu0 0.0
    %1279 = vmatprep.subr.mxu0 0.0
    %1280 = vmatpush1.msra.mxu0 0.0
    %1281 = vmatprep.subr.mxu0 0.0
    %1282 = vmatpush1.msra.mxu0 0.0
    %1283 = vmatprep.subr.mxu0 0.0
    %1284 = vmatpush1.msra.mxu0 0.0
    %1285 = vmatprep.subr.mxu0 0.0
    %1286 = vmatpush1.msra.mxu0 0.0
    %1287 = vmatprep.subr.mxu0 0.0
    %1288 = vmatpush1.msra.mxu0 0.0
    %1289 = vmatprep.subr.mxu0 0.0
    %1290 = vmatpush1.msra.mxu0 0.0
    %1291 = vmatprep.subr.mxu0 0.0
    %1292 = vmatpush1.msra.mxu0 0.0
    %1293 = vmatprep.subr.mxu0 0.0
    %1294 = vmatpush1.msra.mxu0 0.0
    %1295 = vmatprep.subr.mxu0 0.0
    %1296 = vmatpush1.msra.mxu0 0.0
    %1297 = vmatprep.subr.mxu0 0.0
    %1298 = vmatpush1.msra.mxu0 0.0
    %1299 = vmatprep.subr.mxu0 0.0
    %1300 = vmatpush1.msra.mxu0 0.0
    %1301 = vmatprep.subr.mxu0 0.0
    %1302 = vmatpush1.msra.mxu0 0.0
    %1303 = vmatprep.subr.mxu0 0.0
    %1304 = vmatpush1.msra.mxu0 0.0
    %1305 = vmatprep.subr.mxu0 0.0
    %1306 = vmatpush1.msra.mxu0 0.0
    %1307 = vmatprep.subr.mxu0 0.0
    %1308 = vmatpush1.msra.mxu0 0.0
    %1309 = vmatprep.subr.mxu0 0.0
    %1310 = vmatpush1.msra.mxu0 0.0
    %1311 = vmatprep.mubr.f32.mxu0 0.0
    %1312 = vmatmul.mubr.f32.gmra.mrb[0].mxu0 %v1245
    %v1313 = vpop.f32.mrb[0].mxu0
    %v1314 = vadd.f32 %v1239, %v1313
    %v1315 = vpop.f32.mrb[0].mxu0
    %1316 = vdwg.mxu0
    %v1317 = vadd.f32 %v1314, %v493
    %v1318 = vxor.u32 %v1317, 2147483648
    %v1319 = vmul.f32 %v1318, 1.442695
    %v1320 = vpow.pop %v1319
    %v1321 = vadd.f32 %v1320, 1.0
    %v1322 = vrcp.pop %v1321
    %v1323 = vmul.f32 1.0, %v1322
    %v1324 = vmul.f32 %v1323, 2.0
    %v1325 = vsub.f32 %v1324, 1.0
    %v1326 = vmul.f32 %v1323, %v1062
    %1328 = vrot.lane.b32.xlu0 %v1325, 64
    %v1329 = vpop.permute.xlu0 %1328
    %v1331 = vmul.f32 %v1323, %v1329
    %1333 = vrot.lane.b32.xlu0 %v1331, 32
    %v1334 = vpop.permute.xlu0 %1333
    %v1336 = vadd.f32 %v1326, %v1334
    %v1337 = vtanh.pop %v1336
    %1339 = vrot.lane.b32.xlu0 %v1337, 64
    %v1340 = vpop.permute.xlu0 %1339
    %v1342 = vmul.f32 %v1323, %v1340
    %s1343 = scalar_lea.vmem [#allocation2], 32
    %v1344 = vld [vmem:[%s1343] sm:$0xff]
    %1345 = vmatprep.subr.mxu0 0.0
    %1346 = vmatpush1.msra.mxu0 %v230
    %1347 = vmatprep.subr.mxu0 0.0
    %1348 = vmatpush1.msra.mxu0 %v231
    %1349 = vmatprep.subr.mxu0 0.0
    %1350 = vmatpush1.msra.mxu0 %v232
    %1351 = vmatprep.subr.mxu0 0.0
    %1352 = vmatpush1.msra.mxu0 %v233
    %1353 = vmatprep.subr.mxu0 0.0
    %1354 = vmatpush1.msra.mxu0 0.0
    %1355 = vmatprep.subr.mxu0 0.0
    %1356 = vmatpush1.msra.mxu0 0.0
    %1357 = vmatprep.subr.mxu0 0.0
    %1358 = vmatpush1.msra.mxu0 0.0
    %1359 = vmatprep.subr.mxu0 0.0
    %1360 = vmatpush1.msra.mxu0 0.0
    %1361 = vmatprep.subr.mxu0 0.0
    %1362 = vmatpush1.msra.mxu0 0.0
    %1363 = vmatprep.subr.mxu0 0.0
    %1364 = vmatpush1.msra.mxu0 0.0
    %1365 = vmatprep.subr.mxu0 0.0
    %1366 = vmatpush1.msra.mxu0 0.0
    %1367 = vmatprep.subr.mxu0 0.0
    %1368 = vmatpush1.msra.mxu0 0.0
    %1369 = vmatprep.subr.mxu0 0.0
    %1370 = vmatpush1.msra.mxu0 0.0
    %1371 = vmatprep.subr.mxu0 0.0
    %1372 = vmatpush1.msra.mxu0 0.0
    %1373 = vmatprep.subr.mxu0 0.0
    %1374 = vmatpush1.msra.mxu0 0.0
    %1375 = vmatprep.subr.mxu0 0.0
    %1376 = vmatpush1.msra.mxu0 0.0
    %1377 = vmatprep.subr.mxu0 0.0
    %1378 = vmatpush1.msra.mxu0 0.0
    %1379 = vmatprep.subr.mxu0 0.0
    %1380 = vmatpush1.msra.mxu0 0.0
    %1381 = vmatprep.subr.mxu0 0.0
    %1382 = vmatpush1.msra.mxu0 0.0
    %1383 = vmatprep.subr.mxu0 0.0
    %1384 = vmatpush1.msra.mxu0 0.0
    %1385 = vmatprep.subr.mxu0 0.0
    %1386 = vmatpush1.msra.mxu0 0.0
    %1387 = vmatprep.subr.mxu0 0.0
    %1388 = vmatpush1.msra.mxu0 0.0
    %1389 = vmatprep.subr.mxu0 0.0
    %1390 = vmatpush1.msra.mxu0 0.0
    %1391 = vmatprep.subr.mxu0 0.0
    %1392 = vmatpush1.msra.mxu0 0.0
    %1393 = vmatprep.subr.mxu0 0.0
    %1394 = vmatpush1.msra.mxu0 0.0
    %1395 = vmatprep.subr.mxu0 0.0
    %1396 = vmatpush1.msra.mxu0 0.0
    %1397 = vmatprep.subr.mxu0 0.0
    %1398 = vmatpush1.msra.mxu0 0.0
    %1399 = vmatprep.subr.mxu0 0.0
    %1400 = vmatpush1.msra.mxu0 0.0
    %1401 = vmatprep.subr.mxu0 0.0
    %1402 = vmatpush1.msra.mxu0 0.0
    %1403 = vmatprep.subr.mxu0 0.0
    %1404 = vmatpush1.msra.mxu0 0.0
    %1405 = vmatprep.subr.mxu0 0.0
    %1406 = vmatpush1.msra.mxu0 0.0
    %1407 = vmatprep.subr.mxu0 0.0
    %1408 = vmatpush1.msra.mxu0 0.0
    %1409 = vmatprep.mubr.f32.mxu0 0.0
    %1410 = vmatmul.mubr.f32.gmra.mrb[0].mxu0 %v1245
    %v1411 = vpop.f32.mrb[0].mxu0
    %v1412 = vadd.f32 0.0, %v1411
    %v1413 = vpop.f32.mrb[0].mxu0
    %1414 = vdwg.mxu0
    %v1415 = vadd.f32 %v1344, %v1412
    %v1416 = vxor.u32 %v1415, 2147483648
    %v1417 = vmul.f32 %v1416, 1.442695
    %v1418 = vpow.pop %v1417
    %v1419 = vadd.f32 %v1418, 1.0
    %v1420 = vrcp.pop %v1419
    %v1421 = vmul.f32 1.0, %v1420
    %v1422 = vmul.f32 %v1421, 2.0
    %v1423 = vsub.f32 %v1422, 1.0
    %v1424 = vmul.f32 %v1421, %v1160
    %1426 = vrot.lane.b32.xlu0 %v1423, 64
    %v1427 = vpop.permute.xlu0 %1426
    %v1429 = vmul.f32 %v1421, %v1427
    %1431 = vrot.lane.b32.xlu0 %v1429, 32
    %v1432 = vpop.permute.xlu0 %1431
    %v1434 = vadd.f32 %v1424, %v1432
    %v1435 = vtanh.pop %v1434
    %1437 = vrot.lane.b32.xlu0 %v1435, 64
    %v1438 = vpop.permute.xlu0 %1437
    %v1440 = vmul.f32 %v1421, %v1438
    %1442 = vrot.lane.b32.xlu0 %v1342, 32
    %v1443 = vpop.permute.xlu0 %1442
    %v1444 = vsel %vm244, %v1443, 0
    %1446 = vmatprep.subr.mxu0 0.0
    %1447 = vmatpush1.msra.mxu0 %v238
    %1448 = vmatprep.subr.mxu0 0.0
    %1449 = vmatpush1.msra.mxu0 %v239
    %1450 = vmatprep.subr.mxu0 0.0
    %1451 = vmatpush1.msra.mxu0 %v240
    %1452 = vmatprep.subr.mxu0 0.0
    %1453 = vmatpush1.msra.mxu0 %v241
    %1454 = vmatprep.subr.mxu0 0.0
    %1455 = vmatpush1.msra.mxu0 0.0
    %1456 = vmatprep.subr.mxu0 0.0
    %1457 = vmatpush1.msra.mxu0 0.0
    %1458 = vmatprep.subr.mxu0 0.0
    %1459 = vmatpush1.msra.mxu0 0.0
    %1460 = vmatprep.subr.mxu0 0.0
    %1461 = vmatpush1.msra.mxu0 0.0
    %1462 = vmatprep.subr.mxu0 0.0
    %1463 = vmatpush1.msra.mxu0 0.0
    %1464 = vmatprep.subr.mxu0 0.0
    %1465 = vmatpush1.msra.mxu0 0.0
    %1466 = vmatprep.subr.mxu0 0.0
    %1467 = vmatpush1.msra.mxu0 0.0
    %1468 = vmatprep.subr.mxu0 0.0
    %1469 = vmatpush1.msra.mxu0 0.0
    %1470 = vmatprep.subr.mxu0 0.0
    %1471 = vmatpush1.msra.mxu0 0.0
    %1472 = vmatprep.subr.mxu0 0.0
    %1473 = vmatpush1.msra.mxu0 0.0
    %1474 = vmatprep.subr.mxu0 0.0
    %1475 = vmatpush1.msra.mxu0 0.0
    %1476 = vmatprep.subr.mxu0 0.0
    %1477 = vmatpush1.msra.mxu0 0.0
    %1478 = vmatprep.subr.mxu0 0.0
    %1479 = vmatpush1.msra.mxu0 0.0
    %1480 = vmatprep.subr.mxu0 0.0
    %1481 = vmatpush1.msra.mxu0 0.0
    %1482 = vmatprep.subr.mxu0 0.0
    %1483 = vmatpush1.msra.mxu0 0.0
    %1484 = vmatprep.subr.mxu0 0.0
    %1485 = vmatpush1.msra.mxu0 0.0
    %1486 = vmatprep.subr.mxu0 0.0
    %1487 = vmatpush1.msra.mxu0 0.0
    %1488 = vmatprep.subr.mxu0 0.0
    %1489 = vmatpush1.msra.mxu0 0.0
    %1490 = vmatprep.subr.mxu0 0.0
    %1491 = vmatpush1.msra.mxu0 0.0
    %1492 = vmatprep.subr.mxu0 0.0
    %1493 = vmatpush1.msra.mxu0 0.0
    %1494 = vmatprep.subr.mxu0 0.0
    %1495 = vmatpush1.msra.mxu0 0.0
    %1496 = vmatprep.subr.mxu0 0.0
    %1497 = vmatpush1.msra.mxu0 0.0
    %1498 = vmatprep.subr.mxu0 0.0
    %1499 = vmatpush1.msra.mxu0 0.0
    %1500 = vmatprep.subr.mxu0 0.0
    %1501 = vmatpush1.msra.mxu0 0.0
    %1502 = vmatprep.subr.mxu0 0.0
    %1503 = vmatpush1.msra.mxu0 0.0
    %1504 = vmatprep.subr.mxu0 0.0
    %1505 = vmatpush1.msra.mxu0 0.0
    %1506 = vmatprep.subr.mxu0 0.0
    %1507 = vmatpush1.msra.mxu0 0.0
    %1508 = vmatprep.subr.mxu0 0.0
    %1509 = vmatpush1.msra.mxu0 0.0
    %1510 = vmatprep.mubr.f32.mxu0 0.0
    %1511 = vmatmul.mubr.f32.gmra.mrb[0].mxu0 %v1444
    %v1512 = vpop.f32.mrb[0].mxu0
    %v1513 = vadd.f32 0.0, %v1512
    %v1514 = vpop.f32.mrb[0].mxu0
    %1515 = vdwg.mxu0
    %1517 = vrot.lane.b32.xlu0 %v1440, 32
    %v1518 = vpop.permute.xlu0 %1517
    %v1519 = vsel %vm244, %v1518, 0
    %1521 = vmatprep.subr.mxu0 0.0
    %1522 = vmatpush1.msra.mxu0 %v234
    %1523 = vmatprep.subr.mxu0 0.0
    %1524 = vmatpush1.msra.mxu0 %v235
    %1525 = vmatprep.subr.mxu0 0.0
    %1526 = vmatpush1.msra.mxu0 %v236
    %1527 = vmatprep.subr.mxu0 0.0
    %1528 = vmatpush1.msra.mxu0 %v237
    %1529 = vmatprep.subr.mxu0 0.0
    %1530 = vmatpush1.msra.mxu0 0.0
    %1531 = vmatprep.subr.mxu0 0.0
    %1532 = vmatpush1.msra.mxu0 0.0
    %1533 = vmatprep.subr.mxu0 0.0
    %1534 = vmatpush1.msra.mxu0 0.0
    %1535 = vmatprep.subr.mxu0 0.0
    %1536 = vmatpush1.msra.mxu0 0.0
    %1537 = vmatprep.subr.mxu0 0.0
    %1538 = vmatpush1.msra.mxu0 0.0
    %1539 = vmatprep.subr.mxu0 0.0
    %1540 = vmatpush1.msra.mxu0 0.0
    %1541 = vmatprep.subr.mxu0 0.0
    %1542 = vmatpush1.msra.mxu0 0.0
    %1543 = vmatprep.subr.mxu0 0.0
    %1544 = vmatpush1.msra.mxu0 0.0
    %1545 = vmatprep.subr.mxu0 0.0
    %1546 = vmatpush1.msra.mxu0 0.0
    %1547 = vmatprep.subr.mxu0 0.0
    %1548 = vmatpush1.msra.mxu0 0.0
    %1549 = vmatprep.subr.mxu0 0.0
    %1550 = vmatpush1.msra.mxu0 0.0
    %1551 = vmatprep.subr.mxu0 0.0
    %1552 = vmatpush1.msra.mxu0 0.0
    %1553 = vmatprep.subr.mxu0 0.0
    %1554 = vmatpush1.msra.mxu0 0.0
    %1555 = vmatprep.subr.mxu0 0.0
    %1556 = vmatpush1.msra.mxu0 0.0
    %1557 = vmatprep.subr.mxu0 0.0
    %1558 = vmatpush1.msra.mxu0 0.0
    %1559 = vmatprep.subr.mxu0 0.0
    %1560 = vmatpush1.msra.mxu0 0.0
    %1561 = vmatprep.subr.mxu0 0.0
    %1562 = vmatpush1.msra.mxu0 0.0
    %1563 = vmatprep.subr.mxu0 0.0
    %1564 = vmatpush1.msra.mxu0 0.0
    %1565 = vmatprep.subr.mxu0 0.0
    %1566 = vmatpush1.msra.mxu0 0.0
    %1567 = vmatprep.subr.mxu0 0.0
    %1568 = vmatpush1.msra.mxu0 0.0
    %1569 = vmatprep.subr.mxu0 0.0
    %1570 = vmatpush1.msra.mxu0 0.0
    %1571 = vmatprep.subr.mxu0 0.0
    %1572 = vmatpush1.msra.mxu0 0.0
    %1573 = vmatprep.subr.mxu0 0.0
    %1574 = vmatpush1.msra.mxu0 0.0
    %1575 = vmatprep.subr.mxu0 0.0
    %1576 = vmatpush1.msra.mxu0 0.0
    %1577 = vmatprep.subr.mxu0 0.0
    %1578 = vmatpush1.msra.mxu0 0.0
    %1579 = vmatprep.subr.mxu0 0.0
    %1580 = vmatpush1.msra.mxu0 0.0
    %1581 = vmatprep.subr.mxu0 0.0
    %1582 = vmatpush1.msra.mxu0 0.0
    %1583 = vmatprep.subr.mxu0 0.0
    %1584 = vmatpush1.msra.mxu0 0.0
    %1585 = vmatprep.mubr.f32.mxu0 0.0
    %1586 = vmatmul.mubr.f32.gmra.mrb[0].mxu0 %v1519
    %v1587 = vpop.f32.mrb[0].mxu0
    %v1588 = vadd.f32 %v1513, %v1587
    %v1589 = vpop.f32.mrb[0].mxu0
    %1590 = vdwg.mxu0
    %v1591 = vadd.f32 %v1588, %v493
    %v1592 = vxor.u32 %v1591, 2147483648
    %v1593 = vmul.f32 %v1592, 1.442695
    %v1594 = vpow.pop %v1593
    %v1595 = vadd.f32 %v1594, 1.0
    %v1596 = vrcp.pop %v1595
    %v1597 = vmul.f32 1.0, %v1596
    %v1598 = vmul.f32 %v1597, 2.0
    %v1599 = vsub.f32 %v1598, 1.0
    %v1600 = vmul.f32 %v1597, %v1336
    %1602 = vrot.lane.b32.xlu0 %v1599, 64
    %v1603 = vpop.permute.xlu0 %1602
    %v1605 = vmul.f32 %v1597, %v1603
    %1607 = vrot.lane.b32.xlu0 %v1605, 32
    %v1608 = vpop.permute.xlu0 %1607
    %v1610 = vadd.f32 %v1600, %v1608
    %v1611 = vtanh.pop %v1610
    %1613 = vrot.lane.b32.xlu0 %v1611, 64
    %v1614 = vpop.permute.xlu0 %1613
    %v1616 = vmul.f32 %v1597, %v1614
    %s1617 = scalar_lea.vmem [#allocation2], 40
    %v1618 = vld [vmem:[%s1617] sm:$0xff]
    %1619 = vmatprep.subr.mxu0 0.0
    %1620 = vmatpush1.msra.mxu0 %v230
    %1621 = vmatprep.subr.mxu0 0.0
    %1622 = vmatpush1.msra.mxu0 %v231
    %1623 = vmatprep.subr.mxu0 0.0
    %1624 = vmatpush1.msra.mxu0 %v232
    %1625 = vmatprep.subr.mxu0 0.0
    %1626 = vmatpush1.msra.mxu0 %v233
    %1627 = vmatprep.subr.mxu0 0.0
    %1628 = vmatpush1.msra.mxu0 0.0
    %1629 = vmatprep.subr.mxu0 0.0
    %1630 = vmatpush1.msra.mxu0 0.0
    %1631 = vmatprep.subr.mxu0 0.0
    %1632 = vmatpush1.msra.mxu0 0.0
    %1633 = vmatprep.subr.mxu0 0.0
    %1634 = vmatpush1.msra.mxu0 0.0
    %1635 = vmatprep.subr.mxu0 0.0
    %1636 = vmatpush1.msra.mxu0 0.0
    %1637 = vmatprep.subr.mxu0 0.0
    %1638 = vmatpush1.msra.mxu0 0.0
    %1639 = vmatprep.subr.mxu0 0.0
    %1640 = vmatpush1.msra.mxu0 0.0
    %1641 = vmatprep.subr.mxu0 0.0
    %1642 = vmatpush1.msra.mxu0 0.0
    %1643 = vmatprep.subr.mxu0 0.0
    %1644 = vmatpush1.msra.mxu0 0.0
    %1645 = vmatprep.subr.mxu0 0.0
    %1646 = vmatpush1.msra.mxu0 0.0
    %1647 = vmatprep.subr.mxu0 0.0
    %1648 = vmatpush1.msra.mxu0 0.0
    %1649 = vmatprep.subr.mxu0 0.0
    %1650 = vmatpush1.msra.mxu0 0.0
    %1651 = vmatprep.subr.mxu0 0.0
    %1652 = vmatpush1.msra.mxu0 0.0
    %1653 = vmatprep.subr.mxu0 0.0
    %1654 = vmatpush1.msra.mxu0 0.0
    %1655 = vmatprep.subr.mxu0 0.0
    %1656 = vmatpush1.msra.mxu0 0.0
    %1657 = vmatprep.subr.mxu0 0.0
    %1658 = vmatpush1.msra.mxu0 0.0
    %1659 = vmatprep.subr.mxu0 0.0
    %1660 = vmatpush1.msra.mxu0 0.0
    %1661 = vmatprep.subr.mxu0 0.0
    %1662 = vmatpush1.msra.mxu0 0.0
    %1663 = vmatprep.subr.mxu0 0.0
    %1664 = vmatpush1.msra.mxu0 0.0
    %1665 = vmatprep.subr.mxu0 0.0
    %1666 = vmatpush1.msra.mxu0 0.0
    %1667 = vmatprep.subr.mxu0 0.0
    %1668 = vmatpush1.msra.mxu0 0.0
    %1669 = vmatprep.subr.mxu0 0.0
    %1670 = vmatpush1.msra.mxu0 0.0
    %1671 = vmatprep.subr.mxu0 0.0
    %1672 = vmatpush1.msra.mxu0 0.0
    %1673 = vmatprep.subr.mxu0 0.0
    %1674 = vmatpush1.msra.mxu0 0.0
    %1675 = vmatprep.subr.mxu0 0.0
    %1676 = vmatpush1.msra.mxu0 0.0
    %1677 = vmatprep.subr.mxu0 0.0
    %1678 = vmatpush1.msra.mxu0 0.0
    %1679 = vmatprep.subr.mxu0 0.0
    %1680 = vmatpush1.msra.mxu0 0.0
    %1681 = vmatprep.subr.mxu0 0.0
    %1682 = vmatpush1.msra.mxu0 0.0
    %1683 = vmatprep.mubr.f32.mxu0 0.0
    %1684 = vmatmul.mubr.f32.gmra.mrb[0].mxu0 %v1519
    %v1685 = vpop.f32.mrb[0].mxu0
    %v1686 = vadd.f32 0.0, %v1685
    %v1687 = vpop.f32.mrb[0].mxu0
    %1688 = vdwg.mxu0
    %v1689 = vadd.f32 %v1618, %v1686
    %v1690 = vxor.u32 %v1689, 2147483648
    %v1691 = vmul.f32 %v1690, 1.442695
    %v1692 = vpow.pop %v1691
    %v1693 = vadd.f32 %v1692, 1.0
    %v1694 = vrcp.pop %v1693
    %v1695 = vmul.f32 1.0, %v1694
    %v1696 = vmul.f32 %v1695, 2.0
    %v1697 = vsub.f32 %v1696, 1.0
    %v1698 = vmul.f32 %v1695, %v1434
    %1700 = vrot.lane.b32.xlu0 %v1697, 64
    %v1701 = vpop.permute.xlu0 %1700
    %v1703 = vmul.f32 %v1695, %v1701
    %1705 = vrot.lane.b32.xlu0 %v1703, 32
    %v1706 = vpop.permute.xlu0 %1705
    %v1708 = vadd.f32 %v1698, %v1706
    %v1709 = vtanh.pop %v1708
    %1711 = vrot.lane.b32.xlu0 %v1709, 64
    %v1712 = vpop.permute.xlu0 %1711
    %v1714 = vmul.f32 %v1695, %v1712
    %1716 = vrot.lane.b32.xlu0 %v1616, 32
    %v1717 = vpop.permute.xlu0 %1716
    %v1718 = vsel %vm244, %v1717, 0
    %1720 = vmatprep.subr.mxu0 0.0
    %1721 = vmatpush1.msra.mxu0 %v238
    %1722 = vmatprep.subr.mxu0 0.0
    %1723 = vmatpush1.msra.mxu0 %v239
    %1724 = vmatprep.subr.mxu0 0.0
    %1725 = vmatpush1.msra.mxu0 %v240
    %1726 = vmatprep.subr.mxu0 0.0
    %1727 = vmatpush1.msra.mxu0 %v241
    %1728 = vmatprep.subr.mxu0 0.0
    %1729 = vmatpush1.msra.mxu0 0.0
    %1730 = vmatprep.subr.mxu0 0.0
    %1731 = vmatpush1.msra.mxu0 0.0
    %1732 = vmatprep.subr.mxu0 0.0
    %1733 = vmatpush1.msra.mxu0 0.0
    %1734 = vmatprep.subr.mxu0 0.0
    %1735 = vmatpush1.msra.mxu0 0.0
    %1736 = vmatprep.subr.mxu0 0.0
    %1737 = vmatpush1.msra.mxu0 0.0
    %1738 = vmatprep.subr.mxu0 0.0
    %1739 = vmatpush1.msra.mxu0 0.0
    %1740 = vmatprep.subr.mxu0 0.0
    %1741 = vmatpush1.msra.mxu0 0.0
    %1742 = vmatprep.subr.mxu0 0.0
    %1743 = vmatpush1.msra.mxu0 0.0
    %1744 = vmatprep.subr.mxu0 0.0
    %1745 = vmatpush1.msra.mxu0 0.0
    %1746 = vmatprep.subr.mxu0 0.0
    %1747 = vmatpush1.msra.mxu0 0.0
    %1748 = vmatprep.subr.mxu0 0.0
    %1749 = vmatpush1.msra.mxu0 0.0
    %1750 = vmatprep.subr.mxu0 0.0
    %1751 = vmatpush1.msra.mxu0 0.0
    %1752 = vmatprep.subr.mxu0 0.0
    %1753 = vmatpush1.msra.mxu0 0.0
    %1754 = vmatprep.subr.mxu0 0.0
    %1755 = vmatpush1.msra.mxu0 0.0
    %1756 = vmatprep.subr.mxu0 0.0
    %1757 = vmatpush1.msra.mxu0 0.0
    %1758 = vmatprep.subr.mxu0 0.0
    %1759 = vmatpush1.msra.mxu0 0.0
    %1760 = vmatprep.subr.mxu0 0.0
    %1761 = vmatpush1.msra.mxu0 0.0
    %1762 = vmatprep.subr.mxu0 0.0
    %1763 = vmatpush1.msra.mxu0 0.0
    %1764 = vmatprep.subr.mxu0 0.0
    %1765 = vmatpush1.msra.mxu0 0.0
    %1766 = vmatprep.subr.mxu0 0.0
    %1767 = vmatpush1.msra.mxu0 0.0
    %1768 = vmatprep.subr.mxu0 0.0
    %1769 = vmatpush1.msra.mxu0 0.0
    %1770 = vmatprep.subr.mxu0 0.0
    %1771 = vmatpush1.msra.mxu0 0.0
    %1772 = vmatprep.subr.mxu0 0.0
    %1773 = vmatpush1.msra.mxu0 0.0
    %1774 = vmatprep.subr.mxu0 0.0
    %1775 = vmatpush1.msra.mxu0 0.0
    %1776 = vmatprep.subr.mxu0 0.0
    %1777 = vmatpush1.msra.mxu0 0.0
    %1778 = vmatprep.subr.mxu0 0.0
    %1779 = vmatpush1.msra.mxu0 0.0
    %1780 = vmatprep.subr.mxu0 0.0
    %1781 = vmatpush1.msra.mxu0 0.0
    %1782 = vmatprep.subr.mxu0 0.0
    %1783 = vmatpush1.msra.mxu0 0.0
    %1784 = vmatprep.mubr.f32.mxu0 0.0
    %1785 = vmatmul.mubr.f32.gmra.mrb[0].mxu0 %v1718
    %v1786 = vpop.f32.mrb[0].mxu0
    %v1787 = vadd.f32 0.0, %v1786
    %v1788 = vpop.f32.mrb[0].mxu0
    %1789 = vdwg.mxu0
    %1791 = vrot.lane.b32.xlu0 %v1714, 32
    %v1792 = vpop.permute.xlu0 %1791
    %v1793 = vsel %vm244, %v1792, 0
    %1795 = vmatprep.subr.mxu0 0.0
    %1796 = vmatpush1.msra.mxu0 %v234
    %1797 = vmatprep.subr.mxu0 0.0
    %1798 = vmatpush1.msra.mxu0 %v235
    %1799 = vmatprep.subr.mxu0 0.0
    %1800 = vmatpush1.msra.mxu0 %v236
    %1801 = vmatprep.subr.mxu0 0.0
    %1802 = vmatpush1.msra.mxu0 %v237
    %1803 = vmatprep.subr.mxu0 0.0
    %1804 = vmatpush1.msra.mxu0 0.0
    %1805 = vmatprep.subr.mxu0 0.0
    %1806 = vmatpush1.msra.mxu0 0.0
    %1807 = vmatprep.subr.mxu0 0.0
    %1808 = vmatpush1.msra.mxu0 0.0
    %1809 = vmatprep.subr.mxu0 0.0
    %1810 = vmatpush1.msra.mxu0 0.0
    %1811 = vmatprep.subr.mxu0 0.0
    %1812 = vmatpush1.msra.mxu0 0.0
    %1813 = vmatprep.subr.mxu0 0.0
    %1814 = vmatpush1.msra.mxu0 0.0
    %1815 = vmatprep.subr.mxu0 0.0
    %1816 = vmatpush1.msra.mxu0 0.0
    %1817 = vmatprep.subr.mxu0 0.0
    %1818 = vmatpush1.msra.mxu0 0.0
    %1819 = vmatprep.subr.mxu0 0.0
    %1820 = vmatpush1.msra.mxu0 0.0
    %1821 = vmatprep.subr.mxu0 0.0
    %1822 = vmatpush1.msra.mxu0 0.0
    %1823 = vmatprep.subr.mxu0 0.0
    %1824 = vmatpush1.msra.mxu0 0.0
    %1825 = vmatprep.subr.mxu0 0.0
    %1826 = vmatpush1.msra.mxu0 0.0
    %1827 = vmatprep.subr.mxu0 0.0
    %1828 = vmatpush1.msra.mxu0 0.0
    %1829 = vmatprep.subr.mxu0 0.0
    %1830 = vmatpush1.msra.mxu0 0.0
    %1831 = vmatprep.subr.mxu0 0.0
    %1832 = vmatpush1.msra.mxu0 0.0
    %1833 = vmatprep.subr.mxu0 0.0
    %1834 = vmatpush1.msra.mxu0 0.0
    %1835 = vmatprep.subr.mxu0 0.0
    %1836 = vmatpush1.msra.mxu0 0.0
    %1837 = vmatprep.subr.mxu0 0.0
    %1838 = vmatpush1.msra.mxu0 0.0
    %1839 = vmatprep.subr.mxu0 0.0
    %1840 = vmatpush1.msra.mxu0 0.0
    %1841 = vmatprep.subr.mxu0 0.0
    %1842 = vmatpush1.msra.mxu0 0.0
    %1843 = vmatprep.subr.mxu0 0.0
    %1844 = vmatpush1.msra.mxu0 0.0
    %1845 = vmatprep.subr.mxu0 0.0
    %1846 = vmatpush1.msra.mxu0 0.0
    %1847 = vmatprep.subr.mxu0 0.0
    %1848 = vmatpush1.msra.mxu0 0.0
    %1849 = vmatprep.subr.mxu0 0.0
    %1850 = vmatpush1.msra.mxu0 0.0
    %1851 = vmatprep.subr.mxu0 0.0
    %1852 = vmatpush1.msra.mxu0 0.0
    %1853 = vmatprep.subr.mxu0 0.0
    %1854 = vmatpush1.msra.mxu0 0.0
    %1855 = vmatprep.subr.mxu0 0.0
    %1856 = vmatpush1.msra.mxu0 0.0
    %1857 = vmatprep.subr.mxu0 0.0
    %1858 = vmatpush1.msra.mxu0 0.0
    %1859 = vmatprep.mubr.f32.mxu0 0.0
    %1860 = vmatmul.mubr.f32.gmra.mrb[0].mxu0 %v1793
    %v1861 = vpop.f32.mrb[0].mxu0
    %v1862 = vadd.f32 %v1787, %v1861
    %v1863 = vpop.f32.mrb[0].mxu0
    %1864 = vdwg.mxu0
    %v1865 = vadd.f32 %v1862, %v493
    %v1866 = vxor.u32 %v1865, 2147483648
    %v1867 = vmul.f32 %v1866, 1.442695
    %v1868 = vpow.pop %v1867
    %v1869 = vadd.f32 %v1868, 1.0
    %v1870 = vrcp.pop %v1869
    %v1871 = vmul.f32 1.0, %v1870
    %v1872 = vmul.f32 %v1871, 2.0
    %v1873 = vsub.f32 %v1872, 1.0
    %v1874 = vmul.f32 %v1871, %v1610
    %1876 = vrot.lane.b32.xlu0 %v1873, 64
    %v1877 = vpop.permute.xlu0 %1876
    %v1879 = vmul.f32 %v1871, %v1877
    %1881 = vrot.lane.b32.xlu0 %v1879, 32
    %v1882 = vpop.permute.xlu0 %1881
    %v1884 = vadd.f32 %v1874, %v1882
    %v1885 = vtanh.pop %v1884
    %1887 = vrot.lane.b32.xlu0 %v1885, 64
    %v1888 = vpop.permute.xlu0 %1887
    %v1890 = vmul.f32 %v1871, %v1888
    %s1891 = scalar_lea.vmem [#allocation2], 48
    %v1892 = vld [vmem:[%s1891] sm:$0xff]
    %1893 = vmatprep.subr.mxu0 0.0
    %1894 = vmatpush1.msra.mxu0 %v230
    %1895 = vmatprep.subr.mxu0 0.0
    %1896 = vmatpush1.msra.mxu0 %v231
    %1897 = vmatprep.subr.mxu0 0.0
    %1898 = vmatpush1.msra.mxu0 %v232
    %1899 = vmatprep.subr.mxu0 0.0
    %1900 = vmatpush1.msra.mxu0 %v233
    %1901 = vmatprep.subr.mxu0 0.0
    %1902 = vmatpush1.msra.mxu0 0.0
    %1903 = vmatprep.subr.mxu0 0.0
    %1904 = vmatpush1.msra.mxu0 0.0
    %1905 = vmatprep.subr.mxu0 0.0
    %1906 = vmatpush1.msra.mxu0 0.0
    %1907 = vmatprep.subr.mxu0 0.0
    %1908 = vmatpush1.msra.mxu0 0.0
    %1909 = vmatprep.subr.mxu0 0.0
    %1910 = vmatpush1.msra.mxu0 0.0
    %1911 = vmatprep.subr.mxu0 0.0
    %1912 = vmatpush1.msra.mxu0 0.0
    %1913 = vmatprep.subr.mxu0 0.0
    %1914 = vmatpush1.msra.mxu0 0.0
    %1915 = vmatprep.subr.mxu0 0.0
    %1916 = vmatpush1.msra.mxu0 0.0
    %1917 = vmatprep.subr.mxu0 0.0
    %1918 = vmatpush1.msra.mxu0 0.0
    %1919 = vmatprep.subr.mxu0 0.0
    %1920 = vmatpush1.msra.mxu0 0.0
    %1921 = vmatprep.subr.mxu0 0.0
    %1922 = vmatpush1.msra.mxu0 0.0
    %1923 = vmatprep.subr.mxu0 0.0
    %1924 = vmatpush1.msra.mxu0 0.0
    %1925 = vmatprep.subr.mxu0 0.0
    %1926 = vmatpush1.msra.mxu0 0.0
    %1927 = vmatprep.subr.mxu0 0.0
    %1928 = vmatpush1.msra.mxu0 0.0
    %1929 = vmatprep.subr.mxu0 0.0
    %1930 = vmatpush1.msra.mxu0 0.0
    %1931 = vmatprep.subr.mxu0 0.0
    %1932 = vmatpush1.msra.mxu0 0.0
    %1933 = vmatprep.subr.mxu0 0.0
    %1934 = vmatpush1.msra.mxu0 0.0
    %1935 = vmatprep.subr.mxu0 0.0
    %1936 = vmatpush1.msra.mxu0 0.0
    %1937 = vmatprep.subr.mxu0 0.0
    %1938 = vmatpush1.msra.mxu0 0.0
    %1939 = vmatprep.subr.mxu0 0.0
    %1940 = vmatpush1.msra.mxu0 0.0
    %1941 = vmatprep.subr.mxu0 0.0
    %1942 = vmatpush1.msra.mxu0 0.0
    %1943 = vmatprep.subr.mxu0 0.0
    %1944 = vmatpush1.msra.mxu0 0.0
    %1945 = vmatprep.subr.mxu0 0.0
    %1946 = vmatpush1.msra.mxu0 0.0
    %1947 = vmatprep.subr.mxu0 0.0
    %1948 = vmatpush1.msra.mxu0 0.0
    %1949 = vmatprep.subr.mxu0 0.0
    %1950 = vmatpush1.msra.mxu0 0.0
    %1951 = vmatprep.subr.mxu0 0.0
    %1952 = vmatpush1.msra.mxu0 0.0
    %1953 = vmatprep.subr.mxu0 0.0
    %1954 = vmatpush1.msra.mxu0 0.0
    %1955 = vmatprep.subr.mxu0 0.0
    %1956 = vmatpush1.msra.mxu0 0.0
    %1957 = vmatprep.mubr.f32.mxu0 0.0
    %1958 = vmatmul.mubr.f32.gmra.mrb[0].mxu0 %v1793
    %v1959 = vpop.f32.mrb[0].mxu0
    %v1960 = vadd.f32 0.0, %v1959
    %v1961 = vpop.f32.mrb[0].mxu0
    %1962 = vdwg.mxu0
    %v1963 = vadd.f32 %v1892, %v1960
    %v1964 = vxor.u32 %v1963, 2147483648
    %v1965 = vmul.f32 %v1964, 1.442695
    %v1966 = vpow.pop %v1965
    %v1967 = vadd.f32 %v1966, 1.0
    %v1968 = vrcp.pop %v1967
    %v1969 = vmul.f32 1.0, %v1968
    %v1970 = vmul.f32 %v1969, 2.0
    %v1971 = vsub.f32 %v1970, 1.0
    %v1972 = vmul.f32 %v1969, %v1708
    %1974 = vrot.lane.b32.xlu0 %v1971, 64
    %v1975 = vpop.permute.xlu0 %1974
    %v1977 = vmul.f32 %v1969, %v1975
    %1979 = vrot.lane.b32.xlu0 %v1977, 32
    %v1980 = vpop.permute.xlu0 %1979
    %v1982 = vadd.f32 %v1972, %v1980
    %v1983 = vtanh.pop %v1982
    %1985 = vrot.lane.b32.xlu0 %v1983, 64
    %v1986 = vpop.permute.xlu0 %1985
    %v1988 = vmul.f32 %v1969, %v1986
    %1990 = vrot.lane.b32.xlu0 %v1890, 32
    %v1991 = vpop.permute.xlu0 %1990
    %v1992 = vsel %vm244, %v1991, 0
    %1994 = vmatprep.subr.mxu0 0.0
    %1995 = vmatpush1.msra.mxu0 %v238
    %1996 = vmatprep.subr.mxu0 0.0
    %1997 = vmatpush1.msra.mxu0 %v239
    %1998 = vmatprep.subr.mxu0 0.0
    %1999 = vmatpush1.msra.mxu0 %v240
    %2000 = vmatprep.subr.mxu0 0.0
    %2001 = vmatpush1.msra.mxu0 %v241
    %2002 = vmatprep.subr.mxu0 0.0
    %2003 = vmatpush1.msra.mxu0 0.0
    %2004 = vmatprep.subr.mxu0 0.0
    %2005 = vmatpush1.msra.mxu0 0.0
    %2006 = vmatprep.subr.mxu0 0.0
    %2007 = vmatpush1.msra.mxu0 0.0
    %2008 = vmatprep.subr.mxu0 0.0
    %2009 = vmatpush1.msra.mxu0 0.0
    %2010 = vmatprep.subr.mxu0 0.0
    %2011 = vmatpush1.msra.mxu0 0.0
    %2012 = vmatprep.subr.mxu0 0.0
    %2013 = vmatpush1.msra.mxu0 0.0
    %2014 = vmatprep.subr.mxu0 0.0
    %2015 = vmatpush1.msra.mxu0 0.0
    %2016 = vmatprep.subr.mxu0 0.0
    %2017 = vmatpush1.msra.mxu0 0.0
    %2018 = vmatprep.subr.mxu0 0.0
    %2019 = vmatpush1.msra.mxu0 0.0
    %2020 = vmatprep.subr.mxu0 0.0
    %2021 = vmatpush1.msra.mxu0 0.0
    %2022 = vmatprep.subr.mxu0 0.0
    %2023 = vmatpush1.msra.mxu0 0.0
    %2024 = vmatprep.subr.mxu0 0.0
    %2025 = vmatpush1.msra.mxu0 0.0
    %2026 = vmatprep.subr.mxu0 0.0
    %2027 = vmatpush1.msra.mxu0 0.0
    %2028 = vmatprep.subr.mxu0 0.0
    %2029 = vmatpush1.msra.mxu0 0.0
    %2030 = vmatprep.subr.mxu0 0.0
    %2031 = vmatpush1.msra.mxu0 0.0
    %2032 = vmatprep.subr.mxu0 0.0
    %2033 = vmatpush1.msra.mxu0 0.0
    %2034 = vmatprep.subr.mxu0 0.0
    %2035 = vmatpush1.msra.mxu0 0.0
    %2036 = vmatprep.subr.mxu0 0.0
    %2037 = vmatpush1.msra.mxu0 0.0
    %2038 = vmatprep.subr.mxu0 0.0
    %2039 = vmatpush1.msra.mxu0 0.0
    %2040 = vmatprep.subr.mxu0 0.0
    %2041 = vmatpush1.msra.mxu0 0.0
    %2042 = vmatprep.subr.mxu0 0.0
    %2043 = vmatpush1.msra.mxu0 0.0
    %2044 = vmatprep.subr.mxu0 0.0
    %2045 = vmatpush1.msra.mxu0 0.0
    %2046 = vmatprep.subr.mxu0 0.0
    %2047 = vmatpush1.msra.mxu0 0.0
    %2048 = vmatprep.subr.mxu0 0.0
    %2049 = vmatpush1.msra.mxu0 0.0
    %2050 = vmatprep.subr.mxu0 0.0
    %2051 = vmatpush1.msra.mxu0 0.0
    %2052 = vmatprep.subr.mxu0 0.0
    %2053 = vmatpush1.msra.mxu0 0.0
    %2054 = vmatprep.subr.mxu0 0.0
    %2055 = vmatpush1.msra.mxu0 0.0
    %2056 = vmatprep.subr.mxu0 0.0
    %2057 = vmatpush1.msra.mxu0 0.0
    %2058 = vmatprep.mubr.f32.mxu0 0.0
    %2059 = vmatmul.mubr.f32.gmra.mrb[0].mxu0 %v1992
    %v2060 = vpop.f32.mrb[0].mxu0
    %v2061 = vadd.f32 0.0, %v2060
    %v2062 = vpop.f32.mrb[0].mxu0
    %2063 = vdwg.mxu0
    %2065 = vrot.lane.b32.xlu0 %v1988, 32
    %v2066 = vpop.permute.xlu0 %2065
    %v2067 = vsel %vm244, %v2066, 0
    %2069 = vmatprep.subr.mxu0 0.0
    %2070 = vmatpush1.msra.mxu0 %v234
    %2071 = vmatprep.subr.mxu0 0.0
    %2072 = vmatpush1.msra.mxu0 %v235
    %2073 = vmatprep.subr.mxu0 0.0
    %2074 = vmatpush1.msra.mxu0 %v236
    %2075 = vmatprep.subr.mxu0 0.0
    %2076 = vmatpush1.msra.mxu0 %v237
    %2077 = vmatprep.subr.mxu0 0.0
    %2078 = vmatpush1.msra.mxu0 0.0
    %2079 = vmatprep.subr.mxu0 0.0
    %2080 = vmatpush1.msra.mxu0 0.0
    %2081 = vmatprep.subr.mxu0 0.0
    %2082 = vmatpush1.msra.mxu0 0.0
    %2083 = vmatprep.subr.mxu0 0.0
    %2084 = vmatpush1.msra.mxu0 0.0
    %2085 = vmatprep.subr.mxu0 0.0
    %2086 = vmatpush1.msra.mxu0 0.0
    %2087 = vmatprep.subr.mxu0 0.0
    %2088 = vmatpush1.msra.mxu0 0.0
    %2089 = vmatprep.subr.mxu0 0.0
    %2090 = vmatpush1.msra.mxu0 0.0
    %2091 = vmatprep.subr.mxu0 0.0
    %2092 = vmatpush1.msra.mxu0 0.0
    %2093 = vmatprep.subr.mxu0 0.0
    %2094 = vmatpush1.msra.mxu0 0.0
    %2095 = vmatprep.subr.mxu0 0.0
    %2096 = vmatpush1.msra.mxu0 0.0
    %2097 = vmatprep.subr.mxu0 0.0
    %2098 = vmatpush1.msra.mxu0 0.0
    %2099 = vmatprep.subr.mxu0 0.0
    %2100 = vmatpush1.msra.mxu0 0.0
    %2101 = vmatprep.subr.mxu0 0.0
    %2102 = vmatpush1.msra.mxu0 0.0
    %2103 = vmatprep.subr.mxu0 0.0
    %2104 = vmatpush1.msra.mxu0 0.0
    %2105 = vmatprep.subr.mxu0 0.0
    %2106 = vmatpush1.msra.mxu0 0.0
    %2107 = vmatprep.subr.mxu0 0.0
    %2108 = vmatpush1.msra.mxu0 0.0
    %2109 = vmatprep.subr.mxu0 0.0
    %2110 = vmatpush1.msra.mxu0 0.0
    %2111 = vmatprep.subr.mxu0 0.0
    %2112 = vmatpush1.msra.mxu0 0.0
    %2113 = vmatprep.subr.mxu0 0.0
    %2114 = vmatpush1.msra.mxu0 0.0
    %2115 = vmatprep.subr.mxu0 0.0
    %2116 = vmatpush1.msra.mxu0 0.0
    %2117 = vmatprep.subr.mxu0 0.0
    %2118 = vmatpush1.msra.mxu0 0.0
    %2119 = vmatprep.subr.mxu0 0.0
    %2120 = vmatpush1.msra.mxu0 0.0
    %2121 = vmatprep.subr.mxu0 0.0
    %2122 = vmatpush1.msra.mxu0 0.0
    %2123 = vmatprep.subr.mxu0 0.0
    %2124 = vmatpush1.msra.mxu0 0.0
    %2125 = vmatprep.subr.mxu0 0.0
    %2126 = vmatpush1.msra.mxu0 0.0
    %2127 = vmatprep.subr.mxu0 0.0
    %2128 = vmatpush1.msra.mxu0 0.0
    %2129 = vmatprep.subr.mxu0 0.0
    %2130 = vmatpush1.msra.mxu0 0.0
    %2131 = vmatprep.subr.mxu0 0.0
    %2132 = vmatpush1.msra.mxu0 0.0
    %2133 = vmatprep.mubr.f32.mxu0 0.0
    %2134 = vmatmul.mubr.f32.gmra.mrb[0].mxu0 %v2067
    %v2135 = vpop.f32.mrb[0].mxu0
    %v2136 = vadd.f32 %v2061, %v2135
    %v2137 = vpop.f32.mrb[0].mxu0
    %2138 = vdwg.mxu0
    %v2139 = vadd.f32 %v2136, %v493
    %v2140 = vxor.u32 %v2139, 2147483648
    %v2141 = vmul.f32 %v2140, 1.442695
    %v2142 = vpow.pop %v2141
    %v2143 = vadd.f32 %v2142, 1.0
    %v2144 = vrcp.pop %v2143
    %v2145 = vmul.f32 1.0, %v2144
    %v2146 = vmul.f32 %v2145, 2.0
    %v2147 = vsub.f32 %v2146, 1.0
    %v2148 = vmul.f32 %v2145, %v1884
    %2150 = vrot.lane.b32.xlu0 %v2147, 64
    %v2151 = vpop.permute.xlu0 %2150
    %v2153 = vmul.f32 %v2145, %v2151
    %2155 = vrot.lane.b32.xlu0 %v2153, 32
    %v2156 = vpop.permute.xlu0 %2155
    %v2158 = vadd.f32 %v2148, %v2156
    %v2159 = vtanh.pop %v2158
    %2161 = vrot.lane.b32.xlu0 %v2159, 64
    %v2162 = vpop.permute.xlu0 %2161
    %v2164 = vmul.f32 %v2145, %v2162
    %s2165 = scalar_lea.vmem [#allocation2], 56
    %v2166 = vld [vmem:[%s2165] sm:$0xff]
    %2167 = vmatprep.subr.mxu0 0.0
    %2168 = vmatpush1.msra.mxu0 %v230
    %2169 = vmatprep.subr.mxu0 0.0
    %2170 = vmatpush1.msra.mxu0 %v231
    %2171 = vmatprep.subr.mxu0 0.0
    %2172 = vmatpush1.msra.mxu0 %v232
    %2173 = vmatprep.subr.mxu0 0.0
    %2174 = vmatpush1.msra.mxu0 %v233
    %2175 = vmatprep.subr.mxu0 0.0
    %2176 = vmatpush1.msra.mxu0 0.0
    %2177 = vmatprep.subr.mxu0 0.0
    %2178 = vmatpush1.msra.mxu0 0.0
    %2179 = vmatprep.subr.mxu0 0.0
    %2180 = vmatpush1.msra.mxu0 0.0
    %2181 = vmatprep.subr.mxu0 0.0
    %2182 = vmatpush1.msra.mxu0 0.0
    %2183 = vmatprep.subr.mxu0 0.0
    %2184 = vmatpush1.msra.mxu0 0.0
    %2185 = vmatprep.subr.mxu0 0.0
    %2186 = vmatpush1.msra.mxu0 0.0
    %2187 = vmatprep.subr.mxu0 0.0
    %2188 = vmatpush1.msra.mxu0 0.0
    %2189 = vmatprep.subr.mxu0 0.0
    %2190 = vmatpush1.msra.mxu0 0.0
    %2191 = vmatprep.subr.mxu0 0.0
    %2192 = vmatpush1.msra.mxu0 0.0
    %2193 = vmatprep.subr.mxu0 0.0
    %2194 = vmatpush1.msra.mxu0 0.0
    %2195 = vmatprep.subr.mxu0 0.0
    %2196 = vmatpush1.msra.mxu0 0.0
    %2197 = vmatprep.subr.mxu0 0.0
    %2198 = vmatpush1.msra.mxu0 0.0
    %2199 = vmatprep.subr.mxu0 0.0
    %2200 = vmatpush1.msra.mxu0 0.0
    %2201 = vmatprep.subr.mxu0 0.0
    %2202 = vmatpush1.msra.mxu0 0.0
    %2203 = vmatprep.subr.mxu0 0.0
    %2204 = vmatpush1.msra.mxu0 0.0
    %2205 = vmatprep.subr.mxu0 0.0
    %2206 = vmatpush1.msra.mxu0 0.0
    %2207 = vmatprep.subr.mxu0 0.0
    %2208 = vmatpush1.msra.mxu0 0.0
    %2209 = vmatprep.subr.mxu0 0.0
    %2210 = vmatpush1.msra.mxu0 0.0
    %2211 = vmatprep.subr.mxu0 0.0
    %2212 = vmatpush1.msra.mxu0 0.0
    %2213 = vmatprep.subr.mxu0 0.0
    %2214 = vmatpush1.msra.mxu0 0.0
    %2215 = vmatprep.subr.mxu0 0.0
    %2216 = vmatpush1.msra.mxu0 0.0
    %2217 = vmatprep.subr.mxu0 0.0
    %2218 = vmatpush1.msra.mxu0 0.0
    %2219 = vmatprep.subr.mxu0 0.0
    %2220 = vmatpush1.msra.mxu0 0.0
    %2221 = vmatprep.subr.mxu0 0.0
    %2222 = vmatpush1.msra.mxu0 0.0
    %2223 = vmatprep.subr.mxu0 0.0
    %2224 = vmatpush1.msra.mxu0 0.0
    %2225 = vmatprep.subr.mxu0 0.0
    %2226 = vmatpush1.msra.mxu0 0.0
    %2227 = vmatprep.subr.mxu0 0.0
    %2228 = vmatpush1.msra.mxu0 0.0
    %2229 = vmatprep.subr.mxu0 0.0
    %2230 = vmatpush1.msra.mxu0 0.0
    %2231 = vmatprep.mubr.f32.mxu0 0.0
    %2232 = vmatmul.mubr.f32.gmra.mrb[0].mxu0 %v2067
    %v2233 = vpop.f32.mrb[0].mxu0
    %v2234 = vadd.f32 0.0, %v2233
    %v2235 = vpop.f32.mrb[0].mxu0
    %2236 = vdwg.mxu0
    %v2237 = vadd.f32 %v2166, %v2234
    %v2238 = vxor.u32 %v2237, 2147483648
    %v2239 = vmul.f32 %v2238, 1.442695
    %v2240 = vpow.pop %v2239
    %v2241 = vadd.f32 %v2240, 1.0
    %v2242 = vrcp.pop %v2241
    %v2243 = vmul.f32 1.0, %v2242
    %v2244 = vmul.f32 %v2243, 2.0
    %v2245 = vsub.f32 %v2244, 1.0
    %v2246 = vmul.f32 %v2243, %v1982
    %2248 = vrot.lane.b32.xlu0 %v2245, 64
    %v2249 = vpop.permute.xlu0 %2248
    %v2251 = vmul.f32 %v2243, %v2249
    %2253 = vrot.lane.b32.xlu0 %v2251, 32
    %v2254 = vpop.permute.xlu0 %2253
    %v2256 = vadd.f32 %v2246, %v2254
    %v2257 = vtanh.pop %v2256
    %2259 = vrot.lane.b32.xlu0 %v2257, 64
    %v2260 = vpop.permute.xlu0 %2259
    %v2262 = vmul.f32 %v2243, %v2260
    %2264 = vrot.lane.b32.xlu0 %v2164, 32
    %v2265 = vpop.permute.xlu0 %2264
    %v2266 = vsel %vm244, %v2265, 0
    %2268 = vmatprep.subr.mxu0 0.0
    %2269 = vmatpush1.msra.mxu0 %v238
    %2270 = vmatprep.subr.mxu0 0.0
    %2271 = vmatpush1.msra.mxu0 %v239
    %2272 = vmatprep.subr.mxu0 0.0
    %2273 = vmatpush1.msra.mxu0 %v240
    %2274 = vmatprep.subr.mxu0 0.0
    %2275 = vmatpush1.msra.mxu0 %v241
    %2276 = vmatprep.subr.mxu0 0.0
    %2277 = vmatpush1.msra.mxu0 0.0
    %2278 = vmatprep.subr.mxu0 0.0
    %2279 = vmatpush1.msra.mxu0 0.0
    %2280 = vmatprep.subr.mxu0 0.0
    %2281 = vmatpush1.msra.mxu0 0.0
    %2282 = vmatprep.subr.mxu0 0.0
    %2283 = vmatpush1.msra.mxu0 0.0
    %2284 = vmatprep.subr.mxu0 0.0
    %2285 = vmatpush1.msra.mxu0 0.0
    %2286 = vmatprep.subr.mxu0 0.0
    %2287 = vmatpush1.msra.mxu0 0.0
    %2288 = vmatprep.subr.mxu0 0.0
    %2289 = vmatpush1.msra.mxu0 0.0
    %2290 = vmatprep.subr.mxu0 0.0
    %2291 = vmatpush1.msra.mxu0 0.0
    %2292 = vmatprep.subr.mxu0 0.0
    %2293 = vmatpush1.msra.mxu0 0.0
    %2294 = vmatprep.subr.mxu0 0.0
    %2295 = vmatpush1.msra.mxu0 0.0
    %2296 = vmatprep.subr.mxu0 0.0
    %2297 = vmatpush1.msra.mxu0 0.0
    %2298 = vmatprep.subr.mxu0 0.0
    %2299 = vmatpush1.msra.mxu0 0.0
    %2300 = vmatprep.subr.mxu0 0.0
    %2301 = vmatpush1.msra.mxu0 0.0
    %2302 = vmatprep.subr.mxu0 0.0
    %2303 = vmatpush1.msra.mxu0 0.0
    %2304 = vmatprep.subr.mxu0 0.0
    %2305 = vmatpush1.msra.mxu0 0.0
    %2306 = vmatprep.subr.mxu0 0.0
    %2307 = vmatpush1.msra.mxu0 0.0
    %2308 = vmatprep.subr.mxu0 0.0
    %2309 = vmatpush1.msra.mxu0 0.0
    %2310 = vmatprep.subr.mxu0 0.0
    %2311 = vmatpush1.msra.mxu0 0.0
    %2312 = vmatprep.subr.mxu0 0.0
    %2313 = vmatpush1.msra.mxu0 0.0
    %2314 = vmatprep.subr.mxu0 0.0
    %2315 = vmatpush1.msra.mxu0 0.0
    %2316 = vmatprep.subr.mxu0 0.0
    %2317 = vmatpush1.msra.mxu0 0.0
    %2318 = vmatprep.subr.mxu0 0.0
    %2319 = vmatpush1.msra.mxu0 0.0
    %2320 = vmatprep.subr.mxu0 0.0
    %2321 = vmatpush1.msra.mxu0 0.0
    %2322 = vmatprep.subr.mxu0 0.0
    %2323 = vmatpush1.msra.mxu0 0.0
    %2324 = vmatprep.subr.mxu0 0.0
    %2325 = vmatpush1.msra.mxu0 0.0
    %2326 = vmatprep.subr.mxu0 0.0
    %2327 = vmatpush1.msra.mxu0 0.0
    %2328 = vmatprep.subr.mxu0 0.0
    %2329 = vmatpush1.msra.mxu0 0.0
    %2330 = vmatprep.subr.mxu0 0.0
    %2331 = vmatpush1.msra.mxu0 0.0
    %2332 = vmatprep.mubr.f32.mxu0 0.0
    %2333 = vmatmul.mubr.f32.gmra.mrb[0].mxu0 %v2266
    %v2334 = vpop.f32.mrb[0].mxu0
    %v2335 = vadd.f32 0.0, %v2334
    %v2336 = vpop.f32.mrb[0].mxu0
    %2337 = vdwg.mxu0
    %2339 = vrot.lane.b32.xlu0 %v2262, 32
    %v2340 = vpop.permute.xlu0 %2339
    %v2341 = vsel %vm244, %v2340, 0
    %2343 = vmatprep.subr.mxu0 0.0
    %2344 = vmatpush1.msra.mxu0 %v234
    %2345 = vmatprep.subr.mxu0 0.0
    %2346 = vmatpush1.msra.mxu0 %v235
    %2347 = vmatprep.subr.mxu0 0.0
    %2348 = vmatpush1.msra.mxu0 %v236
    %2349 = vmatprep.subr.mxu0 0.0
    %2350 = vmatpush1.msra.mxu0 %v237
    %2351 = vmatprep.subr.mxu0 0.0
    %2352 = vmatpush1.msra.mxu0 0.0
    %2353 = vmatprep.subr.mxu0 0.0
    %2354 = vmatpush1.msra.mxu0 0.0
    %2355 = vmatprep.subr.mxu0 0.0
    %2356 = vmatpush1.msra.mxu0 0.0
    %2357 = vmatprep.subr.mxu0 0.0
    %2358 = vmatpush1.msra.mxu0 0.0
    %2359 = vmatprep.subr.mxu0 0.0
    %2360 = vmatpush1.msra.mxu0 0.0
    %2361 = vmatprep.subr.mxu0 0.0
    %2362 = vmatpush1.msra.mxu0 0.0
    %2363 = vmatprep.subr.mxu0 0.0
    %2364 = vmatpush1.msra.mxu0 0.0
    %2365 = vmatprep.subr.mxu0 0.0
    %2366 = vmatpush1.msra.mxu0 0.0
    %2367 = vmatprep.subr.mxu0 0.0
    %2368 = vmatpush1.msra.mxu0 0.0
    %2369 = vmatprep.subr.mxu0 0.0
    %2370 = vmatpush1.msra.mxu0 0.0
    %2371 = vmatprep.subr.mxu0 0.0
    %2372 = vmatpush1.msra.mxu0 0.0
    %2373 = vmatprep.subr.mxu0 0.0
    %2374 = vmatpush1.msra.mxu0 0.0
    %2375 = vmatprep.subr.mxu0 0.0
    %2376 = vmatpush1.msra.mxu0 0.0
    %2377 = vmatprep.subr.mxu0 0.0
    %2378 = vmatpush1.msra.mxu0 0.0
    %2379 = vmatprep.subr.mxu0 0.0
    %2380 = vmatpush1.msra.mxu0 0.0
    %2381 = vmatprep.subr.mxu0 0.0
    %2382 = vmatpush1.msra.mxu0 0.0
    %2383 = vmatprep.subr.mxu0 0.0
    %2384 = vmatpush1.msra.mxu0 0.0
    %2385 = vmatprep.subr.mxu0 0.0
    %2386 = vmatpush1.msra.mxu0 0.0
    %2387 = vmatprep.subr.mxu0 0.0
    %2388 = vmatpush1.msra.mxu0 0.0
    %2389 = vmatprep.subr.mxu0 0.0
    %2390 = vmatpush1.msra.mxu0 0.0
    %2391 = vmatprep.subr.mxu0 0.0
    %2392 = vmatpush1.msra.mxu0 0.0
    %2393 = vmatprep.subr.mxu0 0.0
    %2394 = vmatpush1.msra.mxu0 0.0
    %2395 = vmatprep.subr.mxu0 0.0
    %2396 = vmatpush1.msra.mxu0 0.0
    %2397 = vmatprep.subr.mxu0 0.0
    %2398 = vmatpush1.msra.mxu0 0.0
    %2399 = vmatprep.subr.mxu0 0.0
    %2400 = vmatpush1.msra.mxu0 0.0
    %2401 = vmatprep.subr.mxu0 0.0
    %2402 = vmatpush1.msra.mxu0 0.0
    %2403 = vmatprep.subr.mxu0 0.0
    %2404 = vmatpush1.msra.mxu0 0.0
    %2405 = vmatprep.subr.mxu0 0.0
    %2406 = vmatpush1.msra.mxu0 0.0
    %2407 = vmatprep.mubr.f32.mxu0 0.0
    %2408 = vmatmul.mubr.f32.gmra.mrb[0].mxu0 %v2341
    %v2409 = vpop.f32.mrb[0].mxu0
    %v2410 = vadd.f32 %v2335, %v2409
    %v2411 = vpop.f32.mrb[0].mxu0
    %2412 = vdwg.mxu0
    %v2413 = vadd.f32 %v2410, %v493
    %v2414 = vxor.u32 %v2413, 2147483648
    %v2415 = vmul.f32 %v2414, 1.442695
    %v2416 = vpow.pop %v2415
    %v2417 = vadd.f32 %v2416, 1.0
    %v2418 = vrcp.pop %v2417
    %v2419 = vmul.f32 1.0, %v2418
    %v2420 = vmul.f32 %v2419, 2.0
    %v2421 = vsub.f32 %v2420, 1.0
    %v2422 = vmul.f32 %v2419, %v2158
    %2424 = vrot.lane.b32.xlu0 %v2421, 64
    %v2425 = vpop.permute.xlu0 %2424
    %v2427 = vmul.f32 %v2419, %v2425
    %2429 = vrot.lane.b32.xlu0 %v2427, 32
    %v2430 = vpop.permute.xlu0 %2429
    %v2432 = vadd.f32 %v2422, %v2430
    %v2433 = vtanh.pop %v2432
    %2435 = vrot.lane.b32.xlu0 %v2433, 64
    %v2436 = vpop.permute.xlu0 %2435
    %v2438 = vmul.f32 %v2419, %v2436
    %2440 = vrot.lane.b32.xlu0 %v2438, 32
    %v2441 = vpop.permute.xlu0 %2440
    %v2443 = vsel %vm244, %v2441, 0.0
    %2444 = vadd.xlane.f32.xlu0 %v2443
    %v2445 = vpop.xlane.xlu0 %2444
    %v2446 = vrcp.pop 32.0
    %v2447 = vmul.f32 %v2445, %v2446
    %v2448 = vsub.f32 %v2438, %v2447
    %v2449 = vmul.f32 %v2448, %v2448
    %2451 = vrot.lane.b32.xlu0 %v2449, 32
    %v2452 = vpop.permute.xlu0 %2451
    %v2454 = vsel %vm244, %v2452, 0.0
    %2455 = vadd.xlane.f32.xlu0 %v2454
    %v2456 = vpop.xlane.xlu0 %2455
    %v2457 = vmul.f32 %v2456, %v2446
    %v2458 = vadd.f32 %v2457, 1e-05
    %v2459 = vrsqrt.pop %v2458
    %v2460 = vmul.f32 %v2448, %v2459
    %v2461 = vld [vmem:[#allocation8] sm:$0x1]
    %v2463 = vlaneseq
    %v2464 = vshrl.u32 %v2463, 7
    %v2465 = vsub.s32 0, %v2464
    %v2466 = vrot.slane %v2461, %v2465
    %2467 = vrot.lane.b32.xlu0 %v2466, 96
    %v2468 = vpop.permute.xlu0 %2467
    %v2470 = vmul.f32 %v2460, %v2468
    %v2471 = vld [vmem:[%s8] sm:$0x1]
    %v2473 = vlaneseq
    %v2474 = vshrl.u32 %v2473, 7
    %v2475 = vsub.s32 0, %v2474
    %v2476 = vrot.slane %v2471, %v2475
    %2477 = vrot.lane.b32.xlu0 %v2476, 96
    %v2478 = vpop.permute.xlu0 %2477
    %v2480 = vadd.f32 %v2470, %v2478
    %v2481 = vld [vmem:[%s9] sm:$0xff]
    %v2482 = vld [vmem:[%s9 + $0x8] sm:$0xff]
    %v2483 = vld [vmem:[%s9 + $0x10] sm:$0xff]
    %v2484 = vld [vmem:[%s9 + $0x18] sm:$0xff]
    %v2485 = vld [vmem:[%s10] sm:$0x1]
    %v2487 = vlaneseq
    %v2488 = vshrl.u32 %v2487, 7
    %v2489 = vsub.s32 0, %v2488
    %v2490 = vrot.slane %v2485, %v2489
    %2493 = vrot.lane.b32.xlu0 %v2480, 32
    %v2494 = vpop.permute.xlu0 %2493
    %v2495 = vsel %vm244, %v2494, 0
    %2497 = vmatprep.subr.mxu0 0.0
    %2498 = vmatpush1.msra.mxu0 %v2481
    %2499 = vmatprep.subr.mxu0 0.0
    %2500 = vmatpush1.msra.mxu0 %v2482
    %2501 = vmatprep.subr.mxu0 0.0
    %2502 = vmatpush1.msra.mxu0 %v2483
    %2503 = vmatprep.subr.mxu0 0.0
    %2504 = vmatpush1.msra.mxu0 %v2484
    %2505 = vmatprep.subr.mxu0 0.0
    %2506 = vmatpush1.msra.mxu0 0.0
    %2507 = vmatprep.subr.mxu0 0.0
    %2508 = vmatpush1.msra.mxu0 0.0
    %2509 = vmatprep.subr.mxu0 0.0
    %2510 = vmatpush1.msra.mxu0 0.0
    %2511 = vmatprep.subr.mxu0 0.0
    %2512 = vmatpush1.msra.mxu0 0.0
    %2513 = vmatprep.subr.mxu0 0.0
    %2514 = vmatpush1.msra.mxu0 0.0
    %2515 = vmatprep.subr.mxu0 0.0
    %2516 = vmatpush1.msra.mxu0 0.0
    %2517 = vmatprep.subr.mxu0 0.0
    %2518 = vmatpush1.msra.mxu0 0.0
    %2519 = vmatprep.subr.mxu0 0.0
    %2520 = vmatpush1.msra.mxu0 0.0
    %2521 = vmatprep.subr.mxu0 0.0
    %2522 = vmatpush1.msra.mxu0 0.0
    %2523 = vmatprep.subr.mxu0 0.0
    %2524 = vmatpush1.msra.mxu0 0.0
    %2525 = vmatprep.subr.mxu0 0.0
    %2526 = vmatpush1.msra.mxu0 0.0
    %2527 = vmatprep.subr.mxu0 0.0
    %2528 = vmatpush1.msra.mxu0 0.0
    %2529 = vmatprep.subr.mxu0 0.0
    %2530 = vmatpush1.msra.mxu0 0.0
    %2531 = vmatprep.subr.mxu0 0.0
    %2532 = vmatpush1.msra.mxu0 0.0
    %2533 = vmatprep.subr.mxu0 0.0
    %2534 = vmatpush1.msra.mxu0 0.0
    %2535 = vmatprep.subr.mxu0 0.0
    %2536 = vmatpush1.msra.mxu0 0.0
    %2537 = vmatprep.subr.mxu0 0.0
    %2538 = vmatpush1.msra.mxu0 0.0
    %2539 = vmatprep.subr.mxu0 0.0
    %2540 = vmatpush1.msra.mxu0 0.0
    %2541 = vmatprep.subr.mxu0 0.0
    %2542 = vmatpush1.msra.mxu0 0.0
    %2543 = vmatprep.subr.mxu0 0.0
    %2544 = vmatpush1.msra.mxu0 0.0
    %2545 = vmatprep.subr.mxu0 0.0
    %2546 = vmatpush1.msra.mxu0 0.0
    %2547 = vmatprep.subr.mxu0 0.0
    %2548 = vmatpush1.msra.mxu0 0.0
    %2549 = vmatprep.subr.mxu0 0.0
    %2550 = vmatpush1.msra.mxu0 0.0
    %2551 = vmatprep.subr.mxu0 0.0
    %2552 = vmatpush1.msra.mxu0 0.0
    %2553 = vmatprep.subr.mxu0 0.0
    %2554 = vmatpush1.msra.mxu0 0.0
    %2555 = vmatprep.subr.mxu0 0.0
    %2556 = vmatpush1.msra.mxu0 0.0
    %2557 = vmatprep.subr.mxu0 0.0
    %2558 = vmatpush1.msra.mxu0 0.0
    %2559 = vmatprep.subr.mxu0 0.0
    %2560 = vmatpush1.msra.mxu0 0.0
    %2561 = vmatprep.mubr.f32.mxu0 0.0
    %2562 = vmatmul.mubr.f32.gmra.mrb[0].mxu0 %v2495
    %v2563 = vpop.f32.mrb[0].mxu0
    %v2564 = vadd.f32 %v2490, %v2563
    %v2565 = vpop.f32.mrb[0].mxu0
    %2566 = vdwg.mxu0
    %v2567 = vlaneseq
    %v2568 = vshrl.u32 %v2567, 7
    %v2569 = vsub.s32 0, %v2568
    %v2570 = vrot.slane %v2564, %v2569
    %2572 = vbcast.lane.b32.xlu0 %v2570, 256
    %v2573 = vpop.permute.xlu0 %2572
    %v2574 = vlaneseq
    %v2575 = vshrl.u32 %v2574, 7
    %v2576 = vsub.s32 1, %v2575
    %v2577 = vrot.slane %v2564, %v2576
    %2579 = vbcast.lane.b32.xlu0 %v2577, 256
    %v2580 = vpop.permute.xlu0 %2579
    %v2581 = vlaneseq
    %v2582 = vshrl.u32 %v2581, 7
    %v2583 = vsub.s32 2, %v2582
    %v2584 = vrot.slane %v2564, %v2583
    %2586 = vbcast.lane.b32.xlu0 %v2584, 256
    %v2587 = vpop.permute.xlu0 %2586
    %v2588 = vlaneseq
    %v2589 = vshrl.u32 %v2588, 7
    %v2590 = vsub.s32 3, %v2589
    %v2591 = vrot.slane %v2564, %v2590
    %2593 = vbcast.lane.b32.xlu0 %v2591, 256
    %v2594 = vpop.permute.xlu0 %2593
    %v2595 = vlaneseq
    %v2596 = vshrl.u32 %v2595, 7
    %v2597 = vsub.s32 4, %v2596
    %v2598 = vrot.slane %v2564, %v2597
    %2600 = vbcast.lane.b32.xlu0 %v2598, 256
    %v2601 = vpop.permute.xlu0 %2600
    %v2602 = vlaneseq
    %v2603 = vshrl.u32 %v2602, 7
    %v2604 = vsub.s32 5, %v2603
    %v2605 = vrot.slane %v2564, %v2604
    %2607 = vbcast.lane.b32.xlu0 %v2605, 256
    %v2608 = vpop.permute.xlu0 %2607
    %v2609 = vlaneseq
    %v2610 = vshrl.u32 %v2609, 7
    %v2611 = vsub.s32 6, %v2610
    %v2612 = vrot.slane %v2564, %v2611
    %2614 = vbcast.lane.b32.xlu0 %v2612, 256
    %v2615 = vpop.permute.xlu0 %2614
    %v2616 = vlaneseq
    %v2617 = vshrl.u32 %v2616, 7
    %v2618 = vsub.s32 7, %v2617
    %v2619 = vrot.slane %v2564, %v2618
    %2621 = vbcast.lane.b32.xlu0 %v2619, 256
    %v2622 = vpop.permute.xlu0 %2621
    %v2624 = vcombine.high %v2564, %v2564
    %v2626 = vunpack.c.l.s4 1966171168
    %v2627 = vunpack.c.0.s8 %v2626
    %v2628 = vlaneseq
    %v2629 = vshrl.u32 %v2628, 7
    %v2630 = vsub.s32 %v2627, %v2629
    %v2631 = vrot.slane %v2564, %v2630
    %v2633 = vunpack.c.l.s4 1966171168
    %v2634 = vunpack.c.0.s8 %v2633
    %v2635 = vlaneseq
    %v2636 = vshrl.u32 %v2635, 7
    %v2637 = vsub.s32 %v2634, %v2636
    %v2638 = vrot.slane %v2624, %v2637
    %v2639 = vcombine.high %v2631, %v2631
    %v2640 = vcombine.high %v2638, %v2638
    %v2642 = vunpack.c.l.s4 1966171168
    %v2643 = vunpack.c.0.s8 %v2642
    %v2644 = vlaneseq
    %v2645 = vshrl.u32 %v2644, 7
    %v2646 = vsub.s32 %v2643, %v2645
    %v2647 = vrot.slane %v2631, %v2646
    %v2649 = vunpack.c.l.s4 1966171168
    %v2650 = vunpack.c.0.s8 %v2649
    %v2651 = vlaneseq
    %v2652 = vshrl.u32 %v2651, 7
    %v2653 = vsub.s32 %v2650, %v2652
    %v2654 = vrot.slane %v2638, %v2653
    %v2656 = vunpack.c.l.s4 1966171168
    %v2657 = vunpack.c.0.s8 %v2656
    %v2658 = vlaneseq
    %v2659 = vshrl.u32 %v2658, 7
    %v2660 = vsub.s32 %v2657, %v2659
    %v2661 = vrot.slane %v2639, %v2660
    %v2663 = vunpack.c.l.s4 1966171168
    %v2664 = vunpack.c.0.s8 %v2663
    %v2665 = vlaneseq
    %v2666 = vshrl.u32 %v2665, 7
    %v2667 = vsub.s32 %v2664, %v2666
    %v2668 = vrot.slane %v2640, %v2667
    %v2669 = vcombine.high %v2647, %v2647
    %v2670 = vcombine.high %v2654, %v2654
    %v2671 = vcombine.high %v2661, %v2661
    %v2672 = vcombine.high %v2668, %v2668
    %v2673 = vlaneseq
    %v2674 = vshrl.u32 %v2673, 7
    %v2675 = vsub.s32 0, %v2674
    %v2676 = vrot.slane %v2647, %v2675
    %v2677 = vlaneseq
    %v2678 = vshrl.u32 %v2677, 7
    %v2679 = vsub.s32 0, %v2678
    %v2680 = vrot.slane %v2661, %v2679
    %v2681 = vlaneseq
    %v2682 = vshrl.u32 %v2681, 7
    %v2683 = vsub.s32 0, %v2682
    %v2684 = vrot.slane %v2669, %v2683
    %v2685 = vlaneseq
    %v2686 = vshrl.u32 %v2685, 7
    %v2687 = vsub.s32 0, %v2686
    %v2688 = vrot.slane %v2671, %v2687
    %v2689 = vlaneseq
    %v2690 = vshrl.u32 %v2689, 7
    %v2691 = vsub.s32 0, %v2690
    %v2692 = vrot.slane %v2654, %v2691
    %v2693 = vlaneseq
    %v2694 = vshrl.u32 %v2693, 7
    %v2695 = vsub.s32 0, %v2694
    %v2696 = vrot.slane %v2668, %v2695
    %v2697 = vlaneseq
    %v2698 = vshrl.u32 %v2697, 7
    %v2699 = vsub.s32 0, %v2698
    %v2700 = vrot.slane %v2670, %v2699
    %v2701 = vlaneseq
    %v2702 = vshrl.u32 %v2701, 7
    %v2703 = vsub.s32 0, %v2702
    %v2704 = vrot.slane %v2672, %v2703
    %vm2713 = vcmp.ge.f32.partialorder %v2676, %v2573
    %vm2714 = vcmp.ge.f32.partialorder %v2680, %v2580
    %vm2715 = vcmp.ge.f32.partialorder %v2684, %v2587
    %vm2716 = vcmp.ge.f32.partialorder %v2688, %v2594
    %vm2717 = vcmp.ge.f32.partialorder %v2692, %v2601
    %vm2718 = vcmp.ge.f32.partialorder %v2696, %v2608
    %vm2719 = vcmp.ge.f32.partialorder %v2700, %v2615
    %vm2720 = vcmp.ge.f32.partialorder %v2704, %v2622
    %v2721 = vsel %vm2713, 1.0, 0.0
    %v2722 = vsel %vm2714, 1.0, 0.0
    %v2723 = vsel %vm2715, 1.0, 0.0
    %v2724 = vsel %vm2716, 1.0, 0.0
    %v2725 = vsel %vm2717, 1.0, 0.0
    %v2726 = vsel %vm2718, 1.0, 0.0
    %v2727 = vsel %vm2719, 1.0, 0.0
    %v2728 = vsel %vm2720, 1.0, 0.0
    %v2729 = vsel %vm92, %v2721, 0.0
    %2730 = vadd.xlane.f32.xlu0 %v2729
    %v2731 = vpop.xlane.xlu0 %2730
    %v2732 = vsel %vm92, %v2722, 0.0
    %2733 = vadd.xlane.f32.xlu0 %v2732
    %v2734 = vpop.xlane.xlu0 %2733
    %v2735 = vsel %vm92, %v2723, 0.0
    %2736 = vadd.xlane.f32.xlu0 %v2735
    %v2737 = vpop.xlane.xlu0 %2736
    %v2738 = vsel %vm92, %v2724, 0.0
    %2739 = vadd.xlane.f32.xlu0 %v2738
    %v2740 = vpop.xlane.xlu0 %2739
    %v2741 = vsel %vm92, %v2725, 0.0
    %2742 = vadd.xlane.f32.xlu0 %v2741
    %v2743 = vpop.xlane.xlu0 %2742
    %v2744 = vsel %vm92, %v2726, 0.0
    %2745 = vadd.xlane.f32.xlu0 %v2744
    %v2746 = vpop.xlane.xlu0 %2745
    %v2747 = vsel %vm92, %v2727, 0.0
    %2748 = vadd.xlane.f32.xlu0 %v2747
    %v2749 = vpop.xlane.xlu0 %2748
    %v2750 = vsel %vm92, %v2728, 0.0
    %2751 = vadd.xlane.f32.xlu0 %v2750
    %v2752 = vpop.xlane.xlu0 %2751
    %v2753 = vmul.f32 %v2721, %v2676
    %v2754 = vmul.f32 %v2722, %v2680
    %v2755 = vmul.f32 %v2723, %v2684
    %v2756 = vmul.f32 %v2724, %v2688
    %v2757 = vmul.f32 %v2725, %v2692
    %v2758 = vmul.f32 %v2726, %v2696
    %v2759 = vmul.f32 %v2727, %v2700
    %v2760 = vmul.f32 %v2728, %v2704
    %v2761 = vsel %vm92, %v2753, 0.0
    %2762 = vadd.xlane.f32.xlu0 %v2761
    %v2763 = vpop.xlane.xlu0 %2762
    %v2764 = vsel %vm92, %v2754, 0.0
    %2765 = vadd.xlane.f32.xlu0 %v2764
    %v2766 = vpop.xlane.xlu0 %2765
    %v2767 = vsel %vm92, %v2755, 0.0
    %2768 = vadd.xlane.f32.xlu0 %v2767
    %v2769 = vpop.xlane.xlu0 %2768
    %v2770 = vsel %vm92, %v2756, 0.0
    %2771 = vadd.xlane.f32.xlu0 %v2770
    %v2772 = vpop.xlane.xlu0 %2771
    %v2773 = vsel %vm92, %v2757, 0.0
    %2774 = vadd.xlane.f32.xlu0 %v2773
    %v2775 = vpop.xlane.xlu0 %2774
    %v2776 = vsel %vm92, %v2758, 0.0
    %2777 = vadd.xlane.f32.xlu0 %v2776
    %v2778 = vpop.xlane.xlu0 %2777
    %v2779 = vsel %vm92, %v2759, 0.0
    %2780 = vadd.xlane.f32.xlu0 %v2779
    %v2781 = vpop.xlane.xlu0 %2780
    %v2782 = vsel %vm92, %v2760, 0.0
    %2783 = vadd.xlane.f32.xlu0 %v2782
    %v2784 = vpop.xlane.xlu0 %2783
    %v2785 = vlaneseq
    %v2786 = vshrl.u32 %v2785, 7
    %v2787 = vsub.s32 0, %v2786
    %v2788 = vrot.slane %v2564, %v2787
    %2790 = vbcast.lane.b32.xlu0 %v2788, 256
    %v2791 = vpop.permute.xlu0 %2790
    %v2792 = vlaneseq
    %v2793 = vshrl.u32 %v2792, 7
    %v2794 = vsub.s32 1, %v2793
    %v2795 = vrot.slane %v2564, %v2794
    %2797 = vbcast.lane.b32.xlu0 %v2795, 256
    %v2798 = vpop.permute.xlu0 %2797
    %v2799 = vlaneseq
    %v2800 = vshrl.u32 %v2799, 7
    %v2801 = vsub.s32 2, %v2800
    %v2802 = vrot.slane %v2564, %v2801
    %2804 = vbcast.lane.b32.xlu0 %v2802, 256
    %v2805 = vpop.permute.xlu0 %2804
    %v2806 = vlaneseq
    %v2807 = vshrl.u32 %v2806, 7
    %v2808 = vsub.s32 3, %v2807
    %v2809 = vrot.slane %v2564, %v2808
    %2811 = vbcast.lane.b32.xlu0 %v2809, 256
    %v2812 = vpop.permute.xlu0 %2811
    %v2813 = vlaneseq
    %v2814 = vshrl.u32 %v2813, 7
    %v2815 = vsub.s32 4, %v2814
    %v2816 = vrot.slane %v2564, %v2815
    %2818 = vbcast.lane.b32.xlu0 %v2816, 256
    %v2819 = vpop.permute.xlu0 %2818
    %v2820 = vlaneseq
    %v2821 = vshrl.u32 %v2820, 7
    %v2822 = vsub.s32 5, %v2821
    %v2823 = vrot.slane %v2564, %v2822
    %2825 = vbcast.lane.b32.xlu0 %v2823, 256
    %v2826 = vpop.permute.xlu0 %2825
    %v2827 = vlaneseq
    %v2828 = vshrl.u32 %v2827, 7
    %v2829 = vsub.s32 6, %v2828
    %v2830 = vrot.slane %v2564, %v2829
    %2832 = vbcast.lane.b32.xlu0 %v2830, 256
    %v2833 = vpop.permute.xlu0 %2832
    %v2834 = vlaneseq
    %v2835 = vshrl.u32 %v2834, 7
    %v2836 = vsub.s32 7, %v2835
    %v2837 = vrot.slane %v2564, %v2836
    %2839 = vbcast.lane.b32.xlu0 %v2837, 256
    %v2840 = vpop.permute.xlu0 %2839
    %v2849 = vmul.f32 %v2731, %v2791
    %v2850 = vmul.f32 %v2734, %v2798
    %v2851 = vmul.f32 %v2737, %v2805
    %v2852 = vmul.f32 %v2740, %v2812
    %v2853 = vmul.f32 %v2743, %v2819
    %v2854 = vmul.f32 %v2746, %v2826
    %v2855 = vmul.f32 %v2749, %v2833
    %v2856 = vmul.f32 %v2752, %v2840
    %v2857 = vadd.f32 %v2849, 1.0
    %v2858 = vadd.f32 %v2850, 1.0
    %v2859 = vadd.f32 %v2851, 1.0
    %v2860 = vadd.f32 %v2852, 1.0
    %v2861 = vadd.f32 %v2853, 1.0
    %v2862 = vadd.f32 %v2854, 1.0
    %v2863 = vadd.f32 %v2855, 1.0
    %v2864 = vadd.f32 %v2856, 1.0
    %vm2865 = vcmp.gt.f32.partialorder %v2857, %v2763
    %vm2866 = vcmp.gt.f32.partialorder %v2858, %v2766
    %vm2867 = vcmp.gt.f32.partialorder %v2859, %v2769
    %vm2868 = vcmp.gt.f32.partialorder %v2860, %v2772
    %vm2869 = vcmp.gt.f32.partialorder %v2861, %v2775
    %vm2870 = vcmp.gt.f32.partialorder %v2862, %v2778
    %vm2871 = vcmp.gt.f32.partialorder %v2863, %v2781
    %vm2872 = vcmp.gt.f32.partialorder %v2864, %v2784
    %v2873 = vsel %vm2865, 1.0, 0.0
    %v2874 = vsel %vm2866, 1.0, 0.0
    %v2875 = vsel %vm2867, 1.0, 0.0
    %v2876 = vsel %vm2868, 1.0, 0.0
    %v2877 = vsel %vm2869, 1.0, 0.0
    %v2878 = vsel %vm2870, 1.0, 0.0
    %v2879 = vsel %vm2871, 1.0, 0.0
    %v2880 = vsel %vm2872, 1.0, 0.0
    %2889 = vset.pattern.permute.xlu0 0
    %2890 = vperm.xlu0 %2889, %v2873
    %v2891 = vpop.permute.xlu0 %2890
    %2892 = vset.pattern.permute.xlu0 0
    %2893 = vperm.xlu0 %2892, %v2874
    %v2894 = vpop.permute.xlu0 %2893
    %2895 = vset.pattern.permute.xlu0 0
    %2896 = vperm.xlu0 %2895, %v2875
    %v2897 = vpop.permute.xlu0 %2896
    %2898 = vset.pattern.permute.xlu0 0
    %2899 = vperm.xlu0 %2898, %v2876
    %v2900 = vpop.permute.xlu0 %2899
    %2901 = vset.pattern.permute.xlu0 0
    %2902 = vperm.xlu0 %2901, %v2877
    %v2903 = vpop.permute.xlu0 %2902
    %2904 = vset.pattern.permute.xlu0 0
    %2905 = vperm.xlu0 %2904, %v2878
    %v2906 = vpop.permute.xlu0 %2905
    %2907 = vset.pattern.permute.xlu0 0
    %2908 = vperm.xlu0 %2907, %v2879
    %v2909 = vpop.permute.xlu0 %2908
    %2910 = vset.pattern.permute.xlu0 0
    %2911 = vperm.xlu0 %2910, %v2880
    %v2912 = vpop.permute.xlu0 %2911
    %v2913 = vlaneseq
    %v2914 = vand.u32 %v2913, 127
    %v2915 = vlaneseq
    %v2916 = vshrl.u32 %v2915, 7
    %v2917 = vsub.s32 %v2914, %v2916
    %v2918 = vrot.slane %v2891, %v2917
    %v2919 = vlaneseq
    %v2920 = vshrl.u32 %v2919, 7
    %v2921 = vsub.s32 %v2914, %v2920
    %v2922 = vrot.slane %v2894, %v2921
    %v2923 = vlaneseq
    %v2924 = vshrl.u32 %v2923, 7
    %v2925 = vsub.s32 %v2914, %v2924
    %v2926 = vrot.slane %v2897, %v2925
    %v2927 = vlaneseq
    %v2928 = vshrl.u32 %v2927, 7
    %v2929 = vsub.s32 %v2914, %v2928
    %v2930 = vrot.slane %v2900, %v2929
    %v2931 = vlaneseq
    %v2932 = vshrl.u32 %v2931, 7
    %v2933 = vsub.s32 %v2914, %v2932
    %v2934 = vrot.slane %v2903, %v2933
    %v2935 = vlaneseq
    %v2936 = vshrl.u32 %v2935, 7
    %v2937 = vsub.s32 %v2914, %v2936
    %v2938 = vrot.slane %v2906, %v2937
    %v2939 = vlaneseq
    %v2940 = vshrl.u32 %v2939, 7
    %v2941 = vsub.s32 %v2914, %v2940
    %v2942 = vrot.slane %v2909, %v2941
    %v2943 = vlaneseq
    %v2944 = vshrl.u32 %v2943, 7
    %v2945 = vsub.s32 %v2914, %v2944
    %v2946 = vrot.slane %v2912, %v2945
    %vm2947 = vcmask 1041409
    %v2948 = vsel %vm2947, %v2922, %v2918
    %vm2949 = vcmask 1042434
    %v2950 = vsel %vm2949, %v2926, %v2948
    %vm2951 = vcmask 1043459
    %v2952 = vsel %vm2951, %v2930, %v2950
    %vm2953 = vcmask 1044484
    %v2954 = vsel %vm2953, %v2934, %v2952
    %vm2955 = vcmask 1045509
    %v2956 = vsel %vm2955, %v2938, %v2954
    %vm2957 = vcmask 1046534
    %v2958 = vsel %vm2957, %v2942, %v2956
    %vm2959 = vcmask 1047559
    %v2960 = vsel %vm2959, %v2946, %v2958
    %v2962 = vsel %vm92, %v2960, 0.0
    %2963 = vadd.xlane.f32.xlu0 %v2962
    %v2964 = vpop.xlane.xlu0 %2963
    %v2965 = vmul.f32 %v2564, %v2960
    %v2966 = vsel %vm92, %v2965, 0.0
    %2967 = vadd.xlane.f32.xlu0 %v2966
    %v2968 = vpop.xlane.xlu0 %2967
    %v2969 = vsub.f32 %v2968, 1.0
    %v2970 = vrcp.pop %v2964
    %v2971 = vmul.f32 %v2969, %v2970
    %vm2972 = vcmp.lt.s32.totalorder %v2914, 8
    %v2973 = vsub.f32 %v2564, %v2971
    %v2974 = vmax.f32 %v2973, 0.0
    %v2975 = vsel %vm2972, %v2974, 0.0
    %2976 = vst [vmem:[#allocation9] sm:$0xff] %v2975
    // Predicated region
    $region58: #{tpu_custom_call.1} parent=1 // pred_check
      _
    $region59: #{tpu_custom_call.1} parent=1 // pred_check_branch
      %2978 = sbr.rel (0) target = $region61
    $region60: #{tpu_custom_call.1} parent=1 // pred_region
      %s2980 = ssub.s32 128, 128
      %2981 = vsyncadd [#allocation5], %s2980
      %s2983 = sshll.u32 [#allocation9], 4
      %s2984 = int_to_ptr.vmem [resolvable:$true] %s2983
      %2986 = dma.vmem_to_hbm [thread:$0]  %s2984, 128, %s11, [#allocation5]
    $region61: #{tpu_custom_call.1} parent=1 // pred_fallthru
      _
    // Predicated region
    $region62: #{tpu_custom_call.1} parent=1 // pred_check
      _
    $region63: #{tpu_custom_call.1} parent=1 // pred_check_branch
      %2988 = sbr.rel (0) target = $region65
    $region64: #{tpu_custom_call.1} parent=1 // pred_region
      %2989 = dma.done [#allocation5], 128
    $region65: #{tpu_custom_call.1} parent=1 // pred_fallthru
      _
    %2990 = vsyncpa [#allocation4], 1
    %2991 = vsyncpa [#allocation7], 1
    %2992 = vsyncpa [#allocation5], 1

</llo_original>
